<compile_context>
chip_gen: v7x
topology: tpu7x:2x2x1
jax: 0.10.0
libtpu: 0.0.40
codegen_flags: <defaults>
</compile_context>

<pallas_src>
import functools
import math

import jax
import jax.numpy as jnp
from jax import lax
from jax.experimental import pallas as pl
from jax.experimental.pallas import tpu as pltpu


# ----------------------------- config ------------------------------------- #
OPT_PARAMS = dict(
    num_k=1,            # K
    num_k_select=1,     # KS
    num_timestep=3,     # T
    num_joints=21,      # J
    focal=(1000.0, 1000.0),
    princpt=(8.0, 8.0),
    input_img_shape=(16, 16),
    output_hm_shape=(8, 16, 16),
    camera_3d_size=0.3,
)
VERTEX_NUM = 64        # synthetic MANO vertex count (real MANO has 778)
ROOT_JOINT_IDX = 0
FEAT_DIM = 32          # logical backbone / transformer feature dim
D_PAD = 128            # lane-padded feature dim (zero pad, numerically inert)
V_PAD = 128            # lane-padded vertex plane width
J_PAD = 128            # lane-padded joint plane width
IMG_H = IMG_W = 16
IMG_C = 3
HEAD_WIDTH = 64        # fused regressor head: 10 shape + 48 pose + 3 cam + 3 pad
NUM_PLANES = 8         # mesh x/y/z, joint_cam x/y/z, joint_proj x/y


def _num_grid_blocks(batch):
    """2 parallel grid steps on v7x (2 TensorCores), otherwise a single step."""
    try:
        kind = jax.devices()[0].device_kind.lower()
    except Exception:
        kind = ""
    if batch >= 2 and batch % 2 == 0 and ("v7" in kind or "tpu7" in kind):
        return 2
    return 1


# --------------------------- fused forward kernel --------------------------- #
def _fused_kernel(img_ref, cw_ref, cb_ref, qt_ref, qk_ref,
                  ptw_ref, ptb_ref, pkw_ref, pkb_ref,
                  hw_ref, hb_ref, vt_ref, bd_ref, jr_ref,
                  out_ref,
                  *, bb, kt, seq, k_value, fxs, fys, cxs, cys, root_idx):
    cw = cw_ref[...]                       # (3, DP)
    cb = cb_ref[...]                       # (1, DP)
    q_t = qt_ref[...]                      # (T, DP)   softmax scale pre-folded
    q_k = qk_ref[...]                      # (KT, DP)  softmax scale pre-folded
    ptw = ptw_ref[...]; ptb = ptb_ref[...]
    pkw = pkw_ref[...]; pkb = pkb_ref[...]
    pool_row = jnp.full((1, seq), 1.0 / seq, dtype=jnp.float32)

    h_rows = []
    for bi in range(bb):
        x = img_ref[bi]                                             # (S, 3)
        # backbone 1x1 conv + ReLU as 3 VPU broadcast-FMAs (no MXU for K=3)
        t = (x[:, 0:1] * cw[0:1, :] + x[:, 1:2] * cw[1:2, :]
             + x[:, 2:3] * cw[2:3, :] + cb)
        tokens = jnp.maximum(t, 0.0)                                # (S, DP)

        # mean-pool on the MXU instead of a 256-row sublane reduction
        feat_pooled = jnp.dot(pool_row, tokens,
                              preferred_element_type=jnp.float32)   # (1, DP)

        # transformer_t: temporal cross-attention + output projection
        s_t = lax.dot_general(q_t, tokens, (((1,), (1,)), ((), ())),
                              preferred_element_type=jnp.float32)    # (T, S)
        s_t = s_t - jnp.max(s_t, axis=-1, keepdims=True)
        p_t = jnp.exp(s_t)
        p_t = p_t * pl.reciprocal(jnp.sum(p_t, axis=-1, keepdims=True),
                                  approx=True)
        attn_t = jnp.dot(p_t, tokens, preferred_element_type=jnp.float32)
        feat_temp = jnp.dot(attn_t, ptw,
                            preferred_element_type=jnp.float32) + ptb  # (T, DP)

        # transformer_k: candidate cross-attention + output projection
        s_k = lax.dot_general(q_k, feat_temp, (((1,), (1,)), ((), ())),
                              preferred_element_type=jnp.float32)    # (KT, T)
        s_k = s_k - jnp.max(s_k, axis=-1, keepdims=True)
        p_k = jnp.exp(s_k)
        p_k = p_k * pl.reciprocal(jnp.sum(p_k, axis=-1, keepdims=True),
                                  approx=True)
        attn_k = jnp.dot(p_k, feat_temp, preferred_element_type=jnp.float32)
        feat_joint = jnp.dot(attn_k, pkw,
                             preferred_element_type=jnp.float32) + pkb  # (KT, DP)

        h_rows.append(feat_joint + feat_pooled)

    # fold B*KT into the M dim of the remaining matmuls
    h = h_rows[0] if bb == 1 else jnp.concatenate(h_rows, axis=0)  # (M, DP)

    # fused regressor heads: [shape(10)|pose(48)|camx|camy|camz_raw|pad(3)]
    raw = jnp.dot(h, hw_ref[...],
                  preferred_element_type=jnp.float32) + hb_ref[...]   # (M, 64)
    camx = raw[:, 58:59]
    camy = raw[:, 59:60]
    camz = k_value / (1.0 + jnp.exp(-raw[:, 60:61]))     # get_camera_trans

    # synthetic MANO blend + joint regression, per coordinate plane (lane-dense);
    # bd rows 58..63 are zero so the cam lanes of `raw` do not pollute the blend.
    jr = jr_ref[...]                                      # (V_PAD, J_PAD)
    mesh, joints = [], []
    for c in range(3):
        m_c = vt_ref[c:c + 1, :] + jnp.dot(raw, bd_ref[c],
                                           preferred_element_type=jnp.float32)
        mesh.append(m_c)                                  # (M, V_PAD)
        joints.append(jnp.dot(m_c, jr,
                              preferred_element_type=jnp.float32))  # (M, J_PAD)
    jx, jy, jz = joints

    # perspective projection — exact divide (focal amplifies reciprocal error)
    inv = 1.0 / (jz + camz + 1e-4)
    jpx = (jx + camx) * inv * fxs + cxs
    jpy = (jy + camy) * inv * fys + cys

    # root-relative joints, mesh in camera space (per-plane scalar adds)
    jcx = jx - jx[:, root_idx:root_idx + 1]
    jcy = jy - jy[:, root_idx:root_idx + 1]
    jcz = jz - jz[:, root_idx:root_idx + 1]
    mesh_cx = mesh[0] + camx
    mesh_cy = mesh[1] + camy
    mesh_cz = mesh[2] + camz

    planes = (mesh_cx, mesh_cy, mesh_cz, jcx, jcy, jcz, jpx, jpy)
    for bi in range(bb):
        r0 = bi * kt
        # (8*KT, 128) = (24, 128): sublane- and lane-dense store per batch
        big = jnp.concatenate([p[r0:r0 + kt, :] for p in planes], axis=0)
        out_ref[bi] = big


def fused_forward(img_nsc, params, opt):
    """img_nsc:(B, H*W, 3) -> plane slab (B, 8*KT, 128)."""
    B, S, C = img_nsc.shape
    T, K = opt["num_timestep"], opt["num_k"]
    KT = K * T
    G = _num_grid_blocks(B)
    BB = B // G

    fx, fy = opt["focal"]
    cx, cy = opt["princpt"]
    sx = opt["output_hm_shape"][2] / opt["input_img_shape"][1]
    sy = opt["output_hm_shape"][1] / opt["input_img_shape"][0]
    k_value = math.sqrt(fx * fy * opt["camera_3d_size"] ** 2
                        / (opt["input_img_shape"][0] * opt["input_img_shape"][1]))

    kern = functools.partial(
        _fused_kernel, bb=BB, kt=KT, seq=S, k_value=k_value,
        fxs=fx * sx, fys=fy * sy, cxs=cx * sx, cys=cy * sy,
        root_idx=ROOT_JOINT_IDX)

    def rep(shp):
        return pl.BlockSpec(shp, lambda g: (0,) * len(shp))

    return pl.pallas_call(
        kern,
        out_shape=jax.ShapeDtypeStruct((B, NUM_PLANES * KT, 128), jnp.float32),
        grid=(G,),
        in_specs=[
            pl.BlockSpec((BB, S, C), lambda g: (g, 0, 0)),        # image tokens
            rep((IMG_C, D_PAD)), rep((1, D_PAD)),                 # 1x1 conv
            rep((T, D_PAD)), rep((KT, D_PAD)),                    # learned queries
            rep((D_PAD, D_PAD)), rep((1, D_PAD)),                 # proj_t
            rep((D_PAD, D_PAD)), rep((1, D_PAD)),                 # proj_k
            rep((D_PAD, HEAD_WIDTH)), rep((1, HEAD_WIDTH)),       # fused heads
            rep((3, V_PAD)), rep((3, HEAD_WIDTH, V_PAD)),         # MANO blend
            rep((V_PAD, J_PAD)),                                  # joint regressor
        ],
        out_specs=pl.BlockSpec((BB, NUM_PLANES * KT, 128), lambda g: (g, 0, 0)),
        compiler_params=pltpu.CompilerParams(dimension_semantics=("parallel",)),
    )(img_nsc,
      params["conv_w"], params["conv_b"],
      params["q_t"], params["q_k"],
      params["proj_t_w"], params["proj_t_b"],
      params["proj_k_w"], params["proj_k_b"],
      params["heads_w"], params["heads_b"],
      params["v_template"], params["blend_dirs"], params["jreg"])


# --------------------------- parameter setup -------------------------------- #
def init_params(key):
    D, DP = FEAT_DIM, D_PAD
    V, J = VERTEX_NUM, OPT_PARAMS["num_joints"]
    T, K = OPT_PARAMS["num_timestep"], OPT_PARAMS["num_k"]
    KT = K * T
    ks = jax.random.split(key, 16)
    n = lambda k, s, sc=0.02: (sc * jax.random.normal(k, s)).astype(jnp.float32)

    def pad(x, shape):
        return jnp.pad(x, [(0, t - s) for s, t in zip(x.shape, shape)])

    scale = 1.0 / math.sqrt(D)     # softmax scale folded into the queries

    # fused regressor heads: [shape(10)|pose(48)|cam(3)|pad(3)]
    heads_w = jnp.concatenate(
        [n(ks[5], (D, 10)), n(ks[6], (D, 48)), n(ks[7], (D, 3)),
         jnp.zeros((D, 3), jnp.float32)], axis=1)                   # (D, 64)
    heads_b = jnp.zeros((1, HEAD_WIDTH), jnp.float32)

    # synthetic linear MANO layer (stand-in for the real MANO layer)
    v_template = n(ks[8], (3, V), 0.1)
    shapedirs = n(ks[9], (3, 10, V), 0.01)
    posedirs = n(ks[10], (3, 48, V), 0.01)
    blend = jnp.concatenate([shapedirs, posedirs], axis=1)          # (3, 58, V)
    jreg = jnp.abs(jax.random.normal(ks[11], (V, J))).astype(jnp.float32)
    jreg = jreg / jnp.sum(jreg, axis=0, keepdims=True)

    return dict(
        # backbone (1x1 conv) -- synthetic stand-in for ResNetBackbone
        conv_w=pad(n(ks[0], (IMG_C, D), 0.1), (IMG_C, DP)),
        conv_b=jnp.zeros((1, DP), jnp.float32),
        # Transformer_temporal / Transformer_candidate
        q_t=pad(n(ks[1], (T, D), 0.1) * scale, (T, DP)),
        proj_t_w=pad(n(ks[2], (D, D)), (DP, DP)),
        proj_t_b=jnp.zeros((1, DP), jnp.float32),
        q_k=pad(n(ks[3], (KT, D), 0.1) * scale, (KT, DP)),
        proj_k_w=pad(n(ks[4], (D, D)), (DP, DP)),
        proj_k_b=jnp.zeros((1, DP), jnp.float32),
        heads_w=pad(heads_w, (DP, HEAD_WIDTH)),
        heads_b=heads_b,
        # MANO params, per coordinate plane, lane-padded to 128
        v_template=pad(v_template, (3, V_PAD)),
        blend_dirs=pad(blend, (3, HEAD_WIDTH, V_PAD)),   # rows 58..63 zero
        jreg=pad(jreg, (V_PAD, J_PAD)),
    )


# ------------------------------- forward ------------------------------------ #
def blurhandnet_forward(params, inputs, meta_info, mode="test"):
    img = inputs["img"]                      # (B, 3, H, W), NCHW like PyTorch
    B = img.shape[0]
    K = OPT_PARAMS["num_k"]
    T = OPT_PARAMS["num_timestep"]
    J = OPT_PARAMS["num_joints"]
    V = VERTEX_NUM
    KT = K * T

    # NCHW -> (B, H*W, 3) tokens-major layout (tiny, wrapper-side plumbing)
    img_nsc = jnp.transpose(img, (0, 2, 3, 1)).reshape(B, IMG_H * IMG_W, IMG_C)

    # ONE fused Pallas kernel: backbone conv -> attentions -> regressor ->
    # MANO blend -> joint regression -> projection, all intermediates in VMEM.
    slab = fused_forward(img_nsc, params, OPT_PARAMS)     # (B, 8*KT, 128)
    slab = slab.reshape(B, NUM_PLANES, KT, 128)

    mesh_cam = jnp.stack([slab[:, 0, :, :V], slab[:, 1, :, :V],
                          slab[:, 2, :, :V]], axis=-1)    # (B, KT, V, 3)
    joint_cam = jnp.stack([slab[:, 3, :, :J], slab[:, 4, :, :J],
                           slab[:, 5, :, :J]], axis=-1)   # (B, KT, J, 3)
    joint_proj = jnp.stack([slab[:, 6, :, :J],
                            slab[:, 7, :, :J]], axis=-1)  # (B, KT, J, 2)

    mesh_cam_flatten = mesh_cam.reshape(B, K, T, V * 3)
    joint_cam_flatten = joint_cam.reshape(B, K, T, J * 3)
    joint_proj_flatten = joint_proj.reshape(B, K, T, J * 2)

    if mode == "train":
        # TODO(synk): train-mode loss branch needs external CoordLoss /
        # ParamLoss / DiversityPromotingLoss modules and GT targets; not
        # implemented in this synthetic kernel.
        raise NotImplementedError

    out = {}
    out["img"] = img
    mesh_cam_all = jnp.transpose(
        mesh_cam_flatten.reshape(B, K, T, V, 3), (2, 1, 0, 3, 4))   # (T, K, B, V, 3)
    assert K == 1
    out["mano_mesh_cam"] = mesh_cam_all[1, 0]
    out["mano_mesh_cam_past"] = mesh_cam_all[0, 0]
    out["mano_mesh_cam_future"] = mesh_cam_all[2, 0]
    # TODO(synk): mesh_coord_cam_gt requires the real MANO layer plus
    # data-dependent boolean indexing on hand_type; skipped.
    if "bb2img_trans" in meta_info:
        out["bb2img_trans"] = meta_info["bb2img_trans"]
    # extras for inspection
    out["joint_proj"] = joint_proj_flatten
    out["joint_cam"] = joint_cam_flatten
    return out


# --------------------------------- main ------------------------------------- #
if __name__ == "__main__":
    key = jax.random.PRNGKey(0)
    k_img, k_prm, k_bb = jax.random.split(key, 3)

    B = 2
    img = jax.random.normal(k_img, (B, IMG_C, IMG_H, IMG_W), dtype=jnp.float32)
    inputs = {"img": img}
    meta_info = {"bb2img_trans": jax.random.normal(k_bb, (B, 2, 3), dtype=jnp.float32)}

    params = init_params(k_prm)

    out = blurhandnet_forward(params, inputs, meta_info, mode="test")
    jax.block_until_ready(out)

    # sanity on shapes
    assert out["mano_mesh_cam"].shape == (B, VERTEX_NUM, 3)
    assert out["mano_mesh_cam_past"].shape == (B, VERTEX_NUM, 3)
    assert out["mano_mesh_cam_future"].shape == (B, VERTEX_NUM, 3)
    assert out["joint_proj"].shape == (B, 1, 3, OPT_PARAMS["num_joints"] * 2)
    assert out["joint_cam"].shape == (B, 1, 3, OPT_PARAMS["num_joints"] * 3)
    assert bool(jnp.all(jnp.isfinite(out["mano_mesh_cam"])))
    print("KERNEL_OK")
</pallas_src>

<mosaic_0001>
module attributes {stable_mosaic.version = 11 : i64} {
  func.func @_fused_kernel(%arg0: i32, %arg1: memref<2x256x3xf32, #tpu.memory_space<vmem>>, %arg2: memref<3x128xf32, #tpu.memory_space<vmem>>, %arg3: memref<1x128xf32, #tpu.memory_space<vmem>>, %arg4: memref<3x128xf32, #tpu.memory_space<vmem>>, %arg5: memref<3x128xf32, #tpu.memory_space<vmem>>, %arg6: memref<128x128xf32, #tpu.memory_space<vmem>>, %arg7: memref<1x128xf32, #tpu.memory_space<vmem>>, %arg8: memref<128x128xf32, #tpu.memory_space<vmem>>, %arg9: memref<1x128xf32, #tpu.memory_space<vmem>>, %arg10: memref<128x64xf32, #tpu.memory_space<vmem>>, %arg11: memref<1x64xf32, #tpu.memory_space<vmem>>, %arg12: memref<3x128xf32, #tpu.memory_space<vmem>>, %arg13: memref<3x64x128xf32, #tpu.memory_space<vmem>>, %arg14: memref<128x128xf32, #tpu.memory_space<vmem>>, %arg15: memref<2x24x128xf32, #tpu.memory_space<vmem>>) attributes {dimension_semantics = [#tpu.dimension_semantics<parallel>], iteration_bounds = array<i64: 1>, scalar_prefetch = 0 : i64, scratch_operands = 0 : i64, tpu.core_type = #tpu.core_type<tc>, window_params = [{transform_indices = @transform_0, window_bounds = array<i64: 2, 256, 3>}, {pipeline_mode = #tpu.pipeline_mode<synchronous>, transform_indices = @transform_1, window_bounds = array<i64: 3, 128>}, {pipeline_mode = #tpu.pipeline_mode<synchronous>, transform_indices = @transform_2, window_bounds = array<i64: 1, 128>}, {pipeline_mode = #tpu.pipeline_mode<synchronous>, transform_indices = @transform_3, window_bounds = array<i64: 3, 128>}, {pipeline_mode = #tpu.pipeline_mode<synchronous>, transform_indices = @transform_4, window_bounds = array<i64: 3, 128>}, {pipeline_mode = #tpu.pipeline_mode<synchronous>, transform_indices = @transform_5, window_bounds = array<i64: 128, 128>}, {pipeline_mode = #tpu.pipeline_mode<synchronous>, transform_indices = @transform_6, window_bounds = array<i64: 1, 128>}, {pipeline_mode = #tpu.pipeline_mode<synchronous>, transform_indices = @transform_7, window_bounds = array<i64: 128, 128>}, {pipeline_mode = #tpu.pipeline_mode<synchronous>, transform_indices = @transform_8, window_bounds = array<i64: 1, 128>}, {pipeline_mode = #tpu.pipeline_mode<synchronous>, transform_indices = @transform_9, window_bounds = array<i64: 128, 64>}, {pipeline_mode = #tpu.pipeline_mode<synchronous>, transform_indices = @transform_10, window_bounds = array<i64: 1, 64>}, {pipeline_mode = #tpu.pipeline_mode<synchronous>, transform_indices = @transform_11, window_bounds = array<i64: 3, 128>}, {pipeline_mode = #tpu.pipeline_mode<synchronous>, transform_indices = @transform_12, window_bounds = array<i64: 3, 64, 128>}, {pipeline_mode = #tpu.pipeline_mode<synchronous>, transform_indices = @transform_13, window_bounds = array<i64: 128, 128>}, {transform_indices = @transform_14, window_bounds = array<i64: 2, 24, 128>}]} {
    %c0 = arith.constant 0 : index
    %c0_0 = arith.constant 0 : index
    %0 = vector.load %arg2[%c0, %c0_0] : memref<3x128xf32, #tpu.memory_space<vmem>>, vector<3x128xf32>
    %c0_1 = arith.constant 0 : index
    %c0_2 = arith.constant 0 : index
    %1 = vector.load %arg3[%c0_1, %c0_2] : memref<1x128xf32, #tpu.memory_space<vmem>>, vector<1x128xf32>
    %c0_3 = arith.constant 0 : index
    %c0_4 = arith.constant 0 : index
    %2 = vector.load %arg4[%c0_3, %c0_4] : memref<3x128xf32, #tpu.memory_space<vmem>>, vector<3x128xf32>
    %c0_5 = arith.constant 0 : index
    %c0_6 = arith.constant 0 : index
    %3 = vector.load %arg5[%c0_5, %c0_6] : memref<3x128xf32, #tpu.memory_space<vmem>>, vector<3x128xf32>
    %c0_7 = arith.constant 0 : index
    %c0_8 = arith.constant 0 : index
    %4 = vector.load %arg6[%c0_7, %c0_8] : memref<128x128xf32, #tpu.memory_space<vmem>>, vector<128x128xf32>
    %c0_9 = arith.constant 0 : index
    %c0_10 = arith.constant 0 : index
    %5 = vector.load %arg7[%c0_9, %c0_10] : memref<1x128xf32, #tpu.memory_space<vmem>>, vector<1x128xf32>
    %c0_11 = arith.constant 0 : index
    %c0_12 = arith.constant 0 : index
    %6 = vector.load %arg8[%c0_11, %c0_12] : memref<128x128xf32, #tpu.memory_space<vmem>>, vector<128x128xf32>
    %c0_13 = arith.constant 0 : index
    %c0_14 = arith.constant 0 : index
    %7 = vector.load %arg9[%c0_13, %c0_14] : memref<1x128xf32, #tpu.memory_space<vmem>>, vector<1x128xf32>
    %cst = arith.constant 3.906250e-03 : f32
    %8 = vector.broadcast %cst : f32 to vector<1x256xf32>
    %c0_15 = arith.constant 0 : index
    %c0_16 = arith.constant 0 : index
    %c0_17 = arith.constant 0 : index
    %9 = vector.load %arg1[%c0_15, %c0_16, %c0_17] : memref<2x256x3xf32, #tpu.memory_space<vmem>>, vector<1x256x3xf32>
    %10 = vector.shape_cast %9 : vector<1x256x3xf32> to vector<256x3xf32>
    %11 = vector.extract_strided_slice %10 {offsets = [0, 0], sizes = [256, 1], strides = [1, 1]} : vector<256x3xf32> to vector<256x1xf32>
    %12 = vector.extract_strided_slice %0 {offsets = [0, 0], sizes = [1, 128], strides = [1, 1]} : vector<3x128xf32> to vector<1x128xf32>
    %13 = vector.broadcast %11 : vector<256x1xf32> to vector<256x128xf32>
    %14 = vector.broadcast %12 : vector<1x128xf32> to vector<256x128xf32>
    %15 = arith.mulf %13, %14 : vector<256x128xf32>
    %16 = vector.extract_strided_slice %10 {offsets = [0, 1], sizes = [256, 1], strides = [1, 1]} : vector<256x3xf32> to vector<256x1xf32>
    %17 = vector.extract_strided_slice %0 {offsets = [1, 0], sizes = [1, 128], strides = [1, 1]} : vector<3x128xf32> to vector<1x128xf32>
    %18 = vector.broadcast %16 : vector<256x1xf32> to vector<256x128xf32>
    %19 = vector.broadcast %17 : vector<1x128xf32> to vector<256x128xf32>
    %20 = arith.mulf %18, %19 : vector<256x128xf32>
    %21 = arith.addf %15, %20 : vector<256x128xf32>
    %22 = vector.extract_strided_slice %10 {offsets = [0, 2], sizes = [256, 1], strides = [1, 1]} : vector<256x3xf32> to vector<256x1xf32>
    %23 = vector.extract_strided_slice %0 {offsets = [2, 0], sizes = [1, 128], strides = [1, 1]} : vector<3x128xf32> to vector<1x128xf32>
    %24 = vector.broadcast %22 : vector<256x1xf32> to vector<256x128xf32>
    %25 = vector.broadcast %23 : vector<1x128xf32> to vector<256x128xf32>
    %26 = arith.mulf %24, %25 : vector<256x128xf32>
    %27 = arith.addf %21, %26 : vector<256x128xf32>
    %28 = vector.broadcast %1 : vector<1x128xf32> to vector<256x128xf32>
    %29 = arith.addf %27, %28 : vector<256x128xf32>
    %cst_18 = arith.constant 0.000000e+00 : f32
    %30 = vector.broadcast %cst_18 : f32 to vector<256x128xf32>
    %31 = arith.maximumf %29, %30 : vector<256x128xf32>
    %cst_19 = arith.constant dense<0.000000e+00> : vector<1x128xf32>
    %32 = tpu.matmul %8, %31, %cst_19 {dimension_numbers = #tpu.dot_dimension_numbers<[1], [0], [0], [1], [0, 0, 1, 1], [], []>} : vector<1x256xf32>, vector<256x128xf32>, vector<1x128xf32> -> vector<1x128xf32>
    %cst_20 = arith.constant dense<0.000000e+00> : vector<3x256xf32>
    %33 = tpu.matmul %2, %31, %cst_20 {dimension_numbers = #tpu.dot_dimension_numbers<[1], [1], [0], [0], [0, 0, 1, 0], [], []>} : vector<3x128xf32>, vector<256x128xf32>, vector<3x256xf32> -> vector<3x256xf32>
    %cst_21 = arith.constant dense<0xFF800000> : vector<3xf32>
    %34 = vector.multi_reduction <maximumf>, %33, %cst_21 [1] : vector<3x256xf32> to vector<3xf32>
    %35 = vector.shape_cast %34 : vector<3xf32> to vector<3x1xf32>
    %36 = vector.broadcast %35 : vector<3x1xf32> to vector<3x256xf32>
    %37 = arith.subf %33, %36 : vector<3x256xf32>
    %38 = math.exp %37 : vector<3x256xf32>
    %cst_22 = arith.constant dense<0.000000e+00> : vector<3xf32>
    %39 = vector.multi_reduction <add>, %38, %cst_22 [1] : vector<3x256xf32> to vector<3xf32>
    %40 = vector.shape_cast %39 : vector<3xf32> to vector<3x1xf32>
    %41 = tpu.reciprocal %40 {approx = true} : vector<3x1xf32> -> vector<3x1xf32>
    %42 = vector.broadcast %41 : vector<3x1xf32> to vector<3x256xf32>
    %43 = arith.mulf %38, %42 : vector<3x256xf32>
    %cst_23 = arith.constant dense<0.000000e+00> : vector<3x128xf32>
    %44 = tpu.matmul %43, %31, %cst_23 {dimension_numbers = #tpu.dot_dimension_numbers<[1], [0], [0], [1], [0, 0, 1, 1], [], []>} : vector<3x256xf32>, vector<256x128xf32>, vector<3x128xf32> -> vector<3x128xf32>
    %cst_24 = arith.constant dense<0.000000e+00> : vector<3x128xf32>
    %45 = tpu.matmul %44, %4, %cst_24 {dimension_numbers = #tpu.dot_dimension_numbers<[1], [0], [0], [1], [0, 0, 1, 1], [], []>} : vector<3x128xf32>, vector<128x128xf32>, vector<3x128xf32> -> vector<3x128xf32>
    %46 = vector.broadcast %5 : vector<1x128xf32> to vector<3x128xf32>
    %47 = arith.addf %45, %46 : vector<3x128xf32>
    %cst_25 = arith.constant dense<0.000000e+00> : vector<3x3xf32>
    %48 = tpu.matmul %3, %47, %cst_25 {dimension_numbers = #tpu.dot_dimension_numbers<[1], [1], [0], [0], [0, 0, 1, 0], [], []>} : vector<3x128xf32>, vector<3x128xf32>, vector<3x3xf32> -> vector<3x3xf32>
    %cst_26 = arith.constant dense<0xFF800000> : vector<3xf32>
    %49 = vector.multi_reduction <maximumf>, %48, %cst_26 [1] : vector<3x3xf32> to vector<3xf32>
    %50 = vector.shape_cast %49 : vector<3xf32> to vector<3x1xf32>
    %51 = vector.broadcast %50 : vector<3x1xf32> to vector<3x3xf32>
    %52 = arith.subf %48, %51 : vector<3x3xf32>
    %53 = math.exp %52 : vector<3x3xf32>
    %cst_27 = arith.constant dense<0.000000e+00> : vector<3xf32>
    %54 = vector.multi_reduction <add>, %53, %cst_27 [1] : vector<3x3xf32> to vector<3xf32>
    %55 = vector.shape_cast %54 : vector<3xf32> to vector<3x1xf32>
    %56 = tpu.reciprocal %55 {approx = true} : vector<3x1xf32> -> vector<3x1xf32>
    %57 = vector.broadcast %56 : vector<3x1xf32> to vector<3x3xf32>
    %58 = arith.mulf %53, %57 : vector<3x3xf32>
    %cst_28 = arith.constant dense<0.000000e+00> : vector<3x128xf32>
    %59 = tpu.matmul %58, %47, %cst_28 {dimension_numbers = #tpu.dot_dimension_numbers<[1], [0], [0], [1], [0, 0, 1, 1], [], []>} : vector<3x3xf32>, vector<3x128xf32>, vector<3x128xf32> -> vector<3x128xf32>
    %cst_29 = arith.constant dense<0.000000e+00> : vector<3x128xf32>
    %60 = tpu.matmul %59, %6, %cst_29 {dimension_numbers = #tpu.dot_dimension_numbers<[1], [0], [0], [1], [0, 0, 1, 1], [], []>} : vector<3x128xf32>, vector<128x128xf32>, vector<3x128xf32> -> vector<3x128xf32>
    %61 = vector.broadcast %7 : vector<1x128xf32> to vector<3x128xf32>
    %62 = arith.addf %60, %61 : vector<3x128xf32>
    %63 = vector.broadcast %32 : vector<1x128xf32> to vector<3x128xf32>
    %64 = arith.addf %62, %63 : vector<3x128xf32>
    %c1 = arith.constant 1 : index
    %c0_30 = arith.constant 0 : index
    %c0_31 = arith.constant 0 : index
    %65 = vector.load %arg1[%c1, %c0_30, %c0_31] : memref<2x256x3xf32, #tpu.memory_space<vmem>>, vector<1x256x3xf32>
    %66 = vector.shape_cast %65 : vector<1x256x3xf32> to vector<256x3xf32>
    %67 = vector.extract_strided_slice %66 {offsets = [0, 0], sizes = [256, 1], strides = [1, 1]} : vector<256x3xf32> to vector<256x1xf32>
    %68 = vector.extract_strided_slice %0 {offsets = [0, 0], sizes = [1, 128], strides = [1, 1]} : vector<3x128xf32> to vector<1x128xf32>
    %69 = vector.broadcast %67 : vector<256x1xf32> to vector<256x128xf32>
    %70 = vector.broadcast %68 : vector<1x128xf32> to vector<256x128xf32>
    %71 = arith.mulf %69, %70 : vector<256x128xf32>
    %72 = vector.extract_strided_slice %66 {offsets = [0, 1], sizes = [256, 1], strides = [1, 1]} : vector<256x3xf32> to vector<256x1xf32>
    %73 = vector.extract_strided_slice %0 {offsets = [1, 0], sizes = [1, 128], strides = [1, 1]} : vector<3x128xf32> to vector<1x128xf32>
    %74 = vector.broadcast %72 : vector<256x1xf32> to vector<256x128xf32>
    %75 = vector.broadcast %73 : vector<1x128xf32> to vector<256x128xf32>
    %76 = arith.mulf %74, %75 : vector<256x128xf32>
    %77 = arith.addf %71, %76 : vector<256x128xf32>
    %78 = vector.extract_strided_slice %66 {offsets = [0, 2], sizes = [256, 1], strides = [1, 1]} : vector<256x3xf32> to vector<256x1xf32>
    %79 = vector.extract_strided_slice %0 {offsets = [2, 0], sizes = [1, 128], strides = [1, 1]} : vector<3x128xf32> to vector<1x128xf32>
    %80 = vector.broadcast %78 : vector<256x1xf32> to vector<256x128xf32>
    %81 = vector.broadcast %79 : vector<1x128xf32> to vector<256x128xf32>
    %82 = arith.mulf %80, %81 : vector<256x128xf32>
    %83 = arith.addf %77, %82 : vector<256x128xf32>
    %84 = vector.broadcast %1 : vector<1x128xf32> to vector<256x128xf32>
    %85 = arith.addf %83, %84 : vector<256x128xf32>
    %cst_32 = arith.constant 0.000000e+00 : f32
    %86 = vector.broadcast %cst_32 : f32 to vector<256x128xf32>
    %87 = arith.maximumf %85, %86 : vector<256x128xf32>
    %cst_33 = arith.constant dense<0.000000e+00> : vector<1x128xf32>
    %88 = tpu.matmul %8, %87, %cst_33 {dimension_numbers = #tpu.dot_dimension_numbers<[1], [0], [0], [1], [0, 0, 1, 1], [], []>} : vector<1x256xf32>, vector<256x128xf32>, vector<1x128xf32> -> vector<1x128xf32>
    %cst_34 = arith.constant dense<0.000000e+00> : vector<3x256xf32>
    %89 = tpu.matmul %2, %87, %cst_34 {dimension_numbers = #tpu.dot_dimension_numbers<[1], [1], [0], [0], [0, 0, 1, 0], [], []>} : vector<3x128xf32>, vector<256x128xf32>, vector<3x256xf32> -> vector<3x256xf32>
    %cst_35 = arith.constant dense<0xFF800000> : vector<3xf32>
    %90 = vector.multi_reduction <maximumf>, %89, %cst_35 [1] : vector<3x256xf32> to vector<3xf32>
    %91 = vector.shape_cast %90 : vector<3xf32> to vector<3x1xf32>
    %92 = vector.broadcast %91 : vector<3x1xf32> to vector<3x256xf32>
    %93 = arith.subf %89, %92 : vector<3x256xf32>
    %94 = math.exp %93 : vector<3x256xf32>
    %cst_36 = arith.constant dense<0.000000e+00> : vector<3xf32>
    %95 = vector.multi_reduction <add>, %94, %cst_36 [1] : vector<3x256xf32> to vector<3xf32>
    %96 = vector.shape_cast %95 : vector<3xf32> to vector<3x1xf32>
    %97 = tpu.reciprocal %96 {approx = true} : vector<3x1xf32> -> vector<3x1xf32>
    %98 = vector.broadcast %97 : vector<3x1xf32> to vector<3x256xf32>
    %99 = arith.mulf %94, %98 : vector<3x256xf32>
    %cst_37 = arith.constant dense<0.000000e+00> : vector<3x128xf32>
    %100 = tpu.matmul %99, %87, %cst_37 {dimension_numbers = #tpu.dot_dimension_numbers<[1], [0], [0], [1], [0, 0, 1, 1], [], []>} : vector<3x256xf32>, vector<256x128xf32>, vector<3x128xf32> -> vector<3x128xf32>
    %cst_38 = arith.constant dense<0.000000e+00> : vector<3x128xf32>
    %101 = tpu.matmul %100, %4, %cst_38 {dimension_numbers = #tpu.dot_dimension_numbers<[1], [0], [0], [1], [0, 0, 1, 1], [], []>} : vector<3x128xf32>, vector<128x128xf32>, vector<3x128xf32> -> vector<3x128xf32>
    %102 = vector.broadcast %5 : vector<1x128xf32> to vector<3x128xf32>
    %103 = arith.addf %101, %102 : vector<3x128xf32>
    %cst_39 = arith.constant dense<0.000000e+00> : vector<3x3xf32>
    %104 = tpu.matmul %3, %103, %cst_39 {dimension_numbers = #tpu.dot_dimension_numbers<[1], [1], [0], [0], [0, 0, 1, 0], [], []>} : vector<3x128xf32>, vector<3x128xf32>, vector<3x3xf32> -> vector<3x3xf32>
    %cst_40 = arith.constant dense<0xFF800000> : vector<3xf32>
    %105 = vector.multi_reduction <maximumf>, %104, %cst_40 [1] : vector<3x3xf32> to vector<3xf32>
    %106 = vector.shape_cast %105 : vector<3xf32> to vector<3x1xf32>
    %107 = vector.broadcast %106 : vector<3x1xf32> to vector<3x3xf32>
    %108 = arith.subf %104, %107 : vector<3x3xf32>
    %109 = math.exp %108 : vector<3x3xf32>
    %cst_41 = arith.constant dense<0.000000e+00> : vector<3xf32>
    %110 = vector.multi_reduction <add>, %109, %cst_41 [1] : vector<3x3xf32> to vector<3xf32>
    %111 = vector.shape_cast %110 : vector<3xf32> to vector<3x1xf32>
    %112 = tpu.reciprocal %111 {approx = true} : vector<3x1xf32> -> vector<3x1xf32>
    %113 = vector.broadcast %112 : vector<3x1xf32> to vector<3x3xf32>
    %114 = arith.mulf %109, %113 : vector<3x3xf32>
    %cst_42 = arith.constant dense<0.000000e+00> : vector<3x128xf32>
    %115 = tpu.matmul %114, %103, %cst_42 {dimension_numbers = #tpu.dot_dimension_numbers<[1], [0], [0], [1], [0, 0, 1, 1], [], []>} : vector<3x3xf32>, vector<3x128xf32>, vector<3x128xf32> -> vector<3x128xf32>
    %cst_43 = arith.constant dense<0.000000e+00> : vector<3x128xf32>
    %116 = tpu.matmul %115, %6, %cst_43 {dimension_numbers = #tpu.dot_dimension_numbers<[1], [0], [0], [1], [0, 0, 1, 1], [], []>} : vector<3x128xf32>, vector<128x128xf32>, vector<3x128xf32> -> vector<3x128xf32>
    %117 = vector.broadcast %7 : vector<1x128xf32> to vector<3x128xf32>
    %118 = arith.addf %116, %117 : vector<3x128xf32>
    %119 = vector.broadcast %88 : vector<1x128xf32> to vector<3x128xf32>
    %120 = arith.addf %118, %119 : vector<3x128xf32>
    %121 = tpu.concatenate %64, %120 in 0 : vector<3x128xf32>, vector<3x128xf32> -> vector<6x128xf32>
    %c0_44 = arith.constant 0 : index
    %c0_45 = arith.constant 0 : index
    %122 = vector.load %arg10[%c0_44, %c0_45] : memref<128x64xf32, #tpu.memory_space<vmem>>, vector<128x64xf32>
    %cst_46 = arith.constant dense<0.000000e+00> : vector<6x64xf32>
    %123 = tpu.matmul %121, %122, %cst_46 {dimension_numbers = #tpu.dot_dimension_numbers<[1], [0], [0], [1], [0, 0, 1, 1], [], []>} : vector<6x128xf32>, vector<128x64xf32>, vector<6x64xf32> -> vector<6x64xf32>
    %c0_47 = arith.constant 0 : index
    %c0_48 = arith.constant 0 : index
    %124 = vector.load %arg11[%c0_47, %c0_48] : memref<1x64xf32, #tpu.memory_space<vmem>>, vector<1x64xf32>
    %125 = vector.broadcast %124 : vector<1x64xf32> to vector<6x64xf32>
    %126 = arith.addf %123, %125 : vector<6x64xf32>
    %127 = vector.extract_strided_slice %126 {offsets = [0, 58], sizes = [6, 1], strides = [1, 1]} : vector<6x64xf32> to vector<6x1xf32>
    %128 = vector.extract_strided_slice %126 {offsets = [0, 59], sizes = [6, 1], strides = [1, 1]} : vector<6x64xf32> to vector<6x1xf32>
    %129 = vector.extract_strided_slice %126 {offsets = [0, 60], sizes = [6, 1], strides = [1, 1]} : vector<6x64xf32> to vector<6x1xf32>
    %cst_49 = arith.constant 0.000000e+00 : f32
    %130 = vector.broadcast %cst_49 : f32 to vector<6x1xf32>
    %131 = arith.subf %130, %129 : vector<6x1xf32>
    %132 = math.exp %131 : vector<6x1xf32>
    %cst_50 = arith.constant 1.000000e+00 : f32
    %133 = vector.broadcast %cst_50 : f32 to vector<6x1xf32>
    %134 = arith.addf %133, %132 : vector<6x1xf32>
    %cst_51 = arith.constant 1.875000e+01 : f32
    %135 = vector.broadcast %cst_51 : f32 to vector<6x1xf32>
    %136 = arith.divf %135, %134 : vector<6x1xf32>
    %c0_52 = arith.constant 0 : index
    %c0_53 = arith.constant 0 : index
    %137 = vector.load %arg14[%c0_52, %c0_53] : memref<128x128xf32, #tpu.memory_space<vmem>>, vector<128x128xf32>
    %c0_54 = arith.constant 0 : index
    %c0_55 = arith.constant 0 : index
    %138 = vector.load %arg12[%c0_54, %c0_55] : memref<3x128xf32, #tpu.memory_space<vmem>>, vector<1x128xf32>
    %c0_56 = arith.constant 0 : index
    %c0_57 = arith.constant 0 : index
    %c0_58 = arith.constant 0 : index
    %139 = vector.load %arg13[%c0_56, %c0_57, %c0_58] : memref<3x64x128xf32, #tpu.memory_space<vmem>>, vector<1x64x128xf32>
    %140 = vector.shape_cast %139 : vector<1x64x128xf32> to vector<64x128xf32>
    %cst_59 = arith.constant dense<0.000000e+00> : vector<6x128xf32>
    %141 = tpu.matmul %126, %140, %cst_59 {dimension_numbers = #tpu.dot_dimension_numbers<[1], [0], [0], [1], [0, 0, 1, 1], [], []>} : vector<6x64xf32>, vector<64x128xf32>, vector<6x128xf32> -> vector<6x128xf32>
    %142 = vector.broadcast %138 : vector<1x128xf32> to vector<6x128xf32>
    %143 = arith.addf %142, %141 : vector<6x128xf32>
    %cst_60 = arith.constant dense<0.000000e+00> : vector<6x128xf32>
    %144 = tpu.matmul %143, %137, %cst_60 {dimension_numbers = #tpu.dot_dimension_numbers<[1], [0], [0], [1], [0, 0, 1, 1], [], []>} : vector<6x128xf32>, vector<128x128xf32>, vector<6x128xf32> -> vector<6x128xf32>
    %c1_61 = arith.constant 1 : index
    %c0_62 = arith.constant 0 : index
    %145 = vector.load %arg12[%c1_61, %c0_62] : memref<3x128xf32, #tpu.memory_space<vmem>>, vector<1x128xf32>
    %c1_63 = arith.constant 1 : index
    %c0_64 = arith.constant 0 : index
    %c0_65 = arith.constant 0 : index
    %146 = vector.load %arg13[%c1_63, %c0_64, %c0_65] : memref<3x64x128xf32, #tpu.memory_space<vmem>>, vector<1x64x128xf32>
    %147 = vector.shape_cast %146 : vector<1x64x128xf32> to vector<64x128xf32>
    %cst_66 = arith.constant dense<0.000000e+00> : vector<6x128xf32>
    %148 = tpu.matmul %126, %147, %cst_66 {dimension_numbers = #tpu.dot_dimension_numbers<[1], [0], [0], [1], [0, 0, 1, 1], [], []>} : vector<6x64xf32>, vector<64x128xf32>, vector<6x128xf32> -> vector<6x128xf32>
    %149 = vector.broadcast %145 : vector<1x128xf32> to vector<6x128xf32>
    %150 = arith.addf %149, %148 : vector<6x128xf32>
    %cst_67 = arith.constant dense<0.000000e+00> : vector<6x128xf32>
    %151 = tpu.matmul %150, %137, %cst_67 {dimension_numbers = #tpu.dot_dimension_numbers<[1], [0], [0], [1], [0, 0, 1, 1], [], []>} : vector<6x128xf32>, vector<128x128xf32>, vector<6x128xf32> -> vector<6x128xf32>
    %c2 = arith.constant 2 : index
    %c0_68 = arith.constant 0 : index
    %152 = vector.load %arg12[%c2, %c0_68] : memref<3x128xf32, #tpu.memory_space<vmem>>, vector<1x128xf32>
    %c2_69 = arith.constant 2 : index
    %c0_70 = arith.constant 0 : index
    %c0_71 = arith.constant 0 : index
    %153 = vector.load %arg13[%c2_69, %c0_70, %c0_71] : memref<3x64x128xf32, #tpu.memory_space<vmem>>, vector<1x64x128xf32>
    %154 = vector.shape_cast %153 : vector<1x64x128xf32> to vector<64x128xf32>
    %cst_72 = arith.constant dense<0.000000e+00> : vector<6x128xf32>
    %155 = tpu.matmul %126, %154, %cst_72 {dimension_numbers = #tpu.dot_dimension_numbers<[1], [0], [0], [1], [0, 0, 1, 1], [], []>} : vector<6x64xf32>, vector<64x128xf32>, vector<6x128xf32> -> vector<6x128xf32>
    %156 = vector.broadcast %152 : vector<1x128xf32> to vector<6x128xf32>
    %157 = arith.addf %156, %155 : vector<6x128xf32>
    %cst_73 = arith.constant dense<0.000000e+00> : vector<6x128xf32>
    %158 = tpu.matmul %157, %137, %cst_73 {dimension_numbers = #tpu.dot_dimension_numbers<[1], [0], [0], [1], [0, 0, 1, 1], [], []>} : vector<6x128xf32>, vector<128x128xf32>, vector<6x128xf32> -> vector<6x128xf32>
    %159 = vector.broadcast %136 : vector<6x1xf32> to vector<6x128xf32>
    %160 = arith.addf %158, %159 : vector<6x128xf32>
    %cst_74 = arith.constant 9.99999974E-5 : f32
    %161 = vector.broadcast %cst_74 : f32 to vector<6x128xf32>
    %162 = arith.addf %160, %161 : vector<6x128xf32>
    %cst_75 = arith.constant 1.000000e+00 : f32
    %163 = vector.broadcast %cst_75 : f32 to vector<6x128xf32>
    %164 = arith.divf %163, %162 : vector<6x128xf32>
    %165 = vector.broadcast %127 : vector<6x1xf32> to vector<6x128xf32>
    %166 = arith.addf %144, %165 : vector<6x128xf32>
    %167 = arith.mulf %166, %164 : vector<6x128xf32>
    %cst_76 = arith.constant 1.000000e+03 : f32
    %168 = vector.broadcast %cst_76 : f32 to vector<6x128xf32>
    %169 = arith.mulf %167, %168 : vector<6x128xf32>
    %cst_77 = arith.constant 8.000000e+00 : f32
    %170 = vector.broadcast %cst_77 : f32 to vector<6x128xf32>
    %171 = arith.addf %169, %170 : vector<6x128xf32>
    %172 = vector.broadcast %128 : vector<6x1xf32> to vector<6x128xf32>
    %173 = arith.addf %151, %172 : vector<6x128xf32>
    %174 = arith.mulf %173, %164 : vector<6x128xf32>
    %cst_78 = arith.constant 1.000000e+03 : f32
    %175 = vector.broadcast %cst_78 : f32 to vector<6x128xf32>
    %176 = arith.mulf %174, %175 : vector<6x128xf32>
    %cst_79 = arith.constant 8.000000e+00 : f32
    %177 = vector.broadcast %cst_79 : f32 to vector<6x128xf32>
    %178 = arith.addf %176, %177 : vector<6x128xf32>
    %179 = vector.extract_strided_slice %144 {offsets = [0, 0], sizes = [6, 1], strides = [1, 1]} : vector<6x128xf32> to vector<6x1xf32>
    %180 = vector.broadcast %179 : vector<6x1xf32> to vector<6x128xf32>
    %181 = arith.subf %144, %180 : vector<6x128xf32>
    %182 = vector.extract_strided_slice %151 {offsets = [0, 0], sizes = [6, 1], strides = [1, 1]} : vector<6x128xf32> to vector<6x1xf32>
    %183 = vector.broadcast %182 : vector<6x1xf32> to vector<6x128xf32>
    %184 = arith.subf %151, %183 : vector<6x128xf32>
    %185 = vector.extract_strided_slice %158 {offsets = [0, 0], sizes = [6, 1], strides = [1, 1]} : vector<6x128xf32> to vector<6x1xf32>
    %186 = vector.broadcast %185 : vector<6x1xf32> to vector<6x128xf32>
    %187 = arith.subf %158, %186 : vector<6x128xf32>
    %188 = vector.broadcast %127 : vector<6x1xf32> to vector<6x128xf32>
    %189 = arith.addf %143, %188 : vector<6x128xf32>
    %190 = vector.broadcast %128 : vector<6x1xf32> to vector<6x128xf32>
    %191 = arith.addf %150, %190 : vector<6x128xf32>
    %192 = vector.broadcast %136 : vector<6x1xf32> to vector<6x128xf32>
    %193 = arith.addf %157, %192 : vector<6x128xf32>
    %194 = vector.extract_strided_slice %189 {offsets = [0, 0], sizes = [3, 128], strides = [1, 1]} : vector<6x128xf32> to vector<3x128xf32>
    %195 = vector.extract_strided_slice %191 {offsets = [0, 0], sizes = [3, 128], strides = [1, 1]} : vector<6x128xf32> to vector<3x128xf32>
    %196 = vector.extract_strided_slice %193 {offsets = [0, 0], sizes = [3, 128], strides = [1, 1]} : vector<6x128xf32> to vector<3x128xf32>
    %197 = vector.extract_strided_slice %181 {offsets = [0, 0], sizes = [3, 128], strides = [1, 1]} : vector<6x128xf32> to vector<3x128xf32>
    %198 = vector.extract_strided_slice %184 {offsets = [0, 0], sizes = [3, 128], strides = [1, 1]} : vector<6x128xf32> to vector<3x128xf32>
    %199 = vector.extract_strided_slice %187 {offsets = [0, 0], sizes = [3, 128], strides = [1, 1]} : vector<6x128xf32> to vector<3x128xf32>
    %200 = vector.extract_strided_slice %171 {offsets = [0, 0], sizes = [3, 128], strides = [1, 1]} : vector<6x128xf32> to vector<3x128xf32>
    %201 = vector.extract_strided_slice %178 {offsets = [0, 0], sizes = [3, 128], strides = [1, 1]} : vector<6x128xf32> to vector<3x128xf32>
    %202 = tpu.concatenate %194, %195, %196, %197, %198, %199, %200, %201 in 0 : vector<3x128xf32>, vector<3x128xf32>, vector<3x128xf32>, vector<3x128xf32>, vector<3x128xf32>, vector<3x128xf32>, vector<3x128xf32>, vector<3x128xf32> -> vector<24x128xf32>
    %c0_80 = arith.constant 0 : index
    %c0_81 = arith.constant 0 : index
    %c0_82 = arith.constant 0 : index
    %203 = vector.load %arg15[%c0_80, %c0_81, %c0_82] : memref<2x24x128xf32, #tpu.memory_space<vmem>>, vector<1x24x128xf32>
    %204 = vector.shape_cast %203 : vector<1x24x128xf32> to vector<24x128xf32>
    %205 = vector.shape_cast %202 : vector<24x128xf32> to vector<1x24x128xf32>
    tpu.vector_store %arg15[%c0_80, %c0_81, %c0_82], %205 {strides = array<i32>} : memref<2x24x128xf32, #tpu.memory_space<vmem>>, vector<1x24x128xf32>,
    %206 = vector.extract_strided_slice %189 {offsets = [3, 0], sizes = [3, 128], strides = [1, 1]} : vector<6x128xf32> to vector<3x128xf32>
    %207 = vector.extract_strided_slice %191 {offsets = [3, 0], sizes = [3, 128], strides = [1, 1]} : vector<6x128xf32> to vector<3x128xf32>
    %208 = vector.extract_strided_slice %193 {offsets = [3, 0], sizes = [3, 128], strides = [1, 1]} : vector<6x128xf32> to vector<3x128xf32>
    %209 = vector.extract_strided_slice %181 {offsets = [3, 0], sizes = [3, 128], strides = [1, 1]} : vector<6x128xf32> to vector<3x128xf32>
    %210 = vector.extract_strided_slice %184 {offsets = [3, 0], sizes = [3, 128], strides = [1, 1]} : vector<6x128xf32> to vector<3x128xf32>
    %211 = vector.extract_strided_slice %187 {offsets = [3, 0], sizes = [3, 128], strides = [1, 1]} : vector<6x128xf32> to vector<3x128xf32>
    %212 = vector.extract_strided_slice %171 {offsets = [3, 0], sizes = [3, 128], strides = [1, 1]} : vector<6x128xf32> to vector<3x128xf32>
    %213 = vector.extract_strided_slice %178 {offsets = [3, 0], sizes = [3, 128], strides = [1, 1]} : vector<6x128xf32> to vector<3x128xf32>
    %214 = tpu.concatenate %206, %207, %208, %209, %210, %211, %212, %213 in 0 : vector<3x128xf32>, vector<3x128xf32>, vector<3x128xf32>, vector<3x128xf32>, vector<3x128xf32>, vector<3x128xf32>, vector<3x128xf32>, vector<3x128xf32> -> vector<24x128xf32>
    %c1_83 = arith.constant 1 : index
    %c0_84 = arith.constant 0 : index
    %c0_85 = arith.constant 0 : index
    %215 = vector.load %arg15[%c1_83, %c0_84, %c0_85] : memref<2x24x128xf32, #tpu.memory_space<vmem>>, vector<1x24x128xf32>
    %216 = vector.shape_cast %215 : vector<1x24x128xf32> to vector<24x128xf32>
    %217 = vector.shape_cast %214 : vector<24x128xf32> to vector<1x24x128xf32>
    tpu.vector_store %arg15[%c1_83, %c0_84, %c0_85], %217 {strides = array<i32>} : memref<2x24x128xf32, #tpu.memory_space<vmem>>, vector<1x24x128xf32>,
    return
  }
  func.func @transform_0(%arg0: i32) -> (i32, i32, i32) {
    %c0_i32 = arith.constant 0 : i32
    %c0_i32_0 = arith.constant 0 : i32
    %c0_i32_1 = arith.constant 0 : i32
    return %arg0, %c0_i32, %c0_i32_0 : i32, i32, i32
  }
  func.func @transform_1(%arg0: i32) -> (i32, i32) {
    %c0_i32 = arith.constant 0 : i32
    %c0_i32_0 = arith.constant 0 : i32
    %c0_i32_1 = arith.constant 0 : i32
    return %c0_i32, %c0_i32_0 : i32, i32
  }
  func.func @transform_2(%arg0: i32) -> (i32, i32) {
    %c0_i32 = arith.constant 0 : i32
    %c0_i32_0 = arith.constant 0 : i32
    %c0_i32_1 = arith.constant 0 : i32
    return %c0_i32, %c0_i32_0 : i32, i32
  }
  func.func @transform_3(%arg0: i32) -> (i32, i32) {
    %c0_i32 = arith.constant 0 : i32
    %c0_i32_0 = arith.constant 0 : i32
    %c0_i32_1 = arith.constant 0 : i32
    return %c0_i32, %c0_i32_0 : i32, i32
  }
  func.func @transform_4(%arg0: i32) -> (i32, i32) {
    %c0_i32 = arith.constant 0 : i32
    %c0_i32_0 = arith.constant 0 : i32
    %c0_i32_1 = arith.constant 0 : i32
    return %c0_i32, %c0_i32_0 : i32, i32
  }
  func.func @transform_5(%arg0: i32) -> (i32, i32) {
    %c0_i32 = arith.constant 0 : i32
    %c0_i32_0 = arith.constant 0 : i32
    %c0_i32_1 = arith.constant 0 : i32
    return %c0_i32, %c0_i32_0 : i32, i32
  }
  func.func @transform_6(%arg0: i32) -> (i32, i32) {
    %c0_i32 = arith.constant 0 : i32
    %c0_i32_0 = arith.constant 0 : i32
    %c0_i32_1 = arith.constant 0 : i32
    return %c0_i32, %c0_i32_0 : i32, i32
  }
  func.func @transform_7(%arg0: i32) -> (i32, i32) {
    %c0_i32 = arith.constant 0 : i32
    %c0_i32_0 = arith.constant 0 : i32
    %c0_i32_1 = arith.constant 0 : i32
    return %c0_i32, %c0_i32_0 : i32, i32
  }
  func.func @transform_8(%arg0: i32) -> (i32, i32) {
    %c0_i32 = arith.constant 0 : i32
    %c0_i32_0 = arith.constant 0 : i32
    %c0_i32_1 = arith.constant 0 : i32
    return %c0_i32, %c0_i32_0 : i32, i32
  }
  func.func @transform_9(%arg0: i32) -> (i32, i32) {
    %c0_i32 = arith.constant 0 : i32
    %c0_i32_0 = arith.constant 0 : i32
    %c0_i32_1 = arith.constant 0 : i32
    return %c0_i32, %c0_i32_0 : i32, i32
  }
  func.func @transform_10(%arg0: i32) -> (i32, i32) {
    %c0_i32 = arith.constant 0 : i32
    %c0_i32_0 = arith.constant 0 : i32
    %c0_i32_1 = arith.constant 0 : i32
    return %c0_i32, %c0_i32_0 : i32, i32
  }
  func.func @transform_11(%arg0: i32) -> (i32, i32) {
    %c0_i32 = arith.constant 0 : i32
    %c0_i32_0 = arith.constant 0 : i32
    %c0_i32_1 = arith.constant 0 : i32
    return %c0_i32, %c0_i32_0 : i32, i32
  }
  func.func @transform_12(%arg0: i32) -> (i32, i32, i32) {
    %c0_i32 = arith.constant 0 : i32
    %c0_i32_0 = arith.constant 0 : i32
    %c0_i32_1 = arith.constant 0 : i32
    %c0_i32_2 = arith.constant 0 : i32
    return %c0_i32, %c0_i32_0, %c0_i32_1 : i32, i32, i32
  }
  func.func @transform_13(%arg0: i32) -> (i32, i32) {
    %c0_i32 = arith.constant 0 : i32
    %c0_i32_0 = arith.constant 0 : i32
    %c0_i32_1 = arith.constant 0 : i32
    return %c0_i32, %c0_i32_0 : i32, i32
  }
  func.func @transform_14(%arg0: i32) -> (i32, i32, i32) {
    %c0_i32 = arith.constant 0 : i32
    %c0_i32_0 = arith.constant 0 : i32
    %c0_i32_1 = arith.constant 0 : i32
    return %arg0, %c0_i32, %c0_i32_0 : i32, i32, i32
  }
}

</mosaic_0001>

<llo_original>
// kernel: tpu_custom_call.1
$region0: #{tpu_custom_call.1}
  #allocation0 [shape = 'u32[]', space=smem, size = 0x4, offset = 0x4, fixed_abs, tag = 'smem constant byte address 0x4 - core index']
  #allocation1 [shape = 'u32[144,128]{1,0:T(1,128)}', space=vmem, size = 0x12000, scoped, tag = 'internal scratch']
  %s0 = inlined_call_operand.vmem [shape: f32[2,256,3], index: 0, kind: input, shape index: {}]
  %s1 = inlined_call_operand.vmem [shape: f32[3,128], index: 1, kind: input, shape index: {}]
  %s2 = inlined_call_operand.vmem [shape: f32[1,128], index: 2, kind: input, shape index: {}]
  %s3 = inlined_call_operand.vmem [shape: f32[3,128], index: 3, kind: input, shape index: {}]
  %s4 = inlined_call_operand.vmem [shape: f32[3,128], index: 4, kind: input, shape index: {}]
  %s5 = inlined_call_operand.vmem [shape: f32[128,128], index: 5, kind: input, shape index: {}]
  %s6 = inlined_call_operand.vmem [shape: f32[1,128], index: 6, kind: input, shape index: {}]
  %s7 = inlined_call_operand.vmem [shape: f32[128,128], index: 7, kind: input, shape index: {}]
  %s8 = inlined_call_operand.vmem [shape: f32[1,128], index: 8, kind: input, shape index: {}]
  %s9 = inlined_call_operand.vmem [shape: f32[128,64], index: 9, kind: input, shape index: {}]
  %s10 = inlined_call_operand.vmem [shape: f32[1,64], index: 10, kind: input, shape index: {}]
  %s11 = inlined_call_operand.vmem [shape: f32[3,128], index: 11, kind: input, shape index: {}]
  %s12 = inlined_call_operand.vmem [shape: f32[3,64,128], index: 12, kind: input, shape index: {}]
  %s13 = inlined_call_operand.vmem [shape: f32[128,128], index: 13, kind: input, shape index: {}]
  %s14 = inlined_call_operand.hbm [shape: f32[2,24,128], index: 14, kind: output, shape index: {}]
  %s15 = sld [smem:[#allocation0]]
  $region66: #{tpu_custom_call.1} parent=0
    _
  %s17 = ssub.s32 1, %s15
  %s18 = scalar_select 0, %s17, %s15
  $region1: #{tpu_custom_call.1} parent=0
    #allocation2 [shape = 'u8[24576]{0}', space=vmem, size = 0x6000, scoped, tag = 'output window, operand 0, single buffered']
    #allocation3 [shape = 's32[1]{0}', space=sflag, size = 0x4, scoped, tag = 'scoped memory for tpu_custom_call.1']
    %19 = vsyncpa [#allocation3], 0
    // Predicated region
    $region2: #{tpu_custom_call.1} parent=1 // pred_check
      _
    $region3: #{tpu_custom_call.1} parent=1 // pred_check_branch
      %21 = sbr.rel (0) target = $region5
    $region4: #{tpu_custom_call.1} parent=1 // pred_region
      _
    $region5: #{tpu_custom_call.1} parent=1 // pred_fallthru
      _
    // Predicated region
    $region6: #{tpu_custom_call.1} parent=1 // pred_check
      _
    $region7: #{tpu_custom_call.1} parent=1 // pred_check_branch
      %23 = sbr.rel (0) target = $region9
    $region8: #{tpu_custom_call.1} parent=1 // pred_region
      _
    $region9: #{tpu_custom_call.1} parent=1 // pred_fallthru
      _
    // Predicated region
    $region10: #{tpu_custom_call.1} parent=1 // pred_check
      _
    $region11: #{tpu_custom_call.1} parent=1 // pred_check_branch
      %25 = sbr.rel (0) target = $region13
    $region12: #{tpu_custom_call.1} parent=1 // pred_region
      _
    $region13: #{tpu_custom_call.1} parent=1 // pred_fallthru
      _
    // Predicated region
    $region14: #{tpu_custom_call.1} parent=1 // pred_check
      _
    $region15: #{tpu_custom_call.1} parent=1 // pred_check_branch
      %27 = sbr.rel (0) target = $region17
    $region16: #{tpu_custom_call.1} parent=1 // pred_region
      _
    $region17: #{tpu_custom_call.1} parent=1 // pred_fallthru
      _
    // Predicated region
    $region18: #{tpu_custom_call.1} parent=1 // pred_check
      _
    $region19: #{tpu_custom_call.1} parent=1 // pred_check_branch
      %29 = sbr.rel (0) target = $region21
    $region20: #{tpu_custom_call.1} parent=1 // pred_region
      _
    $region21: #{tpu_custom_call.1} parent=1 // pred_fallthru
      _
    // Predicated region
    $region22: #{tpu_custom_call.1} parent=1 // pred_check
      _
    $region23: #{tpu_custom_call.1} parent=1 // pred_check_branch
      %31 = sbr.rel (0) target = $region25
    $region24: #{tpu_custom_call.1} parent=1 // pred_region
      _
    $region25: #{tpu_custom_call.1} parent=1 // pred_fallthru
      _
    // Predicated region
    $region26: #{tpu_custom_call.1} parent=1 // pred_check
      _
    $region27: #{tpu_custom_call.1} parent=1 // pred_check_branch
      %33 = sbr.rel (0) target = $region29
    $region28: #{tpu_custom_call.1} parent=1 // pred_region
      _
    $region29: #{tpu_custom_call.1} parent=1 // pred_fallthru
      _
    // Predicated region
    $region30: #{tpu_custom_call.1} parent=1 // pred_check
      _
    $region31: #{tpu_custom_call.1} parent=1 // pred_check_branch
      %35 = sbr.rel (0) target = $region33
    $region32: #{tpu_custom_call.1} parent=1 // pred_region
      _
    $region33: #{tpu_custom_call.1} parent=1 // pred_fallthru
      _
    // Predicated region
    $region34: #{tpu_custom_call.1} parent=1 // pred_check
      _
    $region35: #{tpu_custom_call.1} parent=1 // pred_check_branch
      %37 = sbr.rel (0) target = $region37
    $region36: #{tpu_custom_call.1} parent=1 // pred_region
      _
    $region37: #{tpu_custom_call.1} parent=1 // pred_fallthru
      _
    // Predicated region
    $region38: #{tpu_custom_call.1} parent=1 // pred_check
      _
    $region39: #{tpu_custom_call.1} parent=1 // pred_check_branch
      %39 = sbr.rel (0) target = $region41
    $region40: #{tpu_custom_call.1} parent=1 // pred_region
      _
    $region41: #{tpu_custom_call.1} parent=1 // pred_fallthru
      _
    // Predicated region
    $region42: #{tpu_custom_call.1} parent=1 // pred_check
      _
    $region43: #{tpu_custom_call.1} parent=1 // pred_check_branch
      %41 = sbr.rel (0) target = $region45
    $region44: #{tpu_custom_call.1} parent=1 // pred_region
      _
    $region45: #{tpu_custom_call.1} parent=1 // pred_fallthru
      _
    // Predicated region
    $region46: #{tpu_custom_call.1} parent=1 // pred_check
      _
    $region47: #{tpu_custom_call.1} parent=1 // pred_check_branch
      %43 = sbr.rel (0) target = $region49
    $region48: #{tpu_custom_call.1} parent=1 // pred_region
      _
    $region49: #{tpu_custom_call.1} parent=1 // pred_fallthru
      _
    // Predicated region
    $region50: #{tpu_custom_call.1} parent=1 // pred_check
      _
    $region51: #{tpu_custom_call.1} parent=1 // pred_check_branch
      %45 = sbr.rel (0) target = $region53
    $region52: #{tpu_custom_call.1} parent=1 // pred_region
      _
    $region53: #{tpu_custom_call.1} parent=1 // pred_fallthru
      _
    // Predicated region
    $region54: #{tpu_custom_call.1} parent=1 // pred_check
      _
    $region55: #{tpu_custom_call.1} parent=1 // pred_check_branch
      %47 = sbr.rel (0) target = $region57
    $region56: #{tpu_custom_call.1} parent=1 // pred_region
      _
    $region57: #{tpu_custom_call.1} parent=1 // pred_fallthru
      _
    %v48 = vld [vmem:[%s1] sm:$0x7]
    %v49 = vld [vmem:[%s2] sm:$0x1]
    %v50 = vld [vmem:[%s3] sm:$0x7]
    %v51 = vld [vmem:[%s4] sm:$0x7]
    %v52 = vld [vmem:[%s5] sm:$0xff]
    %v53 = vld [vmem:[%s5 + $0x8] sm:$0xff]
    %v54 = vld [vmem:[%s5 + $0x10] sm:$0xff]
    %v55 = vld [vmem:[%s5 + $0x18] sm:$0xff]
    %v56 = vld [vmem:[%s5 + $0x20] sm:$0xff]
    %v57 = vld [vmem:[%s5 + $0x28] sm:$0xff]
    %v58 = vld [vmem:[%s5 + $0x30] sm:$0xff]
    %v59 = vld [vmem:[%s5 + $0x38] sm:$0xff]
    %v60 = vld [vmem:[%s5 + $0x40] sm:$0xff]
    %v61 = vld [vmem:[%s5 + $0x48] sm:$0xff]
    %v62 = vld [vmem:[%s5 + $0x50] sm:$0xff]
    %v63 = vld [vmem:[%s5 + $0x58] sm:$0xff]
    %v64 = vld [vmem:[%s5 + $0x60] sm:$0xff]
    %v65 = vld [vmem:[%s5 + $0x68] sm:$0xff]
    %v66 = vld [vmem:[%s5 + $0x70] sm:$0xff]
    %v67 = vld [vmem:[%s5 + $0x78] sm:$0xff]
    %v68 = vld [vmem:[%s6] sm:$0x1]
    %v69 = vld [vmem:[%s7] sm:$0xff]
    %v70 = vld [vmem:[%s7 + $0x8] sm:$0xff]
    %v71 = vld [vmem:[%s7 + $0x10] sm:$0xff]
    %v72 = vld [vmem:[%s7 + $0x18] sm:$0xff]
    %v73 = vld [vmem:[%s7 + $0x20] sm:$0xff]
    %v74 = vld [vmem:[%s7 + $0x28] sm:$0xff]
    %v75 = vld [vmem:[%s7 + $0x30] sm:$0xff]
    %v76 = vld [vmem:[%s7 + $0x38] sm:$0xff]
    %v77 = vld [vmem:[%s7 + $0x40] sm:$0xff]
    %v78 = vld [vmem:[%s7 + $0x48] sm:$0xff]
    %v79 = vld [vmem:[%s7 + $0x50] sm:$0xff]
    %v80 = vld [vmem:[%s7 + $0x58] sm:$0xff]
    %v81 = vld [vmem:[%s7 + $0x60] sm:$0xff]
    %v82 = vld [vmem:[%s7 + $0x68] sm:$0xff]
    %v83 = vld [vmem:[%s7 + $0x70] sm:$0xff]
    %v84 = vld [vmem:[%s7 + $0x78] sm:$0xff]
    %v85 = vld [vmem:[%s8] sm:$0x1]
    %v86 = vld [vmem:[%s0] sm:$0xff]
    %v87 = vld [vmem:[%s0 + $0x8] sm:$0xff]
    %v88 = vld [vmem:[%s0 + $0x10] sm:$0xff]
    %v89 = vld [vmem:[%s0 + $0x18] sm:$0xff]
    %v90 = vld [vmem:[%s0 + $0x20] sm:$0xff]
    %v91 = vld [vmem:[%s0 + $0x28] sm:$0xff]
    %v92 = vld [vmem:[%s0 + $0x30] sm:$0xff]
    %v93 = vld [vmem:[%s0 + $0x38] sm:$0xff]
    %v94 = vld [vmem:[%s0 + $0x40] sm:$0xff]
    %v95 = vld [vmem:[%s0 + $0x48] sm:$0xff]
    %v96 = vld [vmem:[%s0 + $0x50] sm:$0xff]
    %v97 = vld [vmem:[%s0 + $0x58] sm:$0xff]
    %v98 = vld [vmem:[%s0 + $0x60] sm:$0xff]
    %v99 = vld [vmem:[%s0 + $0x68] sm:$0xff]
    %v100 = vld [vmem:[%s0 + $0x70] sm:$0xff]
    %v101 = vld [vmem:[%s0 + $0x78] sm:$0xff]
    %v102 = vld [vmem:[%s0 + $0x80] sm:$0xff]
    %v103 = vld [vmem:[%s0 + $0x88] sm:$0xff]
    %v104 = vld [vmem:[%s0 + $0x90] sm:$0xff]
    %v105 = vld [vmem:[%s0 + $0x98] sm:$0xff]
    %v106 = vld [vmem:[%s0 + $0xa0] sm:$0xff]
    %v107 = vld [vmem:[%s0 + $0xa8] sm:$0xff]
    %v108 = vld [vmem:[%s0 + $0xb0] sm:$0xff]
    %v109 = vld [vmem:[%s0 + $0xb8] sm:$0xff]
    %v110 = vld [vmem:[%s0 + $0xc0] sm:$0xff]
    %v111 = vld [vmem:[%s0 + $0xc8] sm:$0xff]
    %v112 = vld [vmem:[%s0 + $0xd0] sm:$0xff]
    %v113 = vld [vmem:[%s0 + $0xd8] sm:$0xff]
    %v114 = vld [vmem:[%s0 + $0xe0] sm:$0xff]
    %v115 = vld [vmem:[%s0 + $0xe8] sm:$0xff]
    %v116 = vld [vmem:[%s0 + $0xf0] sm:$0xff]
    %v117 = vld [vmem:[%s0 + $0xf8] sm:$0xff]
    %119 = vset.pattern.permute.xlu0 0
    %120 = vperm.xlu0 %119, %v86
    %v121 = vpop.permute.xlu0 %120
    %124 = vset.pattern.permute.xlu0 0
    %125 = vperm.xlu0 %124, %v87
    %v126 = vpop.permute.xlu0 %125
    %129 = vset.pattern.permute.xlu0 0
    %130 = vperm.xlu0 %129, %v88
    %v131 = vpop.permute.xlu0 %130
    %134 = vset.pattern.permute.xlu0 0
    %135 = vperm.xlu0 %134, %v89
    %v136 = vpop.permute.xlu0 %135
    %139 = vset.pattern.permute.xlu0 0
    %140 = vperm.xlu0 %139, %v90
    %v141 = vpop.permute.xlu0 %140
    %144 = vset.pattern.permute.xlu0 0
    %145 = vperm.xlu0 %144, %v91
    %v146 = vpop.permute.xlu0 %145
    %149 = vset.pattern.permute.xlu0 0
    %150 = vperm.xlu0 %149, %v92
    %v151 = vpop.permute.xlu0 %150
    %154 = vset.pattern.permute.xlu0 0
    %155 = vperm.xlu0 %154, %v93
    %v156 = vpop.permute.xlu0 %155
    %159 = vset.pattern.permute.xlu0 0
    %160 = vperm.xlu0 %159, %v94
    %v161 = vpop.permute.xlu0 %160
    %164 = vset.pattern.permute.xlu0 0
    %165 = vperm.xlu0 %164, %v95
    %v166 = vpop.permute.xlu0 %165
    %169 = vset.pattern.permute.xlu0 0
    %170 = vperm.xlu0 %169, %v96
    %v171 = vpop.permute.xlu0 %170
    %174 = vset.pattern.permute.xlu0 0
    %175 = vperm.xlu0 %174, %v97
    %v176 = vpop.permute.xlu0 %175
    %179 = vset.pattern.permute.xlu0 0
    %180 = vperm.xlu0 %179, %v98
    %v181 = vpop.permute.xlu0 %180
    %184 = vset.pattern.permute.xlu0 0
    %185 = vperm.xlu0 %184, %v99
    %v186 = vpop.permute.xlu0 %185
    %189 = vset.pattern.permute.xlu0 0
    %190 = vperm.xlu0 %189, %v100
    %v191 = vpop.permute.xlu0 %190
    %194 = vset.pattern.permute.xlu0 0
    %195 = vperm.xlu0 %194, %v101
    %v196 = vpop.permute.xlu0 %195
    %199 = vset.pattern.permute.xlu0 0
    %200 = vperm.xlu0 %199, %v102
    %v201 = vpop.permute.xlu0 %200
    %204 = vset.pattern.permute.xlu0 0
    %205 = vperm.xlu0 %204, %v103
    %v206 = vpop.permute.xlu0 %205
    %209 = vset.pattern.permute.xlu0 0
    %210 = vperm.xlu0 %209, %v104
    %v211 = vpop.permute.xlu0 %210
    %214 = vset.pattern.permute.xlu0 0
    %215 = vperm.xlu0 %214, %v105
    %v216 = vpop.permute.xlu0 %215
    %219 = vset.pattern.permute.xlu0 0
    %220 = vperm.xlu0 %219, %v106
    %v221 = vpop.permute.xlu0 %220
    %224 = vset.pattern.permute.xlu0 0
    %225 = vperm.xlu0 %224, %v107
    %v226 = vpop.permute.xlu0 %225
    %229 = vset.pattern.permute.xlu0 0
    %230 = vperm.xlu0 %229, %v108
    %v231 = vpop.permute.xlu0 %230
    %234 = vset.pattern.permute.xlu0 0
    %235 = vperm.xlu0 %234, %v109
    %v236 = vpop.permute.xlu0 %235
    %239 = vset.pattern.permute.xlu0 0
    %240 = vperm.xlu0 %239, %v110
    %v241 = vpop.permute.xlu0 %240
    %244 = vset.pattern.permute.xlu0 0
    %245 = vperm.xlu0 %244, %v111
    %v246 = vpop.permute.xlu0 %245
    %249 = vset.pattern.permute.xlu0 0
    %250 = vperm.xlu0 %249, %v112
    %v251 = vpop.permute.xlu0 %250
    %254 = vset.pattern.permute.xlu0 0
    %255 = vperm.xlu0 %254, %v113
    %v256 = vpop.permute.xlu0 %255
    %259 = vset.pattern.permute.xlu0 0
    %260 = vperm.xlu0 %259, %v114
    %v261 = vpop.permute.xlu0 %260
    %264 = vset.pattern.permute.xlu0 0
    %265 = vperm.xlu0 %264, %v115
    %v266 = vpop.permute.xlu0 %265
    %269 = vset.pattern.permute.xlu0 0
    %270 = vperm.xlu0 %269, %v116
    %v271 = vpop.permute.xlu0 %270
    %274 = vset.pattern.permute.xlu0 0
    %275 = vperm.xlu0 %274, %v117
    %v276 = vpop.permute.xlu0 %275
    %v278 = vlaneseq
    %v279 = vshrl.u32 %v278, 7
    %v280 = vsub.s32 0, %v279
    %v281 = vrot.slane %v48, %v280
    %v282 = vmul.f32 %v121, %v281
    %v283 = vmul.f32 %v126, %v281
    %v284 = vmul.f32 %v131, %v281
    %v285 = vmul.f32 %v136, %v281
    %v286 = vmul.f32 %v141, %v281
    %v287 = vmul.f32 %v146, %v281
    %v288 = vmul.f32 %v151, %v281
    %v289 = vmul.f32 %v156, %v281
    %v290 = vmul.f32 %v161, %v281
    %v291 = vmul.f32 %v166, %v281
    %v292 = vmul.f32 %v171, %v281
    %v293 = vmul.f32 %v176, %v281
    %v294 = vmul.f32 %v181, %v281
    %v295 = vmul.f32 %v186, %v281
    %v296 = vmul.f32 %v191, %v281
    %v297 = vmul.f32 %v196, %v281
    %v298 = vmul.f32 %v201, %v281
    %v299 = vmul.f32 %v206, %v281
    %v300 = vmul.f32 %v211, %v281
    %v301 = vmul.f32 %v216, %v281
    %v302 = vmul.f32 %v221, %v281
    %v303 = vmul.f32 %v226, %v281
    %v304 = vmul.f32 %v231, %v281
    %v305 = vmul.f32 %v236, %v281
    %v306 = vmul.f32 %v241, %v281
    %v307 = vmul.f32 %v246, %v281
    %v308 = vmul.f32 %v251, %v281
    %v309 = vmul.f32 %v256, %v281
    %v310 = vmul.f32 %v261, %v281
    %v311 = vmul.f32 %v266, %v281
    %v312 = vmul.f32 %v271, %v281
    %v313 = vmul.f32 %v276, %v281
    %314 = vset.pattern.permute.xlu0 1
    %315 = vperm.xlu0 %314, %v86
    %v316 = vpop.permute.xlu0 %315
    %318 = vset.pattern.permute.xlu0 1
    %319 = vperm.xlu0 %318, %v87
    %v320 = vpop.permute.xlu0 %319
    %322 = vset.pattern.permute.xlu0 1
    %323 = vperm.xlu0 %322, %v88
    %v324 = vpop.permute.xlu0 %323
    %326 = vset.pattern.permute.xlu0 1
    %327 = vperm.xlu0 %326, %v89
    %v328 = vpop.permute.xlu0 %327
    %330 = vset.pattern.permute.xlu0 1
    %331 = vperm.xlu0 %330, %v90
    %v332 = vpop.permute.xlu0 %331
    %334 = vset.pattern.permute.xlu0 1
    %335 = vperm.xlu0 %334, %v91
    %v336 = vpop.permute.xlu0 %335
    %338 = vset.pattern.permute.xlu0 1
    %339 = vperm.xlu0 %338, %v92
    %v340 = vpop.permute.xlu0 %339
    %342 = vset.pattern.permute.xlu0 1
    %343 = vperm.xlu0 %342, %v93
    %v344 = vpop.permute.xlu0 %343
    %346 = vset.pattern.permute.xlu0 1
    %347 = vperm.xlu0 %346, %v94
    %v348 = vpop.permute.xlu0 %347
    %350 = vset.pattern.permute.xlu0 1
    %351 = vperm.xlu0 %350, %v95
    %v352 = vpop.permute.xlu0 %351
    %354 = vset.pattern.permute.xlu0 1
    %355 = vperm.xlu0 %354, %v96
    %v356 = vpop.permute.xlu0 %355
    %358 = vset.pattern.permute.xlu0 1
    %359 = vperm.xlu0 %358, %v97
    %v360 = vpop.permute.xlu0 %359
    %362 = vset.pattern.permute.xlu0 1
    %363 = vperm.xlu0 %362, %v98
    %v364 = vpop.permute.xlu0 %363
    %366 = vset.pattern.permute.xlu0 1
    %367 = vperm.xlu0 %366, %v99
    %v368 = vpop.permute.xlu0 %367
    %370 = vset.pattern.permute.xlu0 1
    %371 = vperm.xlu0 %370, %v100
    %v372 = vpop.permute.xlu0 %371
    %374 = vset.pattern.permute.xlu0 1
    %375 = vperm.xlu0 %374, %v101
    %v376 = vpop.permute.xlu0 %375
    %378 = vset.pattern.permute.xlu0 1
    %379 = vperm.xlu0 %378, %v102
    %v380 = vpop.permute.xlu0 %379
    %382 = vset.pattern.permute.xlu0 1
    %383 = vperm.xlu0 %382, %v103
    %v384 = vpop.permute.xlu0 %383
    %386 = vset.pattern.permute.xlu0 1
    %387 = vperm.xlu0 %386, %v104
    %v388 = vpop.permute.xlu0 %387
    %390 = vset.pattern.permute.xlu0 1
    %391 = vperm.xlu0 %390, %v105
    %v392 = vpop.permute.xlu0 %391
    %394 = vset.pattern.permute.xlu0 1
    %395 = vperm.xlu0 %394, %v106
    %v396 = vpop.permute.xlu0 %395
    %398 = vset.pattern.permute.xlu0 1
    %399 = vperm.xlu0 %398, %v107
    %v400 = vpop.permute.xlu0 %399
    %402 = vset.pattern.permute.xlu0 1
    %403 = vperm.xlu0 %402, %v108
    %v404 = vpop.permute.xlu0 %403
    %406 = vset.pattern.permute.xlu0 1
    %407 = vperm.xlu0 %406, %v109
    %v408 = vpop.permute.xlu0 %407
    %410 = vset.pattern.permute.xlu0 1
    %411 = vperm.xlu0 %410, %v110
    %v412 = vpop.permute.xlu0 %411
    %414 = vset.pattern.permute.xlu0 1
    %415 = vperm.xlu0 %414, %v111
    %v416 = vpop.permute.xlu0 %415
    %418 = vset.pattern.permute.xlu0 1
    %419 = vperm.xlu0 %418, %v112
    %v420 = vpop.permute.xlu0 %419
    %422 = vset.pattern.permute.xlu0 1
    %423 = vperm.xlu0 %422, %v113
    %v424 = vpop.permute.xlu0 %423
    %426 = vset.pattern.permute.xlu0 1
    %427 = vperm.xlu0 %426, %v114
    %v428 = vpop.permute.xlu0 %427
    %430 = vset.pattern.permute.xlu0 1
    %431 = vperm.xlu0 %430, %v115
    %v432 = vpop.permute.xlu0 %431
    %434 = vset.pattern.permute.xlu0 1
    %435 = vperm.xlu0 %434, %v116
    %v436 = vpop.permute.xlu0 %435
    %438 = vset.pattern.permute.xlu0 1
    %439 = vperm.xlu0 %438, %v117
    %v440 = vpop.permute.xlu0 %439
    %v442 = vlaneseq
    %v443 = vshrl.u32 %v442, 7
    %v444 = vsub.s32 1, %v443
    %v445 = vrot.slane %v48, %v444
    %v446 = vmul.f32 %v316, %v445
    %v447 = vmul.f32 %v320, %v445
    %v448 = vmul.f32 %v324, %v445
    %v449 = vmul.f32 %v328, %v445
    %v450 = vmul.f32 %v332, %v445
    %v451 = vmul.f32 %v336, %v445
    %v452 = vmul.f32 %v340, %v445
    %v453 = vmul.f32 %v344, %v445
    %v454 = vmul.f32 %v348, %v445
    %v455 = vmul.f32 %v352, %v445
    %v456 = vmul.f32 %v356, %v445
    %v457 = vmul.f32 %v360, %v445
    %v458 = vmul.f32 %v364, %v445
    %v459 = vmul.f32 %v368, %v445
    %v460 = vmul.f32 %v372, %v445
    %v461 = vmul.f32 %v376, %v445
    %v462 = vmul.f32 %v380, %v445
    %v463 = vmul.f32 %v384, %v445
    %v464 = vmul.f32 %v388, %v445
    %v465 = vmul.f32 %v392, %v445
    %v466 = vmul.f32 %v396, %v445
    %v467 = vmul.f32 %v400, %v445
    %v468 = vmul.f32 %v404, %v445
    %v469 = vmul.f32 %v408, %v445
    %v470 = vmul.f32 %v412, %v445
    %v471 = vmul.f32 %v416, %v445
    %v472 = vmul.f32 %v420, %v445
    %v473 = vmul.f32 %v424, %v445
    %v474 = vmul.f32 %v428, %v445
    %v475 = vmul.f32 %v432, %v445
    %v476 = vmul.f32 %v436, %v445
    %v477 = vmul.f32 %v440, %v445
    %v478 = vadd.f32 %v282, %v446
    %v479 = vadd.f32 %v283, %v447
    %v480 = vadd.f32 %v284, %v448
    %v481 = vadd.f32 %v285, %v449
    %v482 = vadd.f32 %v286, %v450
    %v483 = vadd.f32 %v287, %v451
    %v484 = vadd.f32 %v288, %v452
    %v485 = vadd.f32 %v289, %v453
    %v486 = vadd.f32 %v290, %v454
    %v487 = vadd.f32 %v291, %v455
    %v488 = vadd.f32 %v292, %v456
    %v489 = vadd.f32 %v293, %v457
    %v490 = vadd.f32 %v294, %v458
    %v491 = vadd.f32 %v295, %v459
    %v492 = vadd.f32 %v296, %v460
    %v493 = vadd.f32 %v297, %v461
    %v494 = vadd.f32 %v298, %v462
    %v495 = vadd.f32 %v299, %v463
    %v496 = vadd.f32 %v300, %v464
    %v497 = vadd.f32 %v301, %v465
    %v498 = vadd.f32 %v302, %v466
    %v499 = vadd.f32 %v303, %v467
    %v500 = vadd.f32 %v304, %v468
    %v501 = vadd.f32 %v305, %v469
    %v502 = vadd.f32 %v306, %v470
    %v503 = vadd.f32 %v307, %v471
    %v504 = vadd.f32 %v308, %v472
    %v505 = vadd.f32 %v309, %v473
    %v506 = vadd.f32 %v310, %v474
    %v507 = vadd.f32 %v311, %v475
    %v508 = vadd.f32 %v312, %v476
    %v509 = vadd.f32 %v313, %v477
    %510 = vset.pattern.permute.xlu0 2
    %511 = vperm.xlu0 %510, %v86
    %v512 = vpop.permute.xlu0 %511
    %514 = vset.pattern.permute.xlu0 2
    %515 = vperm.xlu0 %514, %v87
    %v516 = vpop.permute.xlu0 %515
    %518 = vset.pattern.permute.xlu0 2
    %519 = vperm.xlu0 %518, %v88
    %v520 = vpop.permute.xlu0 %519
    %522 = vset.pattern.permute.xlu0 2
    %523 = vperm.xlu0 %522, %v89
    %v524 = vpop.permute.xlu0 %523
    %526 = vset.pattern.permute.xlu0 2
    %527 = vperm.xlu0 %526, %v90
    %v528 = vpop.permute.xlu0 %527
    %530 = vset.pattern.permute.xlu0 2
    %531 = vperm.xlu0 %530, %v91
    %v532 = vpop.permute.xlu0 %531
    %534 = vset.pattern.permute.xlu0 2
    %535 = vperm.xlu0 %534, %v92
    %v536 = vpop.permute.xlu0 %535
    %538 = vset.pattern.permute.xlu0 2
    %539 = vperm.xlu0 %538, %v93
    %v540 = vpop.permute.xlu0 %539
    %542 = vset.pattern.permute.xlu0 2
    %543 = vperm.xlu0 %542, %v94
    %v544 = vpop.permute.xlu0 %543
    %546 = vset.pattern.permute.xlu0 2
    %547 = vperm.xlu0 %546, %v95
    %v548 = vpop.permute.xlu0 %547
    %550 = vset.pattern.permute.xlu0 2
    %551 = vperm.xlu0 %550, %v96
    %v552 = vpop.permute.xlu0 %551
    %554 = vset.pattern.permute.xlu0 2
    %555 = vperm.xlu0 %554, %v97
    %v556 = vpop.permute.xlu0 %555
    %558 = vset.pattern.permute.xlu0 2
    %559 = vperm.xlu0 %558, %v98
    %v560 = vpop.permute.xlu0 %559
    %562 = vset.pattern.permute.xlu0 2
    %563 = vperm.xlu0 %562, %v99
    %v564 = vpop.permute.xlu0 %563
    %566 = vset.pattern.permute.xlu0 2
    %567 = vperm.xlu0 %566, %v100
    %v568 = vpop.permute.xlu0 %567
    %570 = vset.pattern.permute.xlu0 2
    %571 = vperm.xlu0 %570, %v101
    %v572 = vpop.permute.xlu0 %571
    %574 = vset.pattern.permute.xlu0 2
    %575 = vperm.xlu0 %574, %v102
    %v576 = vpop.permute.xlu0 %575
    %578 = vset.pattern.permute.xlu0 2
    %579 = vperm.xlu0 %578, %v103
    %v580 = vpop.permute.xlu0 %579
    %582 = vset.pattern.permute.xlu0 2
    %583 = vperm.xlu0 %582, %v104
    %v584 = vpop.permute.xlu0 %583
    %586 = vset.pattern.permute.xlu0 2
    %587 = vperm.xlu0 %586, %v105
    %v588 = vpop.permute.xlu0 %587
    %590 = vset.pattern.permute.xlu0 2
    %591 = vperm.xlu0 %590, %v106
    %v592 = vpop.permute.xlu0 %591
    %594 = vset.pattern.permute.xlu0 2
    %595 = vperm.xlu0 %594, %v107
    %v596 = vpop.permute.xlu0 %595
    %598 = vset.pattern.permute.xlu0 2
    %599 = vperm.xlu0 %598, %v108
    %v600 = vpop.permute.xlu0 %599
    %602 = vset.pattern.permute.xlu0 2
    %603 = vperm.xlu0 %602, %v109
    %v604 = vpop.permute.xlu0 %603
    %606 = vset.pattern.permute.xlu0 2
    %607 = vperm.xlu0 %606, %v110
    %v608 = vpop.permute.xlu0 %607
    %610 = vset.pattern.permute.xlu0 2
    %611 = vperm.xlu0 %610, %v111
    %v612 = vpop.permute.xlu0 %611
    %614 = vset.pattern.permute.xlu0 2
    %615 = vperm.xlu0 %614, %v112
    %v616 = vpop.permute.xlu0 %615
    %618 = vset.pattern.permute.xlu0 2
    %619 = vperm.xlu0 %618, %v113
    %v620 = vpop.permute.xlu0 %619
    %622 = vset.pattern.permute.xlu0 2
    %623 = vperm.xlu0 %622, %v114
    %v624 = vpop.permute.xlu0 %623
    %626 = vset.pattern.permute.xlu0 2
    %627 = vperm.xlu0 %626, %v115
    %v628 = vpop.permute.xlu0 %627
    %630 = vset.pattern.permute.xlu0 2
    %631 = vperm.xlu0 %630, %v116
    %v632 = vpop.permute.xlu0 %631
    %634 = vset.pattern.permute.xlu0 2
    %635 = vperm.xlu0 %634, %v117
    %v636 = vpop.permute.xlu0 %635
    %v638 = vlaneseq
    %v639 = vshrl.u32 %v638, 7
    %v640 = vsub.s32 2, %v639
    %v641 = vrot.slane %v48, %v640
    %v642 = vmul.f32 %v512, %v641
    %v643 = vmul.f32 %v516, %v641
    %v644 = vmul.f32 %v520, %v641
    %v645 = vmul.f32 %v524, %v641
    %v646 = vmul.f32 %v528, %v641
    %v647 = vmul.f32 %v532, %v641
    %v648 = vmul.f32 %v536, %v641
    %v649 = vmul.f32 %v540, %v641
    %v650 = vmul.f32 %v544, %v641
    %v651 = vmul.f32 %v548, %v641
    %v652 = vmul.f32 %v552, %v641
    %v653 = vmul.f32 %v556, %v641
    %v654 = vmul.f32 %v560, %v641
    %v655 = vmul.f32 %v564, %v641
    %v656 = vmul.f32 %v568, %v641
    %v657 = vmul.f32 %v572, %v641
    %v658 = vmul.f32 %v576, %v641
    %v659 = vmul.f32 %v580, %v641
    %v660 = vmul.f32 %v584, %v641
    %v661 = vmul.f32 %v588, %v641
    %v662 = vmul.f32 %v592, %v641
    %v663 = vmul.f32 %v596, %v641
    %v664 = vmul.f32 %v600, %v641
    %v665 = vmul.f32 %v604, %v641
    %v666 = vmul.f32 %v608, %v641
    %v667 = vmul.f32 %v612, %v641
    %v668 = vmul.f32 %v616, %v641
    %v669 = vmul.f32 %v620, %v641
    %v670 = vmul.f32 %v624, %v641
    %v671 = vmul.f32 %v628, %v641
    %v672 = vmul.f32 %v632, %v641
    %v673 = vmul.f32 %v636, %v641
    %v674 = vadd.f32 %v478, %v642
    %v675 = vadd.f32 %v479, %v643
    %v676 = vadd.f32 %v480, %v644
    %v677 = vadd.f32 %v481, %v645
    %v678 = vadd.f32 %v482, %v646
    %v679 = vadd.f32 %v483, %v647
    %v680 = vadd.f32 %v484, %v648
    %v681 = vadd.f32 %v485, %v649
    %v682 = vadd.f32 %v486, %v650
    %v683 = vadd.f32 %v487, %v651
    %v684 = vadd.f32 %v488, %v652
    %v685 = vadd.f32 %v489, %v653
    %v686 = vadd.f32 %v490, %v654
    %v687 = vadd.f32 %v491, %v655
    %v688 = vadd.f32 %v492, %v656
    %v689 = vadd.f32 %v493, %v657
    %v690 = vadd.f32 %v494, %v658
    %v691 = vadd.f32 %v495, %v659
    %v692 = vadd.f32 %v496, %v660
    %v693 = vadd.f32 %v497, %v661
    %v694 = vadd.f32 %v498, %v662
    %v695 = vadd.f32 %v499, %v663
    %v696 = vadd.f32 %v500, %v664
    %v697 = vadd.f32 %v501, %v665
    %v698 = vadd.f32 %v502, %v666
    %v699 = vadd.f32 %v503, %v667
    %v700 = vadd.f32 %v504, %v668
    %v701 = vadd.f32 %v505, %v669
    %v702 = vadd.f32 %v506, %v670
    %v703 = vadd.f32 %v507, %v671
    %v704 = vadd.f32 %v508, %v672
    %v705 = vadd.f32 %v509, %v673
    %v707 = vlaneseq
    %v708 = vshrl.u32 %v707, 7
    %v709 = vsub.s32 0, %v708
    %v710 = vrot.slane %v49, %v709
    %v712 = vadd.f32 %v674, %v710
    %v713 = vadd.f32 %v675, %v710
    %v714 = vadd.f32 %v676, %v710
    %v715 = vadd.f32 %v677, %v710
    %v716 = vadd.f32 %v678, %v710
    %v717 = vadd.f32 %v679, %v710
    %v718 = vadd.f32 %v680, %v710
    %v719 = vadd.f32 %v681, %v710
    %v720 = vadd.f32 %v682, %v710
    %v721 = vadd.f32 %v683, %v710
    %v722 = vadd.f32 %v684, %v710
    %v723 = vadd.f32 %v685, %v710
    %v724 = vadd.f32 %v686, %v710
    %v725 = vadd.f32 %v687, %v710
    %v726 = vadd.f32 %v688, %v710
    %v727 = vadd.f32 %v689, %v710
    %v728 = vadd.f32 %v690, %v710
    %v729 = vadd.f32 %v691, %v710
    %v730 = vadd.f32 %v692, %v710
    %v731 = vadd.f32 %v693, %v710
    %v732 = vadd.f32 %v694, %v710
    %v733 = vadd.f32 %v695, %v710
    %v734 = vadd.f32 %v696, %v710
    %v735 = vadd.f32 %v697, %v710
    %v736 = vadd.f32 %v698, %v710
    %v737 = vadd.f32 %v699, %v710
    %v738 = vadd.f32 %v700, %v710
    %v739 = vadd.f32 %v701, %v710
    %v740 = vadd.f32 %v702, %v710
    %v741 = vadd.f32 %v703, %v710
    %v742 = vadd.f32 %v704, %v710
    %v743 = vadd.f32 %v705, %v710
    %v744 = vmax.f32 %v712, 0.0
    %v745 = vmax.f32 %v713, 0.0
    %v746 = vmax.f32 %v714, 0.0
    %v747 = vmax.f32 %v715, 0.0
    %v748 = vmax.f32 %v716, 0.0
    %v749 = vmax.f32 %v717, 0.0
    %v750 = vmax.f32 %v718, 0.0
    %v751 = vmax.f32 %v719, 0.0
    %v752 = vmax.f32 %v720, 0.0
    %v753 = vmax.f32 %v721, 0.0
    %v754 = vmax.f32 %v722, 0.0
    %v755 = vmax.f32 %v723, 0.0
    %v756 = vmax.f32 %v724, 0.0
    %v757 = vmax.f32 %v725, 0.0
    %v758 = vmax.f32 %v726, 0.0
    %v759 = vmax.f32 %v727, 0.0
    %v760 = vmax.f32 %v728, 0.0
    %v761 = vmax.f32 %v729, 0.0
    %v762 = vmax.f32 %v730, 0.0
    %v763 = vmax.f32 %v731, 0.0
    %v764 = vmax.f32 %v732, 0.0
    %v765 = vmax.f32 %v733, 0.0
    %v766 = vmax.f32 %v734, 0.0
    %v767 = vmax.f32 %v735, 0.0
    %v768 = vmax.f32 %v736, 0.0
    %v769 = vmax.f32 %v737, 0.0
    %v770 = vmax.f32 %v738, 0.0
    %v771 = vmax.f32 %v739, 0.0
    %v772 = vmax.f32 %v740, 0.0
    %v773 = vmax.f32 %v741, 0.0
    %v774 = vmax.f32 %v742, 0.0
    %v775 = vmax.f32 %v743, 0.0
    %776 = vmatprep.subr.mxu0 0.0
    %777 = vmatpush1.msra.mxu0 %v744
    %778 = vmatprep.subr.mxu0 0.0
    %779 = vmatpush1.msra.mxu0 %v745
    %780 = vmatprep.subr.mxu0 0.0
    %781 = vmatpush1.msra.mxu0 %v746
    %782 = vmatprep.subr.mxu0 0.0
    %783 = vmatpush1.msra.mxu0 %v747
    %784 = vmatprep.subr.mxu0 0.0
    %785 = vmatpush1.msra.mxu0 %v748
    %786 = vmatprep.subr.mxu0 0.0
    %787 = vmatpush1.msra.mxu0 %v749
    %788 = vmatprep.subr.mxu0 0.0
    %789 = vmatpush1.msra.mxu0 %v750
    %790 = vmatprep.subr.mxu0 0.0
    %791 = vmatpush1.msra.mxu0 %v751
    %792 = vmatprep.subr.mxu0 0.0
    %793 = vmatpush1.msra.mxu0 %v752
    %794 = vmatprep.subr.mxu0 0.0
    %795 = vmatpush1.msra.mxu0 %v753
    %796 = vmatprep.subr.mxu0 0.0
    %797 = vmatpush1.msra.mxu0 %v754
    %798 = vmatprep.subr.mxu0 0.0
    %799 = vmatpush1.msra.mxu0 %v755
    %800 = vmatprep.subr.mxu0 0.0
    %801 = vmatpush1.msra.mxu0 %v756
    %802 = vmatprep.subr.mxu0 0.0
    %803 = vmatpush1.msra.mxu0 %v757
    %804 = vmatprep.subr.mxu0 0.0
    %805 = vmatpush1.msra.mxu0 %v758
    %806 = vmatprep.subr.mxu0 0.0
    %807 = vmatpush1.msra.mxu0 %v759
    %808 = vmatprep.subr.mxu0 0.0
    %809 = vmatpush1.msra.mxu0 %v760
    %810 = vmatprep.subr.mxu0 0.0
    %811 = vmatpush1.msra.mxu0 %v761
    %812 = vmatprep.subr.mxu0 0.0
    %813 = vmatpush1.msra.mxu0 %v762
    %814 = vmatprep.subr.mxu0 0.0
    %815 = vmatpush1.msra.mxu0 %v763
    %816 = vmatprep.subr.mxu0 0.0
    %817 = vmatpush1.msra.mxu0 %v764
    %818 = vmatprep.subr.mxu0 0.0
    %819 = vmatpush1.msra.mxu0 %v765
    %820 = vmatprep.subr.mxu0 0.0
    %821 = vmatpush1.msra.mxu0 %v766
    %822 = vmatprep.subr.mxu0 0.0
    %823 = vmatpush1.msra.mxu0 %v767
    %824 = vmatprep.subr.mxu0 0.0
    %825 = vmatpush1.msra.mxu0 %v768
    %826 = vmatprep.subr.mxu0 0.0
    %827 = vmatpush1.msra.mxu0 %v769
    %828 = vmatprep.subr.mxu0 0.0
    %829 = vmatpush1.msra.mxu0 %v770
    %830 = vmatprep.subr.mxu0 0.0
    %831 = vmatpush1.msra.mxu0 %v771
    %832 = vmatprep.subr.mxu0 0.0
    %833 = vmatpush1.msra.mxu0 %v772
    %834 = vmatprep.subr.mxu0 0.0
    %835 = vmatpush1.msra.mxu0 %v773
    %836 = vmatprep.subr.mxu0 0.0
    %837 = vmatpush1.msra.mxu0 %v774
    %838 = vmatprep.subr.mxu0 0.0
    %839 = vmatpush1.msra.mxu0 %v775
    %840 = vmatprep.mubr.f32.mxu0 0.00390625
    %841 = vmatmul.mubr.f32.gmra.mrb[0].mxu0 0.00390625
    %v842 = vpop.f32.mrb[0].mxu0
    %v843 = vadd.f32 0.0, %v842
    %v844 = vpop.f32.mrb[0].mxu0
    %845 = vdwg.mxu0
    %846 = vmatprep.subr.mxu0 0.0
    %847 = vmatpush1.xpose.msra.mxu0 %v744
    %848 = vmatprep.subr.mxu0 0.0
    %849 = vmatpush1.xpose.msra.mxu0 %v745
    %850 = vmatprep.subr.mxu0 0.0
    %851 = vmatpush1.xpose.msra.mxu0 %v746
    %852 = vmatprep.subr.mxu0 0.0
    %853 = vmatpush1.xpose.msra.mxu0 %v747
    %854 = vmatprep.subr.mxu0 0.0
    %855 = vmatpush1.xpose.msra.mxu0 %v748
    %856 = vmatprep.subr.mxu0 0.0
    %857 = vmatpush1.xpose.msra.mxu0 %v749
    %858 = vmatprep.subr.mxu0 0.0
    %859 = vmatpush1.xpose.msra.mxu0 %v750
    %860 = vmatprep.subr.mxu0 0.0
    %861 = vmatpush1.xpose.msra.mxu0 %v751
    %862 = vmatprep.subr.mxu0 0.0
    %863 = vmatpush1.xpose.msra.mxu0 %v752
    %864 = vmatprep.subr.mxu0 0.0
    %865 = vmatpush1.xpose.msra.mxu0 %v753
    %866 = vmatprep.subr.mxu0 0.0
    %867 = vmatpush1.xpose.msra.mxu0 %v754
    %868 = vmatprep.subr.mxu0 0.0
    %869 = vmatpush1.xpose.msra.mxu0 %v755
    %870 = vmatprep.subr.mxu0 0.0
    %871 = vmatpush1.xpose.msra.mxu0 %v756
    %872 = vmatprep.subr.mxu0 0.0
    %873 = vmatpush1.xpose.msra.mxu0 %v757
    %874 = vmatprep.subr.mxu0 0.0
    %875 = vmatpush1.xpose.msra.mxu0 %v758
    %876 = vmatprep.subr.mxu0 0.0
    %877 = vmatpush1.xpose.msra.mxu0 %v759
    %878 = vmatprep.subr.mxu0 0.0
    %879 = vmatpush1.xpose.msra.mxu0 %v760
    %880 = vmatprep.subr.mxu0 0.0
    %881 = vmatpush1.xpose.msra.mxu0 %v761
    %882 = vmatprep.subr.mxu0 0.0
    %883 = vmatpush1.xpose.msra.mxu0 %v762
    %884 = vmatprep.subr.mxu0 0.0
    %885 = vmatpush1.xpose.msra.mxu0 %v763
    %886 = vmatprep.subr.mxu0 0.0
    %887 = vmatpush1.xpose.msra.mxu0 %v764
    %888 = vmatprep.subr.mxu0 0.0
    %889 = vmatpush1.xpose.msra.mxu0 %v765
    %890 = vmatprep.subr.mxu0 0.0
    %891 = vmatpush1.xpose.msra.mxu0 %v766
    %892 = vmatprep.subr.mxu0 0.0
    %893 = vmatpush1.xpose.msra.mxu0 %v767
    %894 = vmatprep.subr.mxu0 0.0
    %895 = vmatpush1.xpose.msra.mxu0 %v768
    %896 = vmatprep.subr.mxu0 0.0
    %897 = vmatpush1.xpose.msra.mxu0 %v769
    %898 = vmatprep.subr.mxu0 0.0
    %899 = vmatpush1.xpose.msra.mxu0 %v770
    %900 = vmatprep.subr.mxu0 0.0
    %901 = vmatpush1.xpose.msra.mxu0 %v771
    %902 = vmatprep.subr.mxu0 0.0
    %903 = vmatpush1.xpose.msra.mxu0 %v772
    %904 = vmatprep.subr.mxu0 0.0
    %905 = vmatpush1.xpose.msra.mxu0 %v773
    %906 = vmatprep.subr.mxu0 0.0
    %907 = vmatpush1.xpose.msra.mxu0 %v774
    %908 = vmatprep.subr.mxu0 0.0
    %909 = vmatpush1.xpose.msra.mxu0 %v775
    %910 = vmatprep.mubr.f32.mxu0 0.0
    %911 = vmatmul.mubr.f32.gmra.mrb[0].mxu0 %v50
    %v912 = vpop.f32.mrb[0].mxu0
    %v913 = vadd.f32 0.0, %v912
    %v914 = vpop.f32.mrb[0].mxu0
    %v915 = vadd.f32 0.0, %v914
    %916 = vdwg.mxu0
    %vm917 = vcmask 1042432
    %v918 = vsel %vm917, %v913, -inf
    %v919 = vsel %vm917, %v915, -inf
    %v920 = vmax.f32 %v918, %v919
    %921 = vmax.xlane.f32.xlu0 %v920
    %v922 = vpop.xlane.xlu0 %921
    %v923 = vsub.f32 %v913, %v922
    %v924 = vsub.f32 %v915, %v922
    %v925 = vmul.f32 %v923, 1.442695
    %v926 = vpow.pop %v925
    %v927 = vmul.f32 %v924, 1.442695
    %v928 = vpow.pop %v927
    %v929 = vsel %vm917, %v926, 0.0
    %v930 = vsel %vm917, %v928, 0.0
    %v931 = vadd.f32 %v929, %v930
    %932 = vadd.xlane.f32.xlu0 %v931
    %v933 = vpop.xlane.xlu0 %932
    %v934 = vrcp.pop %v933
    %v935 = vmul.f32 %v926, %v934
    %v936 = vmul.f32 %v928, %v934
    %937 = vmatprep.subr.mxu0 0.0
    %938 = vmatpush1.msra.mxu0 %v744
    %939 = vmatprep.subr.mxu0 0.0
    %940 = vmatpush1.msra.mxu0 %v745
    %941 = vmatprep.subr.mxu0 0.0
    %942 = vmatpush1.msra.mxu0 %v746
    %943 = vmatprep.subr.mxu0 0.0
    %944 = vmatpush1.msra.mxu0 %v747
    %945 = vmatprep.subr.mxu0 0.0
    %946 = vmatpush1.msra.mxu0 %v748
    %947 = vmatprep.subr.mxu0 0.0
    %948 = vmatpush1.msra.mxu0 %v749
    %949 = vmatprep.subr.mxu0 0.0
    %950 = vmatpush1.msra.mxu0 %v750
    %951 = vmatprep.subr.mxu0 0.0
    %952 = vmatpush1.msra.mxu0 %v751
    %953 = vmatprep.subr.mxu0 0.0
    %954 = vmatpush1.msra.mxu0 %v752
    %955 = vmatprep.subr.mxu0 0.0
    %956 = vmatpush1.msra.mxu0 %v753
    %957 = vmatprep.subr.mxu0 0.0
    %958 = vmatpush1.msra.mxu0 %v754
    %959 = vmatprep.subr.mxu0 0.0
    %960 = vmatpush1.msra.mxu0 %v755
    %961 = vmatprep.subr.mxu0 0.0
    %962 = vmatpush1.msra.mxu0 %v756
    %963 = vmatprep.subr.mxu0 0.0
    %964 = vmatpush1.msra.mxu0 %v757
    %965 = vmatprep.subr.mxu0 0.0
    %966 = vmatpush1.msra.mxu0 %v758
    %967 = vmatprep.subr.mxu0 0.0
    %968 = vmatpush1.msra.mxu0 %v759
    %969 = vmatprep.subr.mxu0 0.0
    %970 = vmatpush1.msra.mxu0 %v760
    %971 = vmatprep.subr.mxu0 0.0
    %972 = vmatpush1.msra.mxu0 %v761
    %973 = vmatprep.subr.mxu0 0.0
    %974 = vmatpush1.msra.mxu0 %v762
    %975 = vmatprep.subr.mxu0 0.0
    %976 = vmatpush1.msra.mxu0 %v763
    %977 = vmatprep.subr.mxu0 0.0
    %978 = vmatpush1.msra.mxu0 %v764
    %979 = vmatprep.subr.mxu0 0.0
    %980 = vmatpush1.msra.mxu0 %v765
    %981 = vmatprep.subr.mxu0 0.0
    %982 = vmatpush1.msra.mxu0 %v766
    %983 = vmatprep.subr.mxu0 0.0
    %984 = vmatpush1.msra.mxu0 %v767
    %985 = vmatprep.subr.mxu0 0.0
    %986 = vmatpush1.msra.mxu0 %v768
    %987 = vmatprep.subr.mxu0 0.0
    %988 = vmatpush1.msra.mxu0 %v769
    %989 = vmatprep.subr.mxu0 0.0
    %990 = vmatpush1.msra.mxu0 %v770
    %991 = vmatprep.subr.mxu0 0.0
    %992 = vmatpush1.msra.mxu0 %v771
    %993 = vmatprep.subr.mxu0 0.0
    %994 = vmatpush1.msra.mxu0 %v772
    %995 = vmatprep.subr.mxu0 0.0
    %996 = vmatpush1.msra.mxu0 %v773
    %997 = vmatprep.subr.mxu0 0.0
    %998 = vmatpush1.msra.mxu0 %v774
    %999 = vmatprep.subr.mxu0 0.0
    %1000 = vmatpush1.msra.mxu0 %v775
    %1001 = vmatprep.mubr.f32.mxu0 %v936
    %1002 = vmatmul.mubr.f32.gmra.mrb[0].mxu0 %v935
    %v1003 = vpop.f32.mrb[0].mxu0
    %v1004 = vadd.f32 0.0, %v1003
    %v1005 = vpop.f32.mrb[0].mxu0
    %1006 = vdwg.mxu0
    %v1008 = vlaneseq
    %v1009 = vshrl.u32 %v1008, 7
    %v1010 = vsub.s32 0, %v1009
    %v1011 = vrot.slane %v68, %v1010
    %1013 = vmatprep.subr.mxu0 0.0
    %1014 = vmatpush1.msra.mxu0 %v52
    %1015 = vmatprep.subr.mxu0 0.0
    %1016 = vmatpush1.msra.mxu0 %v53
    %1017 = vmatprep.subr.mxu0 0.0
    %1018 = vmatpush1.msra.mxu0 %v54
    %1019 = vmatprep.subr.mxu0 0.0
    %1020 = vmatpush1.msra.mxu0 %v55
    %1021 = vmatprep.subr.mxu0 0.0
    %1022 = vmatpush1.msra.mxu0 %v56
    %1023 = vmatprep.subr.mxu0 0.0
    %1024 = vmatpush1.msra.mxu0 %v57
    %1025 = vmatprep.subr.mxu0 0.0
    %1026 = vmatpush1.msra.mxu0 %v58
    %1027 = vmatprep.subr.mxu0 0.0
    %1028 = vmatpush1.msra.mxu0 %v59
    %1029 = vmatprep.subr.mxu0 0.0
    %1030 = vmatpush1.msra.mxu0 %v60
    %1031 = vmatprep.subr.mxu0 0.0
    %1032 = vmatpush1.msra.mxu0 %v61
    %1033 = vmatprep.subr.mxu0 0.0
    %1034 = vmatpush1.msra.mxu0 %v62
    %1035 = vmatprep.subr.mxu0 0.0
    %1036 = vmatpush1.msra.mxu0 %v63
    %1037 = vmatprep.subr.mxu0 0.0
    %1038 = vmatpush1.msra.mxu0 %v64
    %1039 = vmatprep.subr.mxu0 0.0
    %1040 = vmatpush1.msra.mxu0 %v65
    %1041 = vmatprep.subr.mxu0 0.0
    %1042 = vmatpush1.msra.mxu0 %v66
    %1043 = vmatprep.subr.mxu0 0.0
    %1044 = vmatpush1.msra.mxu0 %v67
    %1045 = vmatprep.subr.mxu0 0.0
    %1046 = vmatpush1.msra.mxu0 0.0
    %1047 = vmatprep.subr.mxu0 0.0
    %1048 = vmatpush1.msra.mxu0 0.0
    %1049 = vmatprep.subr.mxu0 0.0
    %1050 = vmatpush1.msra.mxu0 0.0
    %1051 = vmatprep.subr.mxu0 0.0
    %1052 = vmatpush1.msra.mxu0 0.0
    %1053 = vmatprep.subr.mxu0 0.0
    %1054 = vmatpush1.msra.mxu0 0.0
    %1055 = vmatprep.subr.mxu0 0.0
    %1056 = vmatpush1.msra.mxu0 0.0
    %1057 = vmatprep.subr.mxu0 0.0
    %1058 = vmatpush1.msra.mxu0 0.0
    %1059 = vmatprep.subr.mxu0 0.0
    %1060 = vmatpush1.msra.mxu0 0.0
    %1061 = vmatprep.subr.mxu0 0.0
    %1062 = vmatpush1.msra.mxu0 0.0
    %1063 = vmatprep.subr.mxu0 0.0
    %1064 = vmatpush1.msra.mxu0 0.0
    %1065 = vmatprep.subr.mxu0 0.0
    %1066 = vmatpush1.msra.mxu0 0.0
    %1067 = vmatprep.subr.mxu0 0.0
    %1068 = vmatpush1.msra.mxu0 0.0
    %1069 = vmatprep.subr.mxu0 0.0
    %1070 = vmatpush1.msra.mxu0 0.0
    %1071 = vmatprep.subr.mxu0 0.0
    %1072 = vmatpush1.msra.mxu0 0.0
    %1073 = vmatprep.subr.mxu0 0.0
    %1074 = vmatpush1.msra.mxu0 0.0
    %1075 = vmatprep.subr.mxu0 0.0
    %1076 = vmatpush1.msra.mxu0 0.0
    %1077 = vmatprep.mubr.f32.mxu0 0.0
    %1078 = vmatmul.mubr.f32.gmra.mrb[0].mxu0 %v1004
    %v1079 = vpop.f32.mrb[0].mxu0
    %v1080 = vadd.f32 %v1011, %v1079
    %v1081 = vpop.f32.mrb[0].mxu0
    %1082 = vdwg.mxu0
    %1083 = vmatprep.subr.mxu0 0.0
    %1084 = vmatpush1.xpose.msra.mxu0 %v1080
    %1085 = vmatprep.subr.mxu0 0.0
    %1086 = vmatpush1.xpose.msra.mxu0 0.0
    %1087 = vmatprep.subr.mxu0 0.0
    %1088 = vmatpush1.xpose.msra.mxu0 0.0
    %1089 = vmatprep.subr.mxu0 0.0
    %1090 = vmatpush1.xpose.msra.mxu0 0.0
    %1091 = vmatprep.subr.mxu0 0.0
    %1092 = vmatpush1.xpose.msra.mxu0 0.0
    %1093 = vmatprep.subr.mxu0 0.0
    %1094 = vmatpush1.xpose.msra.mxu0 0.0
    %1095 = vmatprep.subr.mxu0 0.0
    %1096 = vmatpush1.xpose.msra.mxu0 0.0
    %1097 = vmatprep.subr.mxu0 0.0
    %1098 = vmatpush1.xpose.msra.mxu0 0.0
    %1099 = vmatprep.subr.mxu0 0.0
    %1100 = vmatpush1.xpose.msra.mxu0 0.0
    %1101 = vmatprep.subr.mxu0 0.0
    %1102 = vmatpush1.xpose.msra.mxu0 0.0
    %1103 = vmatprep.subr.mxu0 0.0
    %1104 = vmatpush1.xpose.msra.mxu0 0.0
    %1105 = vmatprep.subr.mxu0 0.0
    %1106 = vmatpush1.xpose.msra.mxu0 0.0
    %1107 = vmatprep.subr.mxu0 0.0
    %1108 = vmatpush1.xpose.msra.mxu0 0.0
    %1109 = vmatprep.subr.mxu0 0.0
    %1110 = vmatpush1.xpose.msra.mxu0 0.0
    %1111 = vmatprep.subr.mxu0 0.0
    %1112 = vmatpush1.xpose.msra.mxu0 0.0
    %1113 = vmatprep.subr.mxu0 0.0
    %1114 = vmatpush1.xpose.msra.mxu0 0.0
    %1115 = vmatprep.subr.mxu0 0.0
    %1116 = vmatpush1.xpose.msra.mxu0 0.0
    %1117 = vmatprep.subr.mxu0 0.0
    %1118 = vmatpush1.xpose.msra.mxu0 0.0
    %1119 = vmatprep.subr.mxu0 0.0
    %1120 = vmatpush1.xpose.msra.mxu0 0.0
    %1121 = vmatprep.subr.mxu0 0.0
    %1122 = vmatpush1.xpose.msra.mxu0 0.0
    %1123 = vmatprep.subr.mxu0 0.0
    %1124 = vmatpush1.xpose.msra.mxu0 0.0
    %1125 = vmatprep.subr.mxu0 0.0
    %1126 = vmatpush1.xpose.msra.mxu0 0.0
    %1127 = vmatprep.subr.mxu0 0.0
    %1128 = vmatpush1.xpose.msra.mxu0 0.0
    %1129 = vmatprep.subr.mxu0 0.0
    %1130 = vmatpush1.xpose.msra.mxu0 0.0
    %1131 = vmatprep.subr.mxu0 0.0
    %1132 = vmatpush1.xpose.msra.mxu0 0.0
    %1133 = vmatprep.subr.mxu0 0.0
    %1134 = vmatpush1.xpose.msra.mxu0 0.0
    %1135 = vmatprep.subr.mxu0 0.0
    %1136 = vmatpush1.xpose.msra.mxu0 0.0
    %1137 = vmatprep.subr.mxu0 0.0
    %1138 = vmatpush1.xpose.msra.mxu0 0.0
    %1139 = vmatprep.subr.mxu0 0.0
    %1140 = vmatpush1.xpose.msra.mxu0 0.0
    %1141 = vmatprep.subr.mxu0 0.0
    %1142 = vmatpush1.xpose.msra.mxu0 0.0
    %1143 = vmatprep.subr.mxu0 0.0
    %1144 = vmatpush1.xpose.msra.mxu0 0.0
    %1145 = vmatprep.subr.mxu0 0.0
    %1146 = vmatpush1.xpose.msra.mxu0 0.0
    %1147 = vmatprep.mubr.f32.mxu0 0.0
    %1148 = vmatmul.mubr.f32.gmra.mrb[0].mxu0 %v51
    %v1149 = vpop.f32.mrb[0].mxu0
    %v1150 = vadd.f32 0.0, %v1149
    %v1151 = vpop.f32.mrb[0].mxu0
    %1152 = vdwg.mxu0
    %vm1153 = vcmask 18432
    %v1154 = vsel %vm1153, %v1150, -inf
    %1155 = vmax.xlane.f32.xlu0 %v1154
    %v1156 = vpop.xlane.xlu0 %1155
    %v1157 = vsub.f32 %v1150, %v1156
    %v1158 = vmul.f32 %v1157, 1.442695
    %v1159 = vpow.pop %v1158
    %v1160 = vsel %vm1153, %v1159, 0.0
    %1161 = vadd.xlane.f32.xlu0 %v1160
    %v1162 = vpop.xlane.xlu0 %1161
    %v1163 = vrcp.pop %v1162
    %v1164 = vmul.f32 %v1159, %v1163
    %vm1165 = vcmask 23552
    %v1167 = vsel %vm1165, %v1164, 0
    %v1170 = vsel %vm917, %v1080, 0
    %1172 = vmatprep.subr.mxu0 0.0
    %1173 = vmatpush1.msra.mxu0 %v1170
    %1174 = vmatprep.subr.mxu0 0.0
    %1175 = vmatpush1.msra.mxu0 0.0
    %1176 = vmatprep.subr.mxu0 0.0
    %1177 = vmatpush1.msra.mxu0 0.0
    %1178 = vmatprep.subr.mxu0 0.0
    %1179 = vmatpush1.msra.mxu0 0.0
    %1180 = vmatprep.subr.mxu0 0.0
    %1181 = vmatpush1.msra.mxu0 0.0
    %1182 = vmatprep.subr.mxu0 0.0
    %1183 = vmatpush1.msra.mxu0 0.0
    %1184 = vmatprep.subr.mxu0 0.0
    %1185 = vmatpush1.msra.mxu0 0.0
    %1186 = vmatprep.subr.mxu0 0.0
    %1187 = vmatpush1.msra.mxu0 0.0
    %1188 = vmatprep.subr.mxu0 0.0
    %1189 = vmatpush1.msra.mxu0 0.0
    %1190 = vmatprep.subr.mxu0 0.0
    %1191 = vmatpush1.msra.mxu0 0.0
    %1192 = vmatprep.subr.mxu0 0.0
    %1193 = vmatpush1.msra.mxu0 0.0
    %1194 = vmatprep.subr.mxu0 0.0
    %1195 = vmatpush1.msra.mxu0 0.0
    %1196 = vmatprep.subr.mxu0 0.0
    %1197 = vmatpush1.msra.mxu0 0.0
    %1198 = vmatprep.subr.mxu0 0.0
    %1199 = vmatpush1.msra.mxu0 0.0
    %1200 = vmatprep.subr.mxu0 0.0
    %1201 = vmatpush1.msra.mxu0 0.0
    %1202 = vmatprep.subr.mxu0 0.0
    %1203 = vmatpush1.msra.mxu0 0.0
    %1204 = vmatprep.subr.mxu0 0.0
    %1205 = vmatpush1.msra.mxu0 0.0
    %1206 = vmatprep.subr.mxu0 0.0
    %1207 = vmatpush1.msra.mxu0 0.0
    %1208 = vmatprep.subr.mxu0 0.0
    %1209 = vmatpush1.msra.mxu0 0.0
    %1210 = vmatprep.subr.mxu0 0.0
    %1211 = vmatpush1.msra.mxu0 0.0
    %1212 = vmatprep.subr.mxu0 0.0
    %1213 = vmatpush1.msra.mxu0 0.0
    %1214 = vmatprep.subr.mxu0 0.0
    %1215 = vmatpush1.msra.mxu0 0.0
    %1216 = vmatprep.subr.mxu0 0.0
    %1217 = vmatpush1.msra.mxu0 0.0
    %1218 = vmatprep.subr.mxu0 0.0
    %1219 = vmatpush1.msra.mxu0 0.0
    %1220 = vmatprep.subr.mxu0 0.0
    %1221 = vmatpush1.msra.mxu0 0.0
    %1222 = vmatprep.subr.mxu0 0.0
    %1223 = vmatpush1.msra.mxu0 0.0
    %1224 = vmatprep.subr.mxu0 0.0
    %1225 = vmatpush1.msra.mxu0 0.0
    %1226 = vmatprep.subr.mxu0 0.0
    %1227 = vmatpush1.msra.mxu0 0.0
    %1228 = vmatprep.subr.mxu0 0.0
    %1229 = vmatpush1.msra.mxu0 0.0
    %1230 = vmatprep.subr.mxu0 0.0
    %1231 = vmatpush1.msra.mxu0 0.0
    %1232 = vmatprep.subr.mxu0 0.0
    %1233 = vmatpush1.msra.mxu0 0.0
    %1234 = vmatprep.subr.mxu0 0.0
    %1235 = vmatpush1.msra.mxu0 0.0
    %1236 = vmatprep.mubr.f32.mxu0 0.0
    %1237 = vmatmul.mubr.f32.gmra.mrb[0].mxu0 %v1167
    %v1238 = vpop.f32.mrb[0].mxu0
    %v1239 = vadd.f32 0.0, %v1238
    %v1240 = vpop.f32.mrb[0].mxu0
    %1241 = vdwg.mxu0
    %v1243 = vlaneseq
    %v1244 = vshrl.u32 %v1243, 7
    %v1245 = vsub.s32 0, %v1244
    %v1246 = vrot.slane %v85, %v1245
    %1248 = vmatprep.subr.mxu0 0.0
    %1249 = vmatpush1.msra.mxu0 %v69
    %1250 = vmatprep.subr.mxu0 0.0
    %1251 = vmatpush1.msra.mxu0 %v70
    %1252 = vmatprep.subr.mxu0 0.0
    %1253 = vmatpush1.msra.mxu0 %v71
    %1254 = vmatprep.subr.mxu0 0.0
    %1255 = vmatpush1.msra.mxu0 %v72
    %1256 = vmatprep.subr.mxu0 0.0
    %1257 = vmatpush1.msra.mxu0 %v73
    %1258 = vmatprep.subr.mxu0 0.0
    %1259 = vmatpush1.msra.mxu0 %v74
    %1260 = vmatprep.subr.mxu0 0.0
    %1261 = vmatpush1.msra.mxu0 %v75
    %1262 = vmatprep.subr.mxu0 0.0
    %1263 = vmatpush1.msra.mxu0 %v76
    %1264 = vmatprep.subr.mxu0 0.0
    %1265 = vmatpush1.msra.mxu0 %v77
    %1266 = vmatprep.subr.mxu0 0.0
    %1267 = vmatpush1.msra.mxu0 %v78
    %1268 = vmatprep.subr.mxu0 0.0
    %1269 = vmatpush1.msra.mxu0 %v79
    %1270 = vmatprep.subr.mxu0 0.0
    %1271 = vmatpush1.msra.mxu0 %v80
    %1272 = vmatprep.subr.mxu0 0.0
    %1273 = vmatpush1.msra.mxu0 %v81
    %1274 = vmatprep.subr.mxu0 0.0
    %1275 = vmatpush1.msra.mxu0 %v82
    %1276 = vmatprep.subr.mxu0 0.0
    %1277 = vmatpush1.msra.mxu0 %v83
    %1278 = vmatprep.subr.mxu0 0.0
    %1279 = vmatpush1.msra.mxu0 %v84
    %1280 = vmatprep.subr.mxu0 0.0
    %1281 = vmatpush1.msra.mxu0 0.0
    %1282 = vmatprep.subr.mxu0 0.0
    %1283 = vmatpush1.msra.mxu0 0.0
    %1284 = vmatprep.subr.mxu0 0.0
    %1285 = vmatpush1.msra.mxu0 0.0
    %1286 = vmatprep.subr.mxu0 0.0
    %1287 = vmatpush1.msra.mxu0 0.0
    %1288 = vmatprep.subr.mxu0 0.0
    %1289 = vmatpush1.msra.mxu0 0.0
    %1290 = vmatprep.subr.mxu0 0.0
    %1291 = vmatpush1.msra.mxu0 0.0
    %1292 = vmatprep.subr.mxu0 0.0
    %1293 = vmatpush1.msra.mxu0 0.0
    %1294 = vmatprep.subr.mxu0 0.0
    %1295 = vmatpush1.msra.mxu0 0.0
    %1296 = vmatprep.subr.mxu0 0.0
    %1297 = vmatpush1.msra.mxu0 0.0
    %1298 = vmatprep.subr.mxu0 0.0
    %1299 = vmatpush1.msra.mxu0 0.0
    %1300 = vmatprep.subr.mxu0 0.0
    %1301 = vmatpush1.msra.mxu0 0.0
    %1302 = vmatprep.subr.mxu0 0.0
    %1303 = vmatpush1.msra.mxu0 0.0
    %1304 = vmatprep.subr.mxu0 0.0
    %1305 = vmatpush1.msra.mxu0 0.0
    %1306 = vmatprep.subr.mxu0 0.0
    %1307 = vmatpush1.msra.mxu0 0.0
    %1308 = vmatprep.subr.mxu0 0.0
    %1309 = vmatpush1.msra.mxu0 0.0
    %1310 = vmatprep.subr.mxu0 0.0
    %1311 = vmatpush1.msra.mxu0 0.0
    %1312 = vmatprep.mubr.f32.mxu0 0.0
    %1313 = vmatmul.mubr.f32.gmra.mrb[0].mxu0 %v1239
    %v1314 = vpop.f32.mrb[0].mxu0
    %v1315 = vadd.f32 %v1246, %v1314
    %v1316 = vpop.f32.mrb[0].mxu0
    %1317 = vdwg.mxu0
    %v1318 = vlaneseq
    %v1319 = vshrl.u32 %v1318, 7
    %v1320 = vsub.s32 0, %v1319
    %v1321 = vrot.slane %v843, %v1320
    %v1322 = vadd.f32 %v1315, %v1321
    %s1323 = scalar_lea.vmem %s0, 256
    %v1324 = vld [vmem:[%s1323] sm:$0xff]
    %v1325 = vld [vmem:[%s1323 + $0x8] sm:$0xff]
    %v1326 = vld [vmem:[%s1323 + $0x10] sm:$0xff]
    %v1327 = vld [vmem:[%s1323 + $0x18] sm:$0xff]
    %v1328 = vld [vmem:[%s1323 + $0x20] sm:$0xff]
    %v1329 = vld [vmem:[%s1323 + $0x28] sm:$0xff]
    %v1330 = vld [vmem:[%s1323 + $0x30] sm:$0xff]
    %v1331 = vld [vmem:[%s1323 + $0x38] sm:$0xff]
    %v1332 = vld [vmem:[%s1323 + $0x40] sm:$0xff]
    %v1333 = vld [vmem:[%s1323 + $0x48] sm:$0xff]
    %v1334 = vld [vmem:[%s1323 + $0x50] sm:$0xff]
    %v1335 = vld [vmem:[%s1323 + $0x58] sm:$0xff]
    %v1336 = vld [vmem:[%s1323 + $0x60] sm:$0xff]
    %v1337 = vld [vmem:[%s1323 + $0x68] sm:$0xff]
    %v1338 = vld [vmem:[%s1323 + $0x70] sm:$0xff]
    %v1339 = vld [vmem:[%s1323 + $0x78] sm:$0xff]
    %v1340 = vld [vmem:[%s1323 + $0x80] sm:$0xff]
    %v1341 = vld [vmem:[%s1323 + $0x88] sm:$0xff]
    %v1342 = vld [vmem:[%s1323 + $0x90] sm:$0xff]
    %v1343 = vld [vmem:[%s1323 + $0x98] sm:$0xff]
    %v1344 = vld [vmem:[%s1323 + $0xa0] sm:$0xff]
    %v1345 = vld [vmem:[%s1323 + $0xa8] sm:$0xff]
    %v1346 = vld [vmem:[%s1323 + $0xb0] sm:$0xff]
    %v1347 = vld [vmem:[%s1323 + $0xb8] sm:$0xff]
    %v1348 = vld [vmem:[%s1323 + $0xc0] sm:$0xff]
    %v1349 = vld [vmem:[%s1323 + $0xc8] sm:$0xff]
    %v1350 = vld [vmem:[%s1323 + $0xd0] sm:$0xff]
    %v1351 = vld [vmem:[%s1323 + $0xd8] sm:$0xff]
    %v1352 = vld [vmem:[%s1323 + $0xe0] sm:$0xff]
    %v1353 = vld [vmem:[%s1323 + $0xe8] sm:$0xff]
    %v1354 = vld [vmem:[%s1323 + $0xf0] sm:$0xff]
    %v1355 = vld [vmem:[%s1323 + $0xf8] sm:$0xff]
    %1357 = vset.pattern.permute.xlu0 0
    %1358 = vperm.xlu0 %1357, %v1324
    %v1359 = vpop.permute.xlu0 %1358
    %1362 = vset.pattern.permute.xlu0 0
    %1363 = vperm.xlu0 %1362, %v1325
    %v1364 = vpop.permute.xlu0 %1363
    %1367 = vset.pattern.permute.xlu0 0
    %1368 = vperm.xlu0 %1367, %v1326
    %v1369 = vpop.permute.xlu0 %1368
    %1372 = vset.pattern.permute.xlu0 0
    %1373 = vperm.xlu0 %1372, %v1327
    %v1374 = vpop.permute.xlu0 %1373
    %1377 = vset.pattern.permute.xlu0 0
    %1378 = vperm.xlu0 %1377, %v1328
    %v1379 = vpop.permute.xlu0 %1378
    %1382 = vset.pattern.permute.xlu0 0
    %1383 = vperm.xlu0 %1382, %v1329
    %v1384 = vpop.permute.xlu0 %1383
    %1387 = vset.pattern.permute.xlu0 0
    %1388 = vperm.xlu0 %1387, %v1330
    %v1389 = vpop.permute.xlu0 %1388
    %1392 = vset.pattern.permute.xlu0 0
    %1393 = vperm.xlu0 %1392, %v1331
    %v1394 = vpop.permute.xlu0 %1393
    %1397 = vset.pattern.permute.xlu0 0
    %1398 = vperm.xlu0 %1397, %v1332
    %v1399 = vpop.permute.xlu0 %1398
    %1402 = vset.pattern.permute.xlu0 0
    %1403 = vperm.xlu0 %1402, %v1333
    %v1404 = vpop.permute.xlu0 %1403
    %1407 = vset.pattern.permute.xlu0 0
    %1408 = vperm.xlu0 %1407, %v1334
    %v1409 = vpop.permute.xlu0 %1408
    %1412 = vset.pattern.permute.xlu0 0
    %1413 = vperm.xlu0 %1412, %v1335
    %v1414 = vpop.permute.xlu0 %1413
    %1417 = vset.pattern.permute.xlu0 0
    %1418 = vperm.xlu0 %1417, %v1336
    %v1419 = vpop.permute.xlu0 %1418
    %1422 = vset.pattern.permute.xlu0 0
    %1423 = vperm.xlu0 %1422, %v1337
    %v1424 = vpop.permute.xlu0 %1423
    %1427 = vset.pattern.permute.xlu0 0
    %1428 = vperm.xlu0 %1427, %v1338
    %v1429 = vpop.permute.xlu0 %1428
    %1432 = vset.pattern.permute.xlu0 0
    %1433 = vperm.xlu0 %1432, %v1339
    %v1434 = vpop.permute.xlu0 %1433
    %1437 = vset.pattern.permute.xlu0 0
    %1438 = vperm.xlu0 %1437, %v1340
    %v1439 = vpop.permute.xlu0 %1438
    %1442 = vset.pattern.permute.xlu0 0
    %1443 = vperm.xlu0 %1442, %v1341
    %v1444 = vpop.permute.xlu0 %1443
    %1447 = vset.pattern.permute.xlu0 0
    %1448 = vperm.xlu0 %1447, %v1342
    %v1449 = vpop.permute.xlu0 %1448
    %1452 = vset.pattern.permute.xlu0 0
    %1453 = vperm.xlu0 %1452, %v1343
    %v1454 = vpop.permute.xlu0 %1453
    %1457 = vset.pattern.permute.xlu0 0
    %1458 = vperm.xlu0 %1457, %v1344
    %v1459 = vpop.permute.xlu0 %1458
    %1462 = vset.pattern.permute.xlu0 0
    %1463 = vperm.xlu0 %1462, %v1345
    %v1464 = vpop.permute.xlu0 %1463
    %1467 = vset.pattern.permute.xlu0 0
    %1468 = vperm.xlu0 %1467, %v1346
    %v1469 = vpop.permute.xlu0 %1468
    %1472 = vset.pattern.permute.xlu0 0
    %1473 = vperm.xlu0 %1472, %v1347
    %v1474 = vpop.permute.xlu0 %1473
    %1477 = vset.pattern.permute.xlu0 0
    %1478 = vperm.xlu0 %1477, %v1348
    %v1479 = vpop.permute.xlu0 %1478
    %1482 = vset.pattern.permute.xlu0 0
    %1483 = vperm.xlu0 %1482, %v1349
    %v1484 = vpop.permute.xlu0 %1483
    %1487 = vset.pattern.permute.xlu0 0
    %1488 = vperm.xlu0 %1487, %v1350
    %v1489 = vpop.permute.xlu0 %1488
    %1492 = vset.pattern.permute.xlu0 0
    %1493 = vperm.xlu0 %1492, %v1351
    %v1494 = vpop.permute.xlu0 %1493
    %1497 = vset.pattern.permute.xlu0 0
    %1498 = vperm.xlu0 %1497, %v1352
    %v1499 = vpop.permute.xlu0 %1498
    %1502 = vset.pattern.permute.xlu0 0
    %1503 = vperm.xlu0 %1502, %v1353
    %v1504 = vpop.permute.xlu0 %1503
    %1507 = vset.pattern.permute.xlu0 0
    %1508 = vperm.xlu0 %1507, %v1354
    %v1509 = vpop.permute.xlu0 %1508
    %1512 = vset.pattern.permute.xlu0 0
    %1513 = vperm.xlu0 %1512, %v1355
    %v1514 = vpop.permute.xlu0 %1513
    %v1516 = vmul.f32 %v1359, %v281
    %v1517 = vmul.f32 %v1364, %v281
    %v1518 = vmul.f32 %v1369, %v281
    %v1519 = vmul.f32 %v1374, %v281
    %v1520 = vmul.f32 %v1379, %v281
    %v1521 = vmul.f32 %v1384, %v281
    %v1522 = vmul.f32 %v1389, %v281
    %v1523 = vmul.f32 %v1394, %v281
    %v1524 = vmul.f32 %v1399, %v281
    %v1525 = vmul.f32 %v1404, %v281
    %v1526 = vmul.f32 %v1409, %v281
    %v1527 = vmul.f32 %v1414, %v281
    %v1528 = vmul.f32 %v1419, %v281
    %v1529 = vmul.f32 %v1424, %v281
    %v1530 = vmul.f32 %v1429, %v281
    %v1531 = vmul.f32 %v1434, %v281
    %v1532 = vmul.f32 %v1439, %v281
    %v1533 = vmul.f32 %v1444, %v281
    %v1534 = vmul.f32 %v1449, %v281
    %v1535 = vmul.f32 %v1454, %v281
    %v1536 = vmul.f32 %v1459, %v281
    %v1537 = vmul.f32 %v1464, %v281
    %v1538 = vmul.f32 %v1469, %v281
    %v1539 = vmul.f32 %v1474, %v281
    %v1540 = vmul.f32 %v1479, %v281
    %v1541 = vmul.f32 %v1484, %v281
    %v1542 = vmul.f32 %v1489, %v281
    %v1543 = vmul.f32 %v1494, %v281
    %v1544 = vmul.f32 %v1499, %v281
    %v1545 = vmul.f32 %v1504, %v281
    %v1546 = vmul.f32 %v1509, %v281
    %v1547 = vmul.f32 %v1514, %v281
    %1548 = vset.pattern.permute.xlu0 1
    %1549 = vperm.xlu0 %1548, %v1324
    %v1550 = vpop.permute.xlu0 %1549
    %1552 = vset.pattern.permute.xlu0 1
    %1553 = vperm.xlu0 %1552, %v1325
    %v1554 = vpop.permute.xlu0 %1553
    %1556 = vset.pattern.permute.xlu0 1
    %1557 = vperm.xlu0 %1556, %v1326
    %v1558 = vpop.permute.xlu0 %1557
    %1560 = vset.pattern.permute.xlu0 1
    %1561 = vperm.xlu0 %1560, %v1327
    %v1562 = vpop.permute.xlu0 %1561
    %1564 = vset.pattern.permute.xlu0 1
    %1565 = vperm.xlu0 %1564, %v1328
    %v1566 = vpop.permute.xlu0 %1565
    %1568 = vset.pattern.permute.xlu0 1
    %1569 = vperm.xlu0 %1568, %v1329
    %v1570 = vpop.permute.xlu0 %1569
    %1572 = vset.pattern.permute.xlu0 1
    %1573 = vperm.xlu0 %1572, %v1330
    %v1574 = vpop.permute.xlu0 %1573
    %1576 = vset.pattern.permute.xlu0 1
    %1577 = vperm.xlu0 %1576, %v1331
    %v1578 = vpop.permute.xlu0 %1577
    %1580 = vset.pattern.permute.xlu0 1
    %1581 = vperm.xlu0 %1580, %v1332
    %v1582 = vpop.permute.xlu0 %1581
    %1584 = vset.pattern.permute.xlu0 1
    %1585 = vperm.xlu0 %1584, %v1333
    %v1586 = vpop.permute.xlu0 %1585
    %1588 = vset.pattern.permute.xlu0 1
    %1589 = vperm.xlu0 %1588, %v1334
    %v1590 = vpop.permute.xlu0 %1589
    %1592 = vset.pattern.permute.xlu0 1
    %1593 = vperm.xlu0 %1592, %v1335
    %v1594 = vpop.permute.xlu0 %1593
    %1596 = vset.pattern.permute.xlu0 1
    %1597 = vperm.xlu0 %1596, %v1336
    %v1598 = vpop.permute.xlu0 %1597
    %1600 = vset.pattern.permute.xlu0 1
    %1601 = vperm.xlu0 %1600, %v1337
    %v1602 = vpop.permute.xlu0 %1601
    %1604 = vset.pattern.permute.xlu0 1
    %1605 = vperm.xlu0 %1604, %v1338
    %v1606 = vpop.permute.xlu0 %1605
    %1608 = vset.pattern.permute.xlu0 1
    %1609 = vperm.xlu0 %1608, %v1339
    %v1610 = vpop.permute.xlu0 %1609
    %1612 = vset.pattern.permute.xlu0 1
    %1613 = vperm.xlu0 %1612, %v1340
    %v1614 = vpop.permute.xlu0 %1613
    %1616 = vset.pattern.permute.xlu0 1
    %1617 = vperm.xlu0 %1616, %v1341
    %v1618 = vpop.permute.xlu0 %1617
    %1620 = vset.pattern.permute.xlu0 1
    %1621 = vperm.xlu0 %1620, %v1342
    %v1622 = vpop.permute.xlu0 %1621
    %1624 = vset.pattern.permute.xlu0 1
    %1625 = vperm.xlu0 %1624, %v1343
    %v1626 = vpop.permute.xlu0 %1625
    %1628 = vset.pattern.permute.xlu0 1
    %1629 = vperm.xlu0 %1628, %v1344
    %v1630 = vpop.permute.xlu0 %1629
    %1632 = vset.pattern.permute.xlu0 1
    %1633 = vperm.xlu0 %1632, %v1345
    %v1634 = vpop.permute.xlu0 %1633
    %1636 = vset.pattern.permute.xlu0 1
    %1637 = vperm.xlu0 %1636, %v1346
    %v1638 = vpop.permute.xlu0 %1637
    %1640 = vset.pattern.permute.xlu0 1
    %1641 = vperm.xlu0 %1640, %v1347
    %v1642 = vpop.permute.xlu0 %1641
    %1644 = vset.pattern.permute.xlu0 1
    %1645 = vperm.xlu0 %1644, %v1348
    %v1646 = vpop.permute.xlu0 %1645
    %1648 = vset.pattern.permute.xlu0 1
    %1649 = vperm.xlu0 %1648, %v1349
    %v1650 = vpop.permute.xlu0 %1649
    %1652 = vset.pattern.permute.xlu0 1
    %1653 = vperm.xlu0 %1652, %v1350
    %v1654 = vpop.permute.xlu0 %1653
    %1656 = vset.pattern.permute.xlu0 1
    %1657 = vperm.xlu0 %1656, %v1351
    %v1658 = vpop.permute.xlu0 %1657
    %1660 = vset.pattern.permute.xlu0 1
    %1661 = vperm.xlu0 %1660, %v1352
    %v1662 = vpop.permute.xlu0 %1661
    %1664 = vset.pattern.permute.xlu0 1
    %1665 = vperm.xlu0 %1664, %v1353
    %v1666 = vpop.permute.xlu0 %1665
    %1668 = vset.pattern.permute.xlu0 1
    %1669 = vperm.xlu0 %1668, %v1354
    %v1670 = vpop.permute.xlu0 %1669
    %1672 = vset.pattern.permute.xlu0 1
    %1673 = vperm.xlu0 %1672, %v1355
    %v1674 = vpop.permute.xlu0 %1673
    %v1676 = vmul.f32 %v1550, %v445
    %v1677 = vmul.f32 %v1554, %v445
    %v1678 = vmul.f32 %v1558, %v445
    %v1679 = vmul.f32 %v1562, %v445
    %v1680 = vmul.f32 %v1566, %v445
    %v1681 = vmul.f32 %v1570, %v445
    %v1682 = vmul.f32 %v1574, %v445
    %v1683 = vmul.f32 %v1578, %v445
    %v1684 = vmul.f32 %v1582, %v445
    %v1685 = vmul.f32 %v1586, %v445
    %v1686 = vmul.f32 %v1590, %v445
    %v1687 = vmul.f32 %v1594, %v445
    %v1688 = vmul.f32 %v1598, %v445
    %v1689 = vmul.f32 %v1602, %v445
    %v1690 = vmul.f32 %v1606, %v445
    %v1691 = vmul.f32 %v1610, %v445
    %v1692 = vmul.f32 %v1614, %v445
    %v1693 = vmul.f32 %v1618, %v445
    %v1694 = vmul.f32 %v1622, %v445
    %v1695 = vmul.f32 %v1626, %v445
    %v1696 = vmul.f32 %v1630, %v445
    %v1697 = vmul.f32 %v1634, %v445
    %v1698 = vmul.f32 %v1638, %v445
    %v1699 = vmul.f32 %v1642, %v445
    %v1700 = vmul.f32 %v1646, %v445
    %v1701 = vmul.f32 %v1650, %v445
    %v1702 = vmul.f32 %v1654, %v445
    %v1703 = vmul.f32 %v1658, %v445
    %v1704 = vmul.f32 %v1662, %v445
    %v1705 = vmul.f32 %v1666, %v445
    %v1706 = vmul.f32 %v1670, %v445
    %v1707 = vmul.f32 %v1674, %v445
    %v1708 = vadd.f32 %v1516, %v1676
    %v1709 = vadd.f32 %v1517, %v1677
    %v1710 = vadd.f32 %v1518, %v1678
    %v1711 = vadd.f32 %v1519, %v1679
    %v1712 = vadd.f32 %v1520, %v1680
    %v1713 = vadd.f32 %v1521, %v1681
    %v1714 = vadd.f32 %v1522, %v1682
    %v1715 = vadd.f32 %v1523, %v1683
    %v1716 = vadd.f32 %v1524, %v1684
    %v1717 = vadd.f32 %v1525, %v1685
    %v1718 = vadd.f32 %v1526, %v1686
    %v1719 = vadd.f32 %v1527, %v1687
    %v1720 = vadd.f32 %v1528, %v1688
    %v1721 = vadd.f32 %v1529, %v1689
    %v1722 = vadd.f32 %v1530, %v1690
    %v1723 = vadd.f32 %v1531, %v1691
    %v1724 = vadd.f32 %v1532, %v1692
    %v1725 = vadd.f32 %v1533, %v1693
    %v1726 = vadd.f32 %v1534, %v1694
    %v1727 = vadd.f32 %v1535, %v1695
    %v1728 = vadd.f32 %v1536, %v1696
    %v1729 = vadd.f32 %v1537, %v1697
    %v1730 = vadd.f32 %v1538, %v1698
    %v1731 = vadd.f32 %v1539, %v1699
    %v1732 = vadd.f32 %v1540, %v1700
    %v1733 = vadd.f32 %v1541, %v1701
    %v1734 = vadd.f32 %v1542, %v1702
    %v1735 = vadd.f32 %v1543, %v1703
    %v1736 = vadd.f32 %v1544, %v1704
    %v1737 = vadd.f32 %v1545, %v1705
    %v1738 = vadd.f32 %v1546, %v1706
    %v1739 = vadd.f32 %v1547, %v1707
    %1740 = vset.pattern.permute.xlu0 2
    %1741 = vperm.xlu0 %1740, %v1324
    %v1742 = vpop.permute.xlu0 %1741
    %1744 = vset.pattern.permute.xlu0 2
    %1745 = vperm.xlu0 %1744, %v1325
    %v1746 = vpop.permute.xlu0 %1745
    %1748 = vset.pattern.permute.xlu0 2
    %1749 = vperm.xlu0 %1748, %v1326
    %v1750 = vpop.permute.xlu0 %1749
    %1752 = vset.pattern.permute.xlu0 2
    %1753 = vperm.xlu0 %1752, %v1327
    %v1754 = vpop.permute.xlu0 %1753
    %1756 = vset.pattern.permute.xlu0 2
    %1757 = vperm.xlu0 %1756, %v1328
    %v1758 = vpop.permute.xlu0 %1757
    %1760 = vset.pattern.permute.xlu0 2
    %1761 = vperm.xlu0 %1760, %v1329
    %v1762 = vpop.permute.xlu0 %1761
    %1764 = vset.pattern.permute.xlu0 2
    %1765 = vperm.xlu0 %1764, %v1330
    %v1766 = vpop.permute.xlu0 %1765
    %1768 = vset.pattern.permute.xlu0 2
    %1769 = vperm.xlu0 %1768, %v1331
    %v1770 = vpop.permute.xlu0 %1769
    %1772 = vset.pattern.permute.xlu0 2
    %1773 = vperm.xlu0 %1772, %v1332
    %v1774 = vpop.permute.xlu0 %1773
    %1776 = vset.pattern.permute.xlu0 2
    %1777 = vperm.xlu0 %1776, %v1333
    %v1778 = vpop.permute.xlu0 %1777
    %1780 = vset.pattern.permute.xlu0 2
    %1781 = vperm.xlu0 %1780, %v1334
    %v1782 = vpop.permute.xlu0 %1781
    %1784 = vset.pattern.permute.xlu0 2
    %1785 = vperm.xlu0 %1784, %v1335
    %v1786 = vpop.permute.xlu0 %1785
    %1788 = vset.pattern.permute.xlu0 2
    %1789 = vperm.xlu0 %1788, %v1336
    %v1790 = vpop.permute.xlu0 %1789
    %1792 = vset.pattern.permute.xlu0 2
    %1793 = vperm.xlu0 %1792, %v1337
    %v1794 = vpop.permute.xlu0 %1793
    %1796 = vset.pattern.permute.xlu0 2
    %1797 = vperm.xlu0 %1796, %v1338
    %v1798 = vpop.permute.xlu0 %1797
    %1800 = vset.pattern.permute.xlu0 2
    %1801 = vperm.xlu0 %1800, %v1339
    %v1802 = vpop.permute.xlu0 %1801
    %1804 = vset.pattern.permute.xlu0 2
    %1805 = vperm.xlu0 %1804, %v1340
    %v1806 = vpop.permute.xlu0 %1805
    %1808 = vset.pattern.permute.xlu0 2
    %1809 = vperm.xlu0 %1808, %v1341
    %v1810 = vpop.permute.xlu0 %1809
    %1812 = vset.pattern.permute.xlu0 2
    %1813 = vperm.xlu0 %1812, %v1342
    %v1814 = vpop.permute.xlu0 %1813
    %1816 = vset.pattern.permute.xlu0 2
    %1817 = vperm.xlu0 %1816, %v1343
    %v1818 = vpop.permute.xlu0 %1817
    %1820 = vset.pattern.permute.xlu0 2
    %1821 = vperm.xlu0 %1820, %v1344
    %v1822 = vpop.permute.xlu0 %1821
    %1824 = vset.pattern.permute.xlu0 2
    %1825 = vperm.xlu0 %1824, %v1345
    %v1826 = vpop.permute.xlu0 %1825
    %1828 = vset.pattern.permute.xlu0 2
    %1829 = vperm.xlu0 %1828, %v1346
    %v1830 = vpop.permute.xlu0 %1829
    %1832 = vset.pattern.permute.xlu0 2
    %1833 = vperm.xlu0 %1832, %v1347
    %v1834 = vpop.permute.xlu0 %1833
    %1836 = vset.pattern.permute.xlu0 2
    %1837 = vperm.xlu0 %1836, %v1348
    %v1838 = vpop.permute.xlu0 %1837
    %1840 = vset.pattern.permute.xlu0 2
    %1841 = vperm.xlu0 %1840, %v1349
    %v1842 = vpop.permute.xlu0 %1841
    %1844 = vset.pattern.permute.xlu0 2
    %1845 = vperm.xlu0 %1844, %v1350
    %v1846 = vpop.permute.xlu0 %1845
    %1848 = vset.pattern.permute.xlu0 2
    %1849 = vperm.xlu0 %1848, %v1351
    %v1850 = vpop.permute.xlu0 %1849
    %1852 = vset.pattern.permute.xlu0 2
    %1853 = vperm.xlu0 %1852, %v1352
    %v1854 = vpop.permute.xlu0 %1853
    %1856 = vset.pattern.permute.xlu0 2
    %1857 = vperm.xlu0 %1856, %v1353
    %v1858 = vpop.permute.xlu0 %1857
    %1860 = vset.pattern.permute.xlu0 2
    %1861 = vperm.xlu0 %1860, %v1354
    %v1862 = vpop.permute.xlu0 %1861
    %1864 = vset.pattern.permute.xlu0 2
    %1865 = vperm.xlu0 %1864, %v1355
    %v1866 = vpop.permute.xlu0 %1865
    %v1868 = vmul.f32 %v1742, %v641
    %v1869 = vmul.f32 %v1746, %v641
    %v1870 = vmul.f32 %v1750, %v641
    %v1871 = vmul.f32 %v1754, %v641
    %v1872 = vmul.f32 %v1758, %v641
    %v1873 = vmul.f32 %v1762, %v641
    %v1874 = vmul.f32 %v1766, %v641
    %v1875 = vmul.f32 %v1770, %v641
    %v1876 = vmul.f32 %v1774, %v641
    %v1877 = vmul.f32 %v1778, %v641
    %v1878 = vmul.f32 %v1782, %v641
    %v1879 = vmul.f32 %v1786, %v641
    %v1880 = vmul.f32 %v1790, %v641
    %v1881 = vmul.f32 %v1794, %v641
    %v1882 = vmul.f32 %v1798, %v641
    %v1883 = vmul.f32 %v1802, %v641
    %v1884 = vmul.f32 %v1806, %v641
    %v1885 = vmul.f32 %v1810, %v641
    %v1886 = vmul.f32 %v1814, %v641
    %v1887 = vmul.f32 %v1818, %v641
    %v1888 = vmul.f32 %v1822, %v641
    %v1889 = vmul.f32 %v1826, %v641
    %v1890 = vmul.f32 %v1830, %v641
    %v1891 = vmul.f32 %v1834, %v641
    %v1892 = vmul.f32 %v1838, %v641
    %v1893 = vmul.f32 %v1842, %v641
    %v1894 = vmul.f32 %v1846, %v641
    %v1895 = vmul.f32 %v1850, %v641
    %v1896 = vmul.f32 %v1854, %v641
    %v1897 = vmul.f32 %v1858, %v641
    %v1898 = vmul.f32 %v1862, %v641
    %v1899 = vmul.f32 %v1866, %v641
    %v1900 = vadd.f32 %v1708, %v1868
    %v1901 = vadd.f32 %v1709, %v1869
    %v1902 = vadd.f32 %v1710, %v1870
    %v1903 = vadd.f32 %v1711, %v1871
    %v1904 = vadd.f32 %v1712, %v1872
    %v1905 = vadd.f32 %v1713, %v1873
    %v1906 = vadd.f32 %v1714, %v1874
    %v1907 = vadd.f32 %v1715, %v1875
    %v1908 = vadd.f32 %v1716, %v1876
    %v1909 = vadd.f32 %v1717, %v1877
    %v1910 = vadd.f32 %v1718, %v1878
    %v1911 = vadd.f32 %v1719, %v1879
    %v1912 = vadd.f32 %v1720, %v1880
    %v1913 = vadd.f32 %v1721, %v1881
    %v1914 = vadd.f32 %v1722, %v1882
    %v1915 = vadd.f32 %v1723, %v1883
    %v1916 = vadd.f32 %v1724, %v1884
    %v1917 = vadd.f32 %v1725, %v1885
    %v1918 = vadd.f32 %v1726, %v1886
    %v1919 = vadd.f32 %v1727, %v1887
    %v1920 = vadd.f32 %v1728, %v1888
    %v1921 = vadd.f32 %v1729, %v1889
    %v1922 = vadd.f32 %v1730, %v1890
    %v1923 = vadd.f32 %v1731, %v1891
    %v1924 = vadd.f32 %v1732, %v1892
    %v1925 = vadd.f32 %v1733, %v1893
    %v1926 = vadd.f32 %v1734, %v1894
    %v1927 = vadd.f32 %v1735, %v1895
    %v1928 = vadd.f32 %v1736, %v1896
    %v1929 = vadd.f32 %v1737, %v1897
    %v1930 = vadd.f32 %v1738, %v1898
    %v1931 = vadd.f32 %v1739, %v1899
    %v1932 = vadd.f32 %v1900, %v710
    %v1933 = vadd.f32 %v1901, %v710
    %v1934 = vadd.f32 %v1902, %v710
    %v1935 = vadd.f32 %v1903, %v710
    %v1936 = vadd.f32 %v1904, %v710
    %v1937 = vadd.f32 %v1905, %v710
    %v1938 = vadd.f32 %v1906, %v710
    %v1939 = vadd.f32 %v1907, %v710
    %v1940 = vadd.f32 %v1908, %v710
    %v1941 = vadd.f32 %v1909, %v710
    %v1942 = vadd.f32 %v1910, %v710
    %v1943 = vadd.f32 %v1911, %v710
    %v1944 = vadd.f32 %v1912, %v710
    %v1945 = vadd.f32 %v1913, %v710
    %v1946 = vadd.f32 %v1914, %v710
    %v1947 = vadd.f32 %v1915, %v710
    %v1948 = vadd.f32 %v1916, %v710
    %v1949 = vadd.f32 %v1917, %v710
    %v1950 = vadd.f32 %v1918, %v710
    %v1951 = vadd.f32 %v1919, %v710
    %v1952 = vadd.f32 %v1920, %v710
    %v1953 = vadd.f32 %v1921, %v710
    %v1954 = vadd.f32 %v1922, %v710
    %v1955 = vadd.f32 %v1923, %v710
    %v1956 = vadd.f32 %v1924, %v710
    %v1957 = vadd.f32 %v1925, %v710
    %v1958 = vadd.f32 %v1926, %v710
    %v1959 = vadd.f32 %v1927, %v710
    %v1960 = vadd.f32 %v1928, %v710
    %v1961 = vadd.f32 %v1929, %v710
    %v1962 = vadd.f32 %v1930, %v710
    %v1963 = vadd.f32 %v1931, %v710
    %v1964 = vmax.f32 %v1932, 0.0
    %v1965 = vmax.f32 %v1933, 0.0
    %v1966 = vmax.f32 %v1934, 0.0
    %v1967 = vmax.f32 %v1935, 0.0
    %v1968 = vmax.f32 %v1936, 0.0
    %v1969 = vmax.f32 %v1937, 0.0
    %v1970 = vmax.f32 %v1938, 0.0
    %v1971 = vmax.f32 %v1939, 0.0
    %v1972 = vmax.f32 %v1940, 0.0
    %v1973 = vmax.f32 %v1941, 0.0
    %v1974 = vmax.f32 %v1942, 0.0
    %v1975 = vmax.f32 %v1943, 0.0
    %v1976 = vmax.f32 %v1944, 0.0
    %v1977 = vmax.f32 %v1945, 0.0
    %v1978 = vmax.f32 %v1946, 0.0
    %v1979 = vmax.f32 %v1947, 0.0
    %v1980 = vmax.f32 %v1948, 0.0
    %v1981 = vmax.f32 %v1949, 0.0
    %v1982 = vmax.f32 %v1950, 0.0
    %v1983 = vmax.f32 %v1951, 0.0
    %v1984 = vmax.f32 %v1952, 0.0
    %v1985 = vmax.f32 %v1953, 0.0
    %v1986 = vmax.f32 %v1954, 0.0
    %v1987 = vmax.f32 %v1955, 0.0
    %v1988 = vmax.f32 %v1956, 0.0
    %v1989 = vmax.f32 %v1957, 0.0
    %v1990 = vmax.f32 %v1958, 0.0
    %v1991 = vmax.f32 %v1959, 0.0
    %v1992 = vmax.f32 %v1960, 0.0
    %v1993 = vmax.f32 %v1961, 0.0
    %v1994 = vmax.f32 %v1962, 0.0
    %v1995 = vmax.f32 %v1963, 0.0
    %1996 = vmatprep.subr.mxu0 0.0
    %1997 = vmatpush1.msra.mxu0 %v1964
    %1998 = vmatprep.subr.mxu0 0.0
    %1999 = vmatpush1.msra.mxu0 %v1965
    %2000 = vmatprep.subr.mxu0 0.0
    %2001 = vmatpush1.msra.mxu0 %v1966
    %2002 = vmatprep.subr.mxu0 0.0
    %2003 = vmatpush1.msra.mxu0 %v1967
    %2004 = vmatprep.subr.mxu0 0.0
    %2005 = vmatpush1.msra.mxu0 %v1968
    %2006 = vmatprep.subr.mxu0 0.0
    %2007 = vmatpush1.msra.mxu0 %v1969
    %2008 = vmatprep.subr.mxu0 0.0
    %2009 = vmatpush1.msra.mxu0 %v1970
    %2010 = vmatprep.subr.mxu0 0.0
    %2011 = vmatpush1.msra.mxu0 %v1971
    %2012 = vmatprep.subr.mxu0 0.0
    %2013 = vmatpush1.msra.mxu0 %v1972
    %2014 = vmatprep.subr.mxu0 0.0
    %2015 = vmatpush1.msra.mxu0 %v1973
    %2016 = vmatprep.subr.mxu0 0.0
    %2017 = vmatpush1.msra.mxu0 %v1974
    %2018 = vmatprep.subr.mxu0 0.0
    %2019 = vmatpush1.msra.mxu0 %v1975
    %2020 = vmatprep.subr.mxu0 0.0
    %2021 = vmatpush1.msra.mxu0 %v1976
    %2022 = vmatprep.subr.mxu0 0.0
    %2023 = vmatpush1.msra.mxu0 %v1977
    %2024 = vmatprep.subr.mxu0 0.0
    %2025 = vmatpush1.msra.mxu0 %v1978
    %2026 = vmatprep.subr.mxu0 0.0
    %2027 = vmatpush1.msra.mxu0 %v1979
    %2028 = vmatprep.subr.mxu0 0.0
    %2029 = vmatpush1.msra.mxu0 %v1980
    %2030 = vmatprep.subr.mxu0 0.0
    %2031 = vmatpush1.msra.mxu0 %v1981
    %2032 = vmatprep.subr.mxu0 0.0
    %2033 = vmatpush1.msra.mxu0 %v1982
    %2034 = vmatprep.subr.mxu0 0.0
    %2035 = vmatpush1.msra.mxu0 %v1983
    %2036 = vmatprep.subr.mxu0 0.0
    %2037 = vmatpush1.msra.mxu0 %v1984
    %2038 = vmatprep.subr.mxu0 0.0
    %2039 = vmatpush1.msra.mxu0 %v1985
    %2040 = vmatprep.subr.mxu0 0.0
    %2041 = vmatpush1.msra.mxu0 %v1986
    %2042 = vmatprep.subr.mxu0 0.0
    %2043 = vmatpush1.msra.mxu0 %v1987
    %2044 = vmatprep.subr.mxu0 0.0
    %2045 = vmatpush1.msra.mxu0 %v1988
    %2046 = vmatprep.subr.mxu0 0.0
    %2047 = vmatpush1.msra.mxu0 %v1989
    %2048 = vmatprep.subr.mxu0 0.0
    %2049 = vmatpush1.msra.mxu0 %v1990
    %2050 = vmatprep.subr.mxu0 0.0
    %2051 = vmatpush1.msra.mxu0 %v1991
    %2052 = vmatprep.subr.mxu0 0.0
    %2053 = vmatpush1.msra.mxu0 %v1992
    %2054 = vmatprep.subr.mxu0 0.0
    %2055 = vmatpush1.msra.mxu0 %v1993
    %2056 = vmatprep.subr.mxu0 0.0
    %2057 = vmatpush1.msra.mxu0 %v1994
    %2058 = vmatprep.subr.mxu0 0.0
    %2059 = vmatpush1.msra.mxu0 %v1995
    %2060 = vmatprep.mubr.f32.mxu0 0.00390625
    %2061 = vmatmul.mubr.f32.gmra.mrb[0].mxu0 0.00390625
    %v2062 = vpop.f32.mrb[0].mxu0
    %v2063 = vadd.f32 0.0, %v2062
    %v2064 = vpop.f32.mrb[0].mxu0
    %2065 = vdwg.mxu0
    %2066 = vmatprep.subr.mxu0 0.0
    %2067 = vmatpush1.xpose.msra.mxu0 %v1964
    %2068 = vmatprep.subr.mxu0 0.0
    %2069 = vmatpush1.xpose.msra.mxu0 %v1965
    %2070 = vmatprep.subr.mxu0 0.0
    %2071 = vmatpush1.xpose.msra.mxu0 %v1966
    %2072 = vmatprep.subr.mxu0 0.0
    %2073 = vmatpush1.xpose.msra.mxu0 %v1967
    %2074 = vmatprep.subr.mxu0 0.0
    %2075 = vmatpush1.xpose.msra.mxu0 %v1968
    %2076 = vmatprep.subr.mxu0 0.0
    %2077 = vmatpush1.xpose.msra.mxu0 %v1969
    %2078 = vmatprep.subr.mxu0 0.0
    %2079 = vmatpush1.xpose.msra.mxu0 %v1970
    %2080 = vmatprep.subr.mxu0 0.0
    %2081 = vmatpush1.xpose.msra.mxu0 %v1971
    %2082 = vmatprep.subr.mxu0 0.0
    %2083 = vmatpush1.xpose.msra.mxu0 %v1972
    %2084 = vmatprep.subr.mxu0 0.0
    %2085 = vmatpush1.xpose.msra.mxu0 %v1973
    %2086 = vmatprep.subr.mxu0 0.0
    %2087 = vmatpush1.xpose.msra.mxu0 %v1974
    %2088 = vmatprep.subr.mxu0 0.0
    %2089 = vmatpush1.xpose.msra.mxu0 %v1975
    %2090 = vmatprep.subr.mxu0 0.0
    %2091 = vmatpush1.xpose.msra.mxu0 %v1976
    %2092 = vmatprep.subr.mxu0 0.0
    %2093 = vmatpush1.xpose.msra.mxu0 %v1977
    %2094 = vmatprep.subr.mxu0 0.0
    %2095 = vmatpush1.xpose.msra.mxu0 %v1978
    %2096 = vmatprep.subr.mxu0 0.0
    %2097 = vmatpush1.xpose.msra.mxu0 %v1979
    %2098 = vmatprep.subr.mxu0 0.0
    %2099 = vmatpush1.xpose.msra.mxu0 %v1980
    %2100 = vmatprep.subr.mxu0 0.0
    %2101 = vmatpush1.xpose.msra.mxu0 %v1981
    %2102 = vmatprep.subr.mxu0 0.0
    %2103 = vmatpush1.xpose.msra.mxu0 %v1982
    %2104 = vmatprep.subr.mxu0 0.0
    %2105 = vmatpush1.xpose.msra.mxu0 %v1983
    %2106 = vmatprep.subr.mxu0 0.0
    %2107 = vmatpush1.xpose.msra.mxu0 %v1984
    %2108 = vmatprep.subr.mxu0 0.0
    %2109 = vmatpush1.xpose.msra.mxu0 %v1985
    %2110 = vmatprep.subr.mxu0 0.0
    %2111 = vmatpush1.xpose.msra.mxu0 %v1986
    %2112 = vmatprep.subr.mxu0 0.0
    %2113 = vmatpush1.xpose.msra.mxu0 %v1987
    %2114 = vmatprep.subr.mxu0 0.0
    %2115 = vmatpush1.xpose.msra.mxu0 %v1988
    %2116 = vmatprep.subr.mxu0 0.0
    %2117 = vmatpush1.xpose.msra.mxu0 %v1989
    %2118 = vmatprep.subr.mxu0 0.0
    %2119 = vmatpush1.xpose.msra.mxu0 %v1990
    %2120 = vmatprep.subr.mxu0 0.0
    %2121 = vmatpush1.xpose.msra.mxu0 %v1991
    %2122 = vmatprep.subr.mxu0 0.0
    %2123 = vmatpush1.xpose.msra.mxu0 %v1992
    %2124 = vmatprep.subr.mxu0 0.0
    %2125 = vmatpush1.xpose.msra.mxu0 %v1993
    %2126 = vmatprep.subr.mxu0 0.0
    %2127 = vmatpush1.xpose.msra.mxu0 %v1994
    %2128 = vmatprep.subr.mxu0 0.0
    %2129 = vmatpush1.xpose.msra.mxu0 %v1995
    %2130 = vmatprep.mubr.f32.mxu0 0.0
    %2131 = vmatmul.mubr.f32.gmra.mrb[0].mxu0 %v50
    %v2132 = vpop.f32.mrb[0].mxu0
    %v2133 = vadd.f32 0.0, %v2132
    %v2134 = vpop.f32.mrb[0].mxu0
    %v2135 = vadd.f32 0.0, %v2134
    %2136 = vdwg.mxu0
    %v2137 = vsel %vm917, %v2133, -inf
    %v2138 = vsel %vm917, %v2135, -inf
    %v2139 = vmax.f32 %v2137, %v2138
    %2140 = vmax.xlane.f32.xlu0 %v2139
    %v2141 = vpop.xlane.xlu0 %2140
    %v2142 = vsub.f32 %v2133, %v2141
    %v2143 = vsub.f32 %v2135, %v2141
    %v2144 = vmul.f32 %v2142, 1.442695
    %v2145 = vpow.pop %v2144
    %v2146 = vmul.f32 %v2143, 1.442695
    %v2147 = vpow.pop %v2146
    %v2148 = vsel %vm917, %v2145, 0.0
    %v2149 = vsel %vm917, %v2147, 0.0
    %v2150 = vadd.f32 %v2148, %v2149
    %2151 = vadd.xlane.f32.xlu0 %v2150
    %v2152 = vpop.xlane.xlu0 %2151
    %v2153 = vrcp.pop %v2152
    %v2154 = vmul.f32 %v2145, %v2153
    %v2155 = vmul.f32 %v2147, %v2153
    %2156 = vmatprep.subr.mxu0 0.0
    %2157 = vmatpush1.msra.mxu0 %v1964
    %2158 = vmatprep.subr.mxu0 0.0
    %2159 = vmatpush1.msra.mxu0 %v1965
    %2160 = vmatprep.subr.mxu0 0.0
    %2161 = vmatpush1.msra.mxu0 %v1966
    %2162 = vmatprep.subr.mxu0 0.0
    %2163 = vmatpush1.msra.mxu0 %v1967
    %2164 = vmatprep.subr.mxu0 0.0
    %2165 = vmatpush1.msra.mxu0 %v1968
    %2166 = vmatprep.subr.mxu0 0.0
    %2167 = vmatpush1.msra.mxu0 %v1969
    %2168 = vmatprep.subr.mxu0 0.0
    %2169 = vmatpush1.msra.mxu0 %v1970
    %2170 = vmatprep.subr.mxu0 0.0
    %2171 = vmatpush1.msra.mxu0 %v1971
    %2172 = vmatprep.subr.mxu0 0.0
    %2173 = vmatpush1.msra.mxu0 %v1972
    %2174 = vmatprep.subr.mxu0 0.0
    %2175 = vmatpush1.msra.mxu0 %v1973
    %2176 = vmatprep.subr.mxu0 0.0
    %2177 = vmatpush1.msra.mxu0 %v1974
    %2178 = vmatprep.subr.mxu0 0.0
    %2179 = vmatpush1.msra.mxu0 %v1975
    %2180 = vmatprep.subr.mxu0 0.0
    %2181 = vmatpush1.msra.mxu0 %v1976
    %2182 = vmatprep.subr.mxu0 0.0
    %2183 = vmatpush1.msra.mxu0 %v1977
    %2184 = vmatprep.subr.mxu0 0.0
    %2185 = vmatpush1.msra.mxu0 %v1978
    %2186 = vmatprep.subr.mxu0 0.0
    %2187 = vmatpush1.msra.mxu0 %v1979
    %2188 = vmatprep.subr.mxu0 0.0
    %2189 = vmatpush1.msra.mxu0 %v1980
    %2190 = vmatprep.subr.mxu0 0.0
    %2191 = vmatpush1.msra.mxu0 %v1981
    %2192 = vmatprep.subr.mxu0 0.0
    %2193 = vmatpush1.msra.mxu0 %v1982
    %2194 = vmatprep.subr.mxu0 0.0
    %2195 = vmatpush1.msra.mxu0 %v1983
    %2196 = vmatprep.subr.mxu0 0.0
    %2197 = vmatpush1.msra.mxu0 %v1984
    %2198 = vmatprep.subr.mxu0 0.0
    %2199 = vmatpush1.msra.mxu0 %v1985
    %2200 = vmatprep.subr.mxu0 0.0
    %2201 = vmatpush1.msra.mxu0 %v1986
    %2202 = vmatprep.subr.mxu0 0.0
    %2203 = vmatpush1.msra.mxu0 %v1987
    %2204 = vmatprep.subr.mxu0 0.0
    %2205 = vmatpush1.msra.mxu0 %v1988
    %2206 = vmatprep.subr.mxu0 0.0
    %2207 = vmatpush1.msra.mxu0 %v1989
    %2208 = vmatprep.subr.mxu0 0.0
    %2209 = vmatpush1.msra.mxu0 %v1990
    %2210 = vmatprep.subr.mxu0 0.0
    %2211 = vmatpush1.msra.mxu0 %v1991
    %2212 = vmatprep.subr.mxu0 0.0
    %2213 = vmatpush1.msra.mxu0 %v1992
    %2214 = vmatprep.subr.mxu0 0.0
    %2215 = vmatpush1.msra.mxu0 %v1993
    %2216 = vmatprep.subr.mxu0 0.0
    %2217 = vmatpush1.msra.mxu0 %v1994
    %2218 = vmatprep.subr.mxu0 0.0
    %2219 = vmatpush1.msra.mxu0 %v1995
    %2220 = vmatprep.mubr.f32.mxu0 %v2155
    %2221 = vmatmul.mubr.f32.gmra.mrb[0].mxu0 %v2154
    %v2222 = vpop.f32.mrb[0].mxu0
    %v2223 = vadd.f32 0.0, %v2222
    %v2224 = vpop.f32.mrb[0].mxu0
    %2225 = vdwg.mxu0
    %2226 = vmatprep.subr.mxu0 0.0
    %2227 = vmatpush1.msra.mxu0 %v52
    %2228 = vmatprep.subr.mxu0 0.0
    %2229 = vmatpush1.msra.mxu0 %v53
    %2230 = vmatprep.subr.mxu0 0.0
    %2231 = vmatpush1.msra.mxu0 %v54
    %2232 = vmatprep.subr.mxu0 0.0
    %2233 = vmatpush1.msra.mxu0 %v55
    %2234 = vmatprep.subr.mxu0 0.0
    %2235 = vmatpush1.msra.mxu0 %v56
    %2236 = vmatprep.subr.mxu0 0.0
    %2237 = vmatpush1.msra.mxu0 %v57
    %2238 = vmatprep.subr.mxu0 0.0
    %2239 = vmatpush1.msra.mxu0 %v58
    %2240 = vmatprep.subr.mxu0 0.0
    %2241 = vmatpush1.msra.mxu0 %v59
    %2242 = vmatprep.subr.mxu0 0.0
    %2243 = vmatpush1.msra.mxu0 %v60
    %2244 = vmatprep.subr.mxu0 0.0
    %2245 = vmatpush1.msra.mxu0 %v61
    %2246 = vmatprep.subr.mxu0 0.0
    %2247 = vmatpush1.msra.mxu0 %v62
    %2248 = vmatprep.subr.mxu0 0.0
    %2249 = vmatpush1.msra.mxu0 %v63
    %2250 = vmatprep.subr.mxu0 0.0
    %2251 = vmatpush1.msra.mxu0 %v64
    %2252 = vmatprep.subr.mxu0 0.0
    %2253 = vmatpush1.msra.mxu0 %v65
    %2254 = vmatprep.subr.mxu0 0.0
    %2255 = vmatpush1.msra.mxu0 %v66
    %2256 = vmatprep.subr.mxu0 0.0
    %2257 = vmatpush1.msra.mxu0 %v67
    %2258 = vmatprep.subr.mxu0 0.0
    %2259 = vmatpush1.msra.mxu0 0.0
    %2260 = vmatprep.subr.mxu0 0.0
    %2261 = vmatpush1.msra.mxu0 0.0
    %2262 = vmatprep.subr.mxu0 0.0
    %2263 = vmatpush1.msra.mxu0 0.0
    %2264 = vmatprep.subr.mxu0 0.0
    %2265 = vmatpush1.msra.mxu0 0.0
    %2266 = vmatprep.subr.mxu0 0.0
    %2267 = vmatpush1.msra.mxu0 0.0
    %2268 = vmatprep.subr.mxu0 0.0
    %2269 = vmatpush1.msra.mxu0 0.0
    %2270 = vmatprep.subr.mxu0 0.0
    %2271 = vmatpush1.msra.mxu0 0.0
    %2272 = vmatprep.subr.mxu0 0.0
    %2273 = vmatpush1.msra.mxu0 0.0
    %2274 = vmatprep.subr.mxu0 0.0
    %2275 = vmatpush1.msra.mxu0 0.0
    %2276 = vmatprep.subr.mxu0 0.0
    %2277 = vmatpush1.msra.mxu0 0.0
    %2278 = vmatprep.subr.mxu0 0.0
    %2279 = vmatpush1.msra.mxu0 0.0
    %2280 = vmatprep.subr.mxu0 0.0
    %2281 = vmatpush1.msra.mxu0 0.0
    %2282 = vmatprep.subr.mxu0 0.0
    %2283 = vmatpush1.msra.mxu0 0.0
    %2284 = vmatprep.subr.mxu0 0.0
    %2285 = vmatpush1.msra.mxu0 0.0
    %2286 = vmatprep.subr.mxu0 0.0
    %2287 = vmatpush1.msra.mxu0 0.0
    %2288 = vmatprep.subr.mxu0 0.0
    %2289 = vmatpush1.msra.mxu0 0.0
    %2290 = vmatprep.mubr.f32.mxu0 0.0
    %2291 = vmatmul.mubr.f32.gmra.mrb[0].mxu0 %v2223
    %v2292 = vpop.f32.mrb[0].mxu0
    %v2293 = vadd.f32 %v1011, %v2292
    %v2294 = vpop.f32.mrb[0].mxu0
    %2295 = vdwg.mxu0
    %2296 = vmatprep.subr.mxu0 0.0
    %2297 = vmatpush1.xpose.msra.mxu0 %v2293
    %2298 = vmatprep.subr.mxu0 0.0
    %2299 = vmatpush1.xpose.msra.mxu0 0.0
    %2300 = vmatprep.subr.mxu0 0.0
    %2301 = vmatpush1.xpose.msra.mxu0 0.0
    %2302 = vmatprep.subr.mxu0 0.0
    %2303 = vmatpush1.xpose.msra.mxu0 0.0
    %2304 = vmatprep.subr.mxu0 0.0
    %2305 = vmatpush1.xpose.msra.mxu0 0.0
    %2306 = vmatprep.subr.mxu0 0.0
    %2307 = vmatpush1.xpose.msra.mxu0 0.0
    %2308 = vmatprep.subr.mxu0 0.0
    %2309 = vmatpush1.xpose.msra.mxu0 0.0
    %2310 = vmatprep.subr.mxu0 0.0
    %2311 = vmatpush1.xpose.msra.mxu0 0.0
    %2312 = vmatprep.subr.mxu0 0.0
    %2313 = vmatpush1.xpose.msra.mxu0 0.0
    %2314 = vmatprep.subr.mxu0 0.0
    %2315 = vmatpush1.xpose.msra.mxu0 0.0
    %2316 = vmatprep.subr.mxu0 0.0
    %2317 = vmatpush1.xpose.msra.mxu0 0.0
    %2318 = vmatprep.subr.mxu0 0.0
    %2319 = vmatpush1.xpose.msra.mxu0 0.0
    %2320 = vmatprep.subr.mxu0 0.0
    %2321 = vmatpush1.xpose.msra.mxu0 0.0
    %2322 = vmatprep.subr.mxu0 0.0
    %2323 = vmatpush1.xpose.msra.mxu0 0.0
    %2324 = vmatprep.subr.mxu0 0.0
    %2325 = vmatpush1.xpose.msra.mxu0 0.0
    %2326 = vmatprep.subr.mxu0 0.0
    %2327 = vmatpush1.xpose.msra.mxu0 0.0
    %2328 = vmatprep.subr.mxu0 0.0
    %2329 = vmatpush1.xpose.msra.mxu0 0.0
    %2330 = vmatprep.subr.mxu0 0.0
    %2331 = vmatpush1.xpose.msra.mxu0 0.0
    %2332 = vmatprep.subr.mxu0 0.0
    %2333 = vmatpush1.xpose.msra.mxu0 0.0
    %2334 = vmatprep.subr.mxu0 0.0
    %2335 = vmatpush1.xpose.msra.mxu0 0.0
    %2336 = vmatprep.subr.mxu0 0.0
    %2337 = vmatpush1.xpose.msra.mxu0 0.0
    %2338 = vmatprep.subr.mxu0 0.0
    %2339 = vmatpush1.xpose.msra.mxu0 0.0
    %2340 = vmatprep.subr.mxu0 0.0
    %2341 = vmatpush1.xpose.msra.mxu0 0.0
    %2342 = vmatprep.subr.mxu0 0.0
    %2343 = vmatpush1.xpose.msra.mxu0 0.0
    %2344 = vmatprep.subr.mxu0 0.0
    %2345 = vmatpush1.xpose.msra.mxu0 0.0
    %2346 = vmatprep.subr.mxu0 0.0
    %2347 = vmatpush1.xpose.msra.mxu0 0.0
    %2348 = vmatprep.subr.mxu0 0.0
    %2349 = vmatpush1.xpose.msra.mxu0 0.0
    %2350 = vmatprep.subr.mxu0 0.0
    %2351 = vmatpush1.xpose.msra.mxu0 0.0
    %2352 = vmatprep.subr.mxu0 0.0
    %2353 = vmatpush1.xpose.msra.mxu0 0.0
    %2354 = vmatprep.subr.mxu0 0.0
    %2355 = vmatpush1.xpose.msra.mxu0 0.0
    %2356 = vmatprep.subr.mxu0 0.0
    %2357 = vmatpush1.xpose.msra.mxu0 0.0
    %2358 = vmatprep.subr.mxu0 0.0
    %2359 = vmatpush1.xpose.msra.mxu0 0.0
    %2360 = vmatprep.mubr.f32.mxu0 0.0
    %2361 = vmatmul.mubr.f32.gmra.mrb[0].mxu0 %v51
    %v2362 = vpop.f32.mrb[0].mxu0
    %v2363 = vadd.f32 0.0, %v2362
    %v2364 = vpop.f32.mrb[0].mxu0
    %2365 = vdwg.mxu0
    %v2366 = vsel %vm1153, %v2363, -inf
    %2367 = vmax.xlane.f32.xlu0 %v2366
    %v2368 = vpop.xlane.xlu0 %2367
    %v2369 = vsub.f32 %v2363, %v2368
    %v2370 = vmul.f32 %v2369, 1.442695
    %v2371 = vpow.pop %v2370
    %v2372 = vsel %vm1153, %v2371, 0.0
    %2373 = vadd.xlane.f32.xlu0 %v2372
    %v2374 = vpop.xlane.xlu0 %2373
    %v2375 = vrcp.pop %v2374
    %v2376 = vmul.f32 %v2371, %v2375
    %v2378 = vsel %vm1165, %v2376, 0
    %v2381 = vsel %vm917, %v2293, 0
    %2383 = vmatprep.subr.mxu0 0.0
    %2384 = vmatpush1.msra.mxu0 %v2381
    %2385 = vmatprep.subr.mxu0 0.0
    %2386 = vmatpush1.msra.mxu0 0.0
    %2387 = vmatprep.subr.mxu0 0.0
    %2388 = vmatpush1.msra.mxu0 0.0
    %2389 = vmatprep.subr.mxu0 0.0
    %2390 = vmatpush1.msra.mxu0 0.0
    %2391 = vmatprep.subr.mxu0 0.0
    %2392 = vmatpush1.msra.mxu0 0.0
    %2393 = vmatprep.subr.mxu0 0.0
    %2394 = vmatpush1.msra.mxu0 0.0
    %2395 = vmatprep.subr.mxu0 0.0
    %2396 = vmatpush1.msra.mxu0 0.0
    %2397 = vmatprep.subr.mxu0 0.0
    %2398 = vmatpush1.msra.mxu0 0.0
    %2399 = vmatprep.subr.mxu0 0.0
    %2400 = vmatpush1.msra.mxu0 0.0
    %2401 = vmatprep.subr.mxu0 0.0
    %2402 = vmatpush1.msra.mxu0 0.0
    %2403 = vmatprep.subr.mxu0 0.0
    %2404 = vmatpush1.msra.mxu0 0.0
    %2405 = vmatprep.subr.mxu0 0.0
    %2406 = vmatpush1.msra.mxu0 0.0
    %2407 = vmatprep.subr.mxu0 0.0
    %2408 = vmatpush1.msra.mxu0 0.0
    %2409 = vmatprep.subr.mxu0 0.0
    %2410 = vmatpush1.msra.mxu0 0.0
    %2411 = vmatprep.subr.mxu0 0.0
    %2412 = vmatpush1.msra.mxu0 0.0
    %2413 = vmatprep.subr.mxu0 0.0
    %2414 = vmatpush1.msra.mxu0 0.0
    %2415 = vmatprep.subr.mxu0 0.0
    %2416 = vmatpush1.msra.mxu0 0.0
    %2417 = vmatprep.subr.mxu0 0.0
    %2418 = vmatpush1.msra.mxu0 0.0
    %2419 = vmatprep.subr.mxu0 0.0
    %2420 = vmatpush1.msra.mxu0 0.0
    %2421 = vmatprep.subr.mxu0 0.0
    %2422 = vmatpush1.msra.mxu0 0.0
    %2423 = vmatprep.subr.mxu0 0.0
    %2424 = vmatpush1.msra.mxu0 0.0
    %2425 = vmatprep.subr.mxu0 0.0
    %2426 = vmatpush1.msra.mxu0 0.0
    %2427 = vmatprep.subr.mxu0 0.0
    %2428 = vmatpush1.msra.mxu0 0.0
    %2429 = vmatprep.subr.mxu0 0.0
    %2430 = vmatpush1.msra.mxu0 0.0
    %2431 = vmatprep.subr.mxu0 0.0
    %2432 = vmatpush1.msra.mxu0 0.0
    %2433 = vmatprep.subr.mxu0 0.0
    %2434 = vmatpush1.msra.mxu0 0.0
    %2435 = vmatprep.subr.mxu0 0.0
    %2436 = vmatpush1.msra.mxu0 0.0
    %2437 = vmatprep.subr.mxu0 0.0
    %2438 = vmatpush1.msra.mxu0 0.0
    %2439 = vmatprep.subr.mxu0 0.0
    %2440 = vmatpush1.msra.mxu0 0.0
    %2441 = vmatprep.subr.mxu0 0.0
    %2442 = vmatpush1.msra.mxu0 0.0
    %2443 = vmatprep.subr.mxu0 0.0
    %2444 = vmatpush1.msra.mxu0 0.0
    %2445 = vmatprep.subr.mxu0 0.0
    %2446 = vmatpush1.msra.mxu0 0.0
    %2447 = vmatprep.mubr.f32.mxu0 0.0
    %2448 = vmatmul.mubr.f32.gmra.mrb[0].mxu0 %v2378
    %v2449 = vpop.f32.mrb[0].mxu0
    %v2450 = vadd.f32 0.0, %v2449
    %v2451 = vpop.f32.mrb[0].mxu0
    %2452 = vdwg.mxu0
    %2453 = vmatprep.subr.mxu0 0.0
    %2454 = vmatpush1.msra.mxu0 %v69
    %2455 = vmatprep.subr.mxu0 0.0
    %2456 = vmatpush1.msra.mxu0 %v70
    %2457 = vmatprep.subr.mxu0 0.0
    %2458 = vmatpush1.msra.mxu0 %v71
    %2459 = vmatprep.subr.mxu0 0.0
    %2460 = vmatpush1.msra.mxu0 %v72
    %2461 = vmatprep.subr.mxu0 0.0
    %2462 = vmatpush1.msra.mxu0 %v73
    %2463 = vmatprep.subr.mxu0 0.0
    %2464 = vmatpush1.msra.mxu0 %v74
    %2465 = vmatprep.subr.mxu0 0.0
    %2466 = vmatpush1.msra.mxu0 %v75
    %2467 = vmatprep.subr.mxu0 0.0
    %2468 = vmatpush1.msra.mxu0 %v76
    %2469 = vmatprep.subr.mxu0 0.0
    %2470 = vmatpush1.msra.mxu0 %v77
    %2471 = vmatprep.subr.mxu0 0.0
    %2472 = vmatpush1.msra.mxu0 %v78
    %2473 = vmatprep.subr.mxu0 0.0
    %2474 = vmatpush1.msra.mxu0 %v79
    %2475 = vmatprep.subr.mxu0 0.0
    %2476 = vmatpush1.msra.mxu0 %v80
    %2477 = vmatprep.subr.mxu0 0.0
    %2478 = vmatpush1.msra.mxu0 %v81
    %2479 = vmatprep.subr.mxu0 0.0
    %2480 = vmatpush1.msra.mxu0 %v82
    %2481 = vmatprep.subr.mxu0 0.0
    %2482 = vmatpush1.msra.mxu0 %v83
    %2483 = vmatprep.subr.mxu0 0.0
    %2484 = vmatpush1.msra.mxu0 %v84
    %2485 = vmatprep.subr.mxu0 0.0
    %2486 = vmatpush1.msra.mxu0 0.0
    %2487 = vmatprep.subr.mxu0 0.0
    %2488 = vmatpush1.msra.mxu0 0.0
    %2489 = vmatprep.subr.mxu0 0.0
    %2490 = vmatpush1.msra.mxu0 0.0
    %2491 = vmatprep.subr.mxu0 0.0
    %2492 = vmatpush1.msra.mxu0 0.0
    %2493 = vmatprep.subr.mxu0 0.0
    %2494 = vmatpush1.msra.mxu0 0.0
    %2495 = vmatprep.subr.mxu0 0.0
    %2496 = vmatpush1.msra.mxu0 0.0
    %2497 = vmatprep.subr.mxu0 0.0
    %2498 = vmatpush1.msra.mxu0 0.0
    %2499 = vmatprep.subr.mxu0 0.0
    %2500 = vmatpush1.msra.mxu0 0.0
    %2501 = vmatprep.subr.mxu0 0.0
    %2502 = vmatpush1.msra.mxu0 0.0
    %2503 = vmatprep.subr.mxu0 0.0
    %2504 = vmatpush1.msra.mxu0 0.0
    %2505 = vmatprep.subr.mxu0 0.0
    %2506 = vmatpush1.msra.mxu0 0.0
    %2507 = vmatprep.subr.mxu0 0.0
    %2508 = vmatpush1.msra.mxu0 0.0
    %2509 = vmatprep.subr.mxu0 0.0
    %2510 = vmatpush1.msra.mxu0 0.0
    %2511 = vmatprep.subr.mxu0 0.0
    %2512 = vmatpush1.msra.mxu0 0.0
    %2513 = vmatprep.subr.mxu0 0.0
    %2514 = vmatpush1.msra.mxu0 0.0
    %2515 = vmatprep.subr.mxu0 0.0
    %2516 = vmatpush1.msra.mxu0 0.0
    %2517 = vmatprep.mubr.f32.mxu0 0.0
    %2518 = vmatmul.mubr.f32.gmra.mrb[0].mxu0 %v2450
    %v2519 = vpop.f32.mrb[0].mxu0
    %v2520 = vadd.f32 %v1246, %v2519
    %v2521 = vpop.f32.mrb[0].mxu0
    %2522 = vdwg.mxu0
    %v2523 = vlaneseq
    %v2524 = vshrl.u32 %v2523, 7
    %v2525 = vsub.s32 0, %v2524
    %v2526 = vrot.slane %v2063, %v2525
    %v2527 = vadd.f32 %v2520, %v2526
    %v2529 = vrot.slane %v2527, 5
    %v2531 = vsel %vm917, %v1322, %v2529
    %v2532 = vld [vmem:[%s9] sm:$0xff]
    %v2533 = vld [vmem:[%s9 + $0x8] sm:$0xff]
    %v2534 = vld [vmem:[%s9 + $0x10] sm:$0xff]
    %v2535 = vld [vmem:[%s9 + $0x18] sm:$0xff]
    %v2536 = vld [vmem:[%s9 + $0x20] sm:$0xff]
    %v2537 = vld [vmem:[%s9 + $0x28] sm:$0xff]
    %v2538 = vld [vmem:[%s9 + $0x30] sm:$0xff]
    %v2539 = vld [vmem:[%s9 + $0x38] sm:$0xff]
    %v2540 = vld [vmem:[%s9 + $0x40] sm:$0xff]
    %v2541 = vld [vmem:[%s9 + $0x48] sm:$0xff]
    %v2542 = vld [vmem:[%s9 + $0x50] sm:$0xff]
    %v2543 = vld [vmem:[%s9 + $0x58] sm:$0xff]
    %v2544 = vld [vmem:[%s9 + $0x60] sm:$0xff]
    %v2545 = vld [vmem:[%s9 + $0x68] sm:$0xff]
    %v2546 = vld [vmem:[%s9 + $0x70] sm:$0xff]
    %v2547 = vld [vmem:[%s9 + $0x78] sm:$0xff]
    %v2548 = vld [vmem:[%s10] sm:$0x1]
    %v2550 = vlaneseq
    %v2551 = vshrl.u32 %v2550, 7
    %v2552 = vsub.s32 0, %v2551
    %v2553 = vrot.slane %v2548, %v2552
    %2555 = vmatprep.subr.mxu0 0.0
    %2556 = vmatpush1.msra.mxu0 %v2532
    %2557 = vmatprep.subr.mxu0 0.0
    %2558 = vmatpush1.msra.mxu0 %v2533
    %2559 = vmatprep.subr.mxu0 0.0
    %2560 = vmatpush1.msra.mxu0 %v2534
    %2561 = vmatprep.subr.mxu0 0.0
    %2562 = vmatpush1.msra.mxu0 %v2535
    %2563 = vmatprep.subr.mxu0 0.0
    %2564 = vmatpush1.msra.mxu0 %v2536
    %2565 = vmatprep.subr.mxu0 0.0
    %2566 = vmatpush1.msra.mxu0 %v2537
    %2567 = vmatprep.subr.mxu0 0.0
    %2568 = vmatpush1.msra.mxu0 %v2538
    %2569 = vmatprep.subr.mxu0 0.0
    %2570 = vmatpush1.msra.mxu0 %v2539
    %2571 = vmatprep.subr.mxu0 0.0
    %2572 = vmatpush1.msra.mxu0 %v2540
    %2573 = vmatprep.subr.mxu0 0.0
    %2574 = vmatpush1.msra.mxu0 %v2541
    %2575 = vmatprep.subr.mxu0 0.0
    %2576 = vmatpush1.msra.mxu0 %v2542
    %2577 = vmatprep.subr.mxu0 0.0
    %2578 = vmatpush1.msra.mxu0 %v2543
    %2579 = vmatprep.subr.mxu0 0.0
    %2580 = vmatpush1.msra.mxu0 %v2544
    %2581 = vmatprep.subr.mxu0 0.0
    %2582 = vmatpush1.msra.mxu0 %v2545
    %2583 = vmatprep.subr.mxu0 0.0
    %2584 = vmatpush1.msra.mxu0 %v2546
    %2585 = vmatprep.subr.mxu0 0.0
    %2586 = vmatpush1.msra.mxu0 %v2547
    %2587 = vmatprep.subr.mxu0 0.0
    %2588 = vmatpush1.msra.mxu0 0.0
    %2589 = vmatprep.subr.mxu0 0.0
    %2590 = vmatpush1.msra.mxu0 0.0
    %2591 = vmatprep.subr.mxu0 0.0
    %2592 = vmatpush1.msra.mxu0 0.0
    %2593 = vmatprep.subr.mxu0 0.0
    %2594 = vmatpush1.msra.mxu0 0.0
    %2595 = vmatprep.subr.mxu0 0.0
    %2596 = vmatpush1.msra.mxu0 0.0
    %2597 = vmatprep.subr.mxu0 0.0
    %2598 = vmatpush1.msra.mxu0 0.0
    %2599 = vmatprep.subr.mxu0 0.0
    %2600 = vmatpush1.msra.mxu0 0.0
    %2601 = vmatprep.subr.mxu0 0.0
    %2602 = vmatpush1.msra.mxu0 0.0
    %2603 = vmatprep.subr.mxu0 0.0
    %2604 = vmatpush1.msra.mxu0 0.0
    %2605 = vmatprep.subr.mxu0 0.0
    %2606 = vmatpush1.msra.mxu0 0.0
    %2607 = vmatprep.subr.mxu0 0.0
    %2608 = vmatpush1.msra.mxu0 0.0
    %2609 = vmatprep.subr.mxu0 0.0
    %2610 = vmatpush1.msra.mxu0 0.0
    %2611 = vmatprep.subr.mxu0 0.0
    %2612 = vmatpush1.msra.mxu0 0.0
    %2613 = vmatprep.subr.mxu0 0.0
    %2614 = vmatpush1.msra.mxu0 0.0
    %2615 = vmatprep.subr.mxu0 0.0
    %2616 = vmatpush1.msra.mxu0 0.0
    %2617 = vmatprep.subr.mxu0 0.0
    %2618 = vmatpush1.msra.mxu0 0.0
    %2619 = vmatprep.mubr.f32.mxu0 0.0
    %2620 = vmatmul.mubr.f32.gmra.mrb[0].mxu0 %v2531
    %v2621 = vpop.f32.mrb[0].mxu0
    %v2622 = vadd.f32 %v2553, %v2621
    %v2623 = vpop.f32.mrb[0].mxu0
    %2624 = vdwg.mxu0
    %v2625 = vsub.f32 0.0, %v2622
    %v2626 = vmul.f32 %v2625, 1.442695
    %v2627 = vpow.pop %v2626
    %v2628 = vadd.f32 %v2627, 1.0
    %v2629 = vrcp.pop %v2628
    %v2630 = vmul.f32 18.75, %v2629
    %v2631 = vld [vmem:[%s13] sm:$0xff]
    %v2632 = vld [vmem:[%s13 + $0x8] sm:$0xff]
    %v2633 = vld [vmem:[%s13 + $0x10] sm:$0xff]
    %v2634 = vld [vmem:[%s13 + $0x18] sm:$0xff]
    %v2635 = vld [vmem:[%s13 + $0x20] sm:$0xff]
    %v2636 = vld [vmem:[%s13 + $0x28] sm:$0xff]
    %v2637 = vld [vmem:[%s13 + $0x30] sm:$0xff]
    %v2638 = vld [vmem:[%s13 + $0x38] sm:$0xff]
    %v2639 = vld [vmem:[%s13 + $0x40] sm:$0xff]
    %v2640 = vld [vmem:[%s13 + $0x48] sm:$0xff]
    %v2641 = vld [vmem:[%s13 + $0x50] sm:$0xff]
    %v2642 = vld [vmem:[%s13 + $0x58] sm:$0xff]
    %v2643 = vld [vmem:[%s13 + $0x60] sm:$0xff]
    %v2644 = vld [vmem:[%s13 + $0x68] sm:$0xff]
    %v2645 = vld [vmem:[%s13 + $0x70] sm:$0xff]
    %v2646 = vld [vmem:[%s13 + $0x78] sm:$0xff]
    %v2647 = vld [vmem:[%s11] sm:$0x1]
    %v2648 = vld [vmem:[%s12] sm:$0xff]
    %v2649 = vld [vmem:[%s12 + $0x8] sm:$0xff]
    %v2650 = vld [vmem:[%s12 + $0x10] sm:$0xff]
    %v2651 = vld [vmem:[%s12 + $0x18] sm:$0xff]
    %v2652 = vld [vmem:[%s12 + $0x20] sm:$0xff]
    %v2653 = vld [vmem:[%s12 + $0x28] sm:$0xff]
    %v2654 = vld [vmem:[%s12 + $0x30] sm:$0xff]
    %v2655 = vld [vmem:[%s12 + $0x38] sm:$0xff]
    %vm2656 = vcmask 523264
    %v2658 = vsel %vm2656, %v2622, 0
    %2660 = vmatprep.subr.mxu0 0.0
    %2661 = vmatpush1.msra.mxu0 %v2648
    %2662 = vmatprep.subr.mxu0 0.0
    %2663 = vmatpush1.msra.mxu0 %v2649
    %2664 = vmatprep.subr.mxu0 0.0
    %2665 = vmatpush1.msra.mxu0 %v2650
    %2666 = vmatprep.subr.mxu0 0.0
    %2667 = vmatpush1.msra.mxu0 %v2651
    %2668 = vmatprep.subr.mxu0 0.0
    %2669 = vmatpush1.msra.mxu0 %v2652
    %2670 = vmatprep.subr.mxu0 0.0
    %2671 = vmatpush1.msra.mxu0 %v2653
    %2672 = vmatprep.subr.mxu0 0.0
    %2673 = vmatpush1.msra.mxu0 %v2654
    %2674 = vmatprep.subr.mxu0 0.0
    %2675 = vmatpush1.msra.mxu0 %v2655
    %2676 = vmatprep.subr.mxu0 0.0
    %2677 = vmatpush1.msra.mxu0 0.0
    %2678 = vmatprep.subr.mxu0 0.0
    %2679 = vmatpush1.msra.mxu0 0.0
    %2680 = vmatprep.subr.mxu0 0.0
    %2681 = vmatpush1.msra.mxu0 0.0
    %2682 = vmatprep.subr.mxu0 0.0
    %2683 = vmatpush1.msra.mxu0 0.0
    %2684 = vmatprep.subr.mxu0 0.0
    %2685 = vmatpush1.msra.mxu0 0.0
    %2686 = vmatprep.subr.mxu0 0.0
    %2687 = vmatpush1.msra.mxu0 0.0
    %2688 = vmatprep.subr.mxu0 0.0
    %2689 = vmatpush1.msra.mxu0 0.0
    %2690 = vmatprep.subr.mxu0 0.0
    %2691 = vmatpush1.msra.mxu0 0.0
    %2692 = vmatprep.subr.mxu0 0.0
    %2693 = vmatpush1.msra.mxu0 0.0
    %2694 = vmatprep.subr.mxu0 0.0
    %2695 = vmatpush1.msra.mxu0 0.0
    %2696 = vmatprep.subr.mxu0 0.0
    %2697 = vmatpush1.msra.mxu0 0.0
    %2698 = vmatprep.subr.mxu0 0.0
    %2699 = vmatpush1.msra.mxu0 0.0
    %2700 = vmatprep.subr.mxu0 0.0
    %2701 = vmatpush1.msra.mxu0 0.0
    %2702 = vmatprep.subr.mxu0 0.0
    %2703 = vmatpush1.msra.mxu0 0.0
    %2704 = vmatprep.subr.mxu0 0.0
    %2705 = vmatpush1.msra.mxu0 0.0
    %2706 = vmatprep.subr.mxu0 0.0
    %2707 = vmatpush1.msra.mxu0 0.0
    %2708 = vmatprep.subr.mxu0 0.0
    %2709 = vmatpush1.msra.mxu0 0.0
    %2710 = vmatprep.subr.mxu0 0.0
    %2711 = vmatpush1.msra.mxu0 0.0
    %2712 = vmatprep.subr.mxu0 0.0
    %2713 = vmatpush1.msra.mxu0 0.0
    %2714 = vmatprep.subr.mxu0 0.0
    %2715 = vmatpush1.msra.mxu0 0.0
    %2716 = vmatprep.subr.mxu0 0.0
    %2717 = vmatpush1.msra.mxu0 0.0
    %2718 = vmatprep.subr.mxu0 0.0
    %2719 = vmatpush1.msra.mxu0 0.0
    %2720 = vmatprep.subr.mxu0 0.0
    %2721 = vmatpush1.msra.mxu0 0.0
    %2722 = vmatprep.subr.mxu0 0.0
    %2723 = vmatpush1.msra.mxu0 0.0
    %2724 = vmatprep.mubr.f32.mxu0 0.0
    %2725 = vmatmul.mubr.f32.gmra.mrb[0].mxu0 %v2658
    %v2726 = vpop.f32.mrb[0].mxu0
    %v2727 = vadd.f32 0.0, %v2726
    %v2728 = vpop.f32.mrb[0].mxu0
    %2729 = vdwg.mxu0
    %v2730 = vlaneseq
    %v2731 = vshrl.u32 %v2730, 7
    %v2732 = vsub.s32 0, %v2731
    %v2733 = vrot.slane %v2647, %v2732
    %v2734 = vadd.f32 %v2733, %v2727
    %2735 = vmatprep.subr.mxu0 0.0
    %2736 = vmatpush1.msra.mxu0 %v2631
    %2737 = vmatprep.subr.mxu0 0.0
    %2738 = vmatpush1.msra.mxu0 %v2632
    %2739 = vmatprep.subr.mxu0 0.0
    %2740 = vmatpush1.msra.mxu0 %v2633
    %2741 = vmatprep.subr.mxu0 0.0
    %2742 = vmatpush1.msra.mxu0 %v2634
    %2743 = vmatprep.subr.mxu0 0.0
    %2744 = vmatpush1.msra.mxu0 %v2635
    %2745 = vmatprep.subr.mxu0 0.0
    %2746 = vmatpush1.msra.mxu0 %v2636
    %2747 = vmatprep.subr.mxu0 0.0
    %2748 = vmatpush1.msra.mxu0 %v2637
    %2749 = vmatprep.subr.mxu0 0.0
    %2750 = vmatpush1.msra.mxu0 %v2638
    %2751 = vmatprep.subr.mxu0 0.0
    %2752 = vmatpush1.msra.mxu0 %v2639
    %2753 = vmatprep.subr.mxu0 0.0
    %2754 = vmatpush1.msra.mxu0 %v2640
    %2755 = vmatprep.subr.mxu0 0.0
    %2756 = vmatpush1.msra.mxu0 %v2641
    %2757 = vmatprep.subr.mxu0 0.0
    %2758 = vmatpush1.msra.mxu0 %v2642
    %2759 = vmatprep.subr.mxu0 0.0
    %2760 = vmatpush1.msra.mxu0 %v2643
    %2761 = vmatprep.subr.mxu0 0.0
    %2762 = vmatpush1.msra.mxu0 %v2644
    %2763 = vmatprep.subr.mxu0 0.0
    %2764 = vmatpush1.msra.mxu0 %v2645
    %2765 = vmatprep.subr.mxu0 0.0
    %2766 = vmatpush1.msra.mxu0 %v2646
    %2767 = vmatprep.subr.mxu0 0.0
    %2768 = vmatpush1.msra.mxu0 0.0
    %2769 = vmatprep.subr.mxu0 0.0
    %2770 = vmatpush1.msra.mxu0 0.0
    %2771 = vmatprep.subr.mxu0 0.0
    %2772 = vmatpush1.msra.mxu0 0.0
    %2773 = vmatprep.subr.mxu0 0.0
    %2774 = vmatpush1.msra.mxu0 0.0
    %2775 = vmatprep.subr.mxu0 0.0
    %2776 = vmatpush1.msra.mxu0 0.0
    %2777 = vmatprep.subr.mxu0 0.0
    %2778 = vmatpush1.msra.mxu0 0.0
    %2779 = vmatprep.subr.mxu0 0.0
    %2780 = vmatpush1.msra.mxu0 0.0
    %2781 = vmatprep.subr.mxu0 0.0
    %2782 = vmatpush1.msra.mxu0 0.0
    %2783 = vmatprep.subr.mxu0 0.0
    %2784 = vmatpush1.msra.mxu0 0.0
    %2785 = vmatprep.subr.mxu0 0.0
    %2786 = vmatpush1.msra.mxu0 0.0
    %2787 = vmatprep.subr.mxu0 0.0
    %2788 = vmatpush1.msra.mxu0 0.0
    %2789 = vmatprep.subr.mxu0 0.0
    %2790 = vmatpush1.msra.mxu0 0.0
    %2791 = vmatprep.subr.mxu0 0.0
    %2792 = vmatpush1.msra.mxu0 0.0
    %2793 = vmatprep.subr.mxu0 0.0
    %2794 = vmatpush1.msra.mxu0 0.0
    %2795 = vmatprep.subr.mxu0 0.0
    %2796 = vmatpush1.msra.mxu0 0.0
    %2797 = vmatprep.subr.mxu0 0.0
    %2798 = vmatpush1.msra.mxu0 0.0
    %2799 = vmatprep.mubr.f32.mxu0 0.0
    %2800 = vmatmul.mubr.f32.gmra.mrb[0].mxu0 %v2734
    %v2801 = vpop.f32.mrb[0].mxu0
    %v2802 = vadd.f32 0.0, %v2801
    %v2803 = vpop.f32.mrb[0].mxu0
    %2804 = vdwg.mxu0
    %v2805 = vld [vmem:[%s11 + $0x1] sm:$0x1]
    %s2806 = scalar_lea.vmem %s12, 64
    %v2807 = vld [vmem:[%s2806] sm:$0xff]
    %v2808 = vld [vmem:[%s2806 + $0x8] sm:$0xff]
    %v2809 = vld [vmem:[%s2806 + $0x10] sm:$0xff]
    %v2810 = vld [vmem:[%s2806 + $0x18] sm:$0xff]
    %v2811 = vld [vmem:[%s2806 + $0x20] sm:$0xff]
    %v2812 = vld [vmem:[%s2806 + $0x28] sm:$0xff]
    %v2813 = vld [vmem:[%s2806 + $0x30] sm:$0xff]
    %v2814 = vld [vmem:[%s2806 + $0x38] sm:$0xff]
    %2815 = vmatprep.subr.mxu0 0.0
    %2816 = vmatpush1.msra.mxu0 %v2807
    %2817 = vmatprep.subr.mxu0 0.0
    %2818 = vmatpush1.msra.mxu0 %v2808
    %2819 = vmatprep.subr.mxu0 0.0
    %2820 = vmatpush1.msra.mxu0 %v2809
    %2821 = vmatprep.subr.mxu0 0.0
    %2822 = vmatpush1.msra.mxu0 %v2810
    %2823 = vmatprep.subr.mxu0 0.0
    %2824 = vmatpush1.msra.mxu0 %v2811
    %2825 = vmatprep.subr.mxu0 0.0
    %2826 = vmatpush1.msra.mxu0 %v2812
    %2827 = vmatprep.subr.mxu0 0.0
    %2828 = vmatpush1.msra.mxu0 %v2813
    %2829 = vmatprep.subr.mxu0 0.0
    %2830 = vmatpush1.msra.mxu0 %v2814
    %2831 = vmatprep.subr.mxu0 0.0
    %2832 = vmatpush1.msra.mxu0 0.0
    %2833 = vmatprep.subr.mxu0 0.0
    %2834 = vmatpush1.msra.mxu0 0.0
    %2835 = vmatprep.subr.mxu0 0.0
    %2836 = vmatpush1.msra.mxu0 0.0
    %2837 = vmatprep.subr.mxu0 0.0
    %2838 = vmatpush1.msra.mxu0 0.0
    %2839 = vmatprep.subr.mxu0 0.0
    %2840 = vmatpush1.msra.mxu0 0.0
    %2841 = vmatprep.subr.mxu0 0.0
    %2842 = vmatpush1.msra.mxu0 0.0
    %2843 = vmatprep.subr.mxu0 0.0
    %2844 = vmatpush1.msra.mxu0 0.0
    %2845 = vmatprep.subr.mxu0 0.0
    %2846 = vmatpush1.msra.mxu0 0.0
    %2847 = vmatprep.subr.mxu0 0.0
    %2848 = vmatpush1.msra.mxu0 0.0
    %2849 = vmatprep.subr.mxu0 0.0
    %2850 = vmatpush1.msra.mxu0 0.0
    %2851 = vmatprep.subr.mxu0 0.0
    %2852 = vmatpush1.msra.mxu0 0.0
    %2853 = vmatprep.subr.mxu0 0.0
    %2854 = vmatpush1.msra.mxu0 0.0
    %2855 = vmatprep.subr.mxu0 0.0
    %2856 = vmatpush1.msra.mxu0 0.0
    %2857 = vmatprep.subr.mxu0 0.0
    %2858 = vmatpush1.msra.mxu0 0.0
    %2859 = vmatprep.subr.mxu0 0.0
    %2860 = vmatpush1.msra.mxu0 0.0
    %2861 = vmatprep.subr.mxu0 0.0
    %2862 = vmatpush1.msra.mxu0 0.0
    %2863 = vmatprep.subr.mxu0 0.0
    %2864 = vmatpush1.msra.mxu0 0.0
    %2865 = vmatprep.subr.mxu0 0.0
    %2866 = vmatpush1.msra.mxu0 0.0
    %2867 = vmatprep.subr.mxu0 0.0
    %2868 = vmatpush1.msra.mxu0 0.0
    %2869 = vmatprep.subr.mxu0 0.0
    %2870 = vmatpush1.msra.mxu0 0.0
    %2871 = vmatprep.subr.mxu0 0.0
    %2872 = vmatpush1.msra.mxu0 0.0
    %2873 = vmatprep.subr.mxu0 0.0
    %2874 = vmatpush1.msra.mxu0 0.0
    %2875 = vmatprep.subr.mxu0 0.0
    %2876 = vmatpush1.msra.mxu0 0.0
    %2877 = vmatprep.subr.mxu0 0.0
    %2878 = vmatpush1.msra.mxu0 0.0
    %2879 = vmatprep.mubr.f32.mxu0 0.0
    %2880 = vmatmul.mubr.f32.gmra.mrb[0].mxu0 %v2658
    %v2881 = vpop.f32.mrb[0].mxu0
    %v2882 = vadd.f32 0.0, %v2881
    %v2883 = vpop.f32.mrb[0].mxu0
    %2884 = vdwg.mxu0
    %v2885 = vlaneseq
    %v2886 = vshrl.u32 %v2885, 7
    %v2887 = vsub.s32 0, %v2886
    %v2888 = vrot.slane %v2805, %v2887
    %v2889 = vadd.f32 %v2888, %v2882
    %2890 = vmatprep.subr.mxu0 0.0
    %2891 = vmatpush1.msra.mxu0 %v2631
    %2892 = vmatprep.subr.mxu0 0.0
    %2893 = vmatpush1.msra.mxu0 %v2632
    %2894 = vmatprep.subr.mxu0 0.0
    %2895 = vmatpush1.msra.mxu0 %v2633
    %2896 = vmatprep.subr.mxu0 0.0
    %2897 = vmatpush1.msra.mxu0 %v2634
    %2898 = vmatprep.subr.mxu0 0.0
    %2899 = vmatpush1.msra.mxu0 %v2635
    %2900 = vmatprep.subr.mxu0 0.0
    %2901 = vmatpush1.msra.mxu0 %v2636
    %2902 = vmatprep.subr.mxu0 0.0
    %2903 = vmatpush1.msra.mxu0 %v2637
    %2904 = vmatprep.subr.mxu0 0.0
    %2905 = vmatpush1.msra.mxu0 %v2638
    %2906 = vmatprep.subr.mxu0 0.0
    %2907 = vmatpush1.msra.mxu0 %v2639
    %2908 = vmatprep.subr.mxu0 0.0
    %2909 = vmatpush1.msra.mxu0 %v2640
    %2910 = vmatprep.subr.mxu0 0.0
    %2911 = vmatpush1.msra.mxu0 %v2641
    %2912 = vmatprep.subr.mxu0 0.0
    %2913 = vmatpush1.msra.mxu0 %v2642
    %2914 = vmatprep.subr.mxu0 0.0
    %2915 = vmatpush1.msra.mxu0 %v2643
    %2916 = vmatprep.subr.mxu0 0.0
    %2917 = vmatpush1.msra.mxu0 %v2644
    %2918 = vmatprep.subr.mxu0 0.0
    %2919 = vmatpush1.msra.mxu0 %v2645
    %2920 = vmatprep.subr.mxu0 0.0
    %2921 = vmatpush1.msra.mxu0 %v2646
    %2922 = vmatprep.subr.mxu0 0.0
    %2923 = vmatpush1.msra.mxu0 0.0
    %2924 = vmatprep.subr.mxu0 0.0
    %2925 = vmatpush1.msra.mxu0 0.0
    %2926 = vmatprep.subr.mxu0 0.0
    %2927 = vmatpush1.msra.mxu0 0.0
    %2928 = vmatprep.subr.mxu0 0.0
    %2929 = vmatpush1.msra.mxu0 0.0
    %2930 = vmatprep.subr.mxu0 0.0
    %2931 = vmatpush1.msra.mxu0 0.0
    %2932 = vmatprep.subr.mxu0 0.0
    %2933 = vmatpush1.msra.mxu0 0.0
    %2934 = vmatprep.subr.mxu0 0.0
    %2935 = vmatpush1.msra.mxu0 0.0
    %2936 = vmatprep.subr.mxu0 0.0
    %2937 = vmatpush1.msra.mxu0 0.0
    %2938 = vmatprep.subr.mxu0 0.0
    %2939 = vmatpush1.msra.mxu0 0.0
    %2940 = vmatprep.subr.mxu0 0.0
    %2941 = vmatpush1.msra.mxu0 0.0
    %2942 = vmatprep.subr.mxu0 0.0
    %2943 = vmatpush1.msra.mxu0 0.0
    %2944 = vmatprep.subr.mxu0 0.0
    %2945 = vmatpush1.msra.mxu0 0.0
    %2946 = vmatprep.subr.mxu0 0.0
    %2947 = vmatpush1.msra.mxu0 0.0
    %2948 = vmatprep.subr.mxu0 0.0
    %2949 = vmatpush1.msra.mxu0 0.0
    %2950 = vmatprep.subr.mxu0 0.0
    %2951 = vmatpush1.msra.mxu0 0.0
    %2952 = vmatprep.subr.mxu0 0.0
    %2953 = vmatpush1.msra.mxu0 0.0
    %2954 = vmatprep.mubr.f32.mxu0 0.0
    %2955 = vmatmul.mubr.f32.gmra.mrb[0].mxu0 %v2889
    %v2956 = vpop.f32.mrb[0].mxu0
    %v2957 = vadd.f32 0.0, %v2956
    %v2958 = vpop.f32.mrb[0].mxu0
    %2959 = vdwg.mxu0
    %v2960 = vld [vmem:[%s11 + $0x2] sm:$0x1]
    %s2961 = scalar_lea.vmem %s12, 128
    %v2962 = vld [vmem:[%s2961] sm:$0xff]
    %v2963 = vld [vmem:[%s2961 + $0x8] sm:$0xff]
    %v2964 = vld [vmem:[%s2961 + $0x10] sm:$0xff]
    %v2965 = vld [vmem:[%s2961 + $0x18] sm:$0xff]
    %v2966 = vld [vmem:[%s2961 + $0x20] sm:$0xff]
    %v2967 = vld [vmem:[%s2961 + $0x28] sm:$0xff]
    %v2968 = vld [vmem:[%s2961 + $0x30] sm:$0xff]
    %v2969 = vld [vmem:[%s2961 + $0x38] sm:$0xff]
    %2970 = vmatprep.subr.mxu0 0.0
    %2971 = vmatpush1.msra.mxu0 %v2962
    %2972 = vmatprep.subr.mxu0 0.0
    %2973 = vmatpush1.msra.mxu0 %v2963
    %2974 = vmatprep.subr.mxu0 0.0
    %2975 = vmatpush1.msra.mxu0 %v2964
    %2976 = vmatprep.subr.mxu0 0.0
    %2977 = vmatpush1.msra.mxu0 %v2965
    %2978 = vmatprep.subr.mxu0 0.0
    %2979 = vmatpush1.msra.mxu0 %v2966
    %2980 = vmatprep.subr.mxu0 0.0
    %2981 = vmatpush1.msra.mxu0 %v2967
    %2982 = vmatprep.subr.mxu0 0.0
    %2983 = vmatpush1.msra.mxu0 %v2968
    %2984 = vmatprep.subr.mxu0 0.0
    %2985 = vmatpush1.msra.mxu0 %v2969
    %2986 = vmatprep.subr.mxu0 0.0
    %2987 = vmatpush1.msra.mxu0 0.0
    %2988 = vmatprep.subr.mxu0 0.0
    %2989 = vmatpush1.msra.mxu0 0.0
    %2990 = vmatprep.subr.mxu0 0.0
    %2991 = vmatpush1.msra.mxu0 0.0
    %2992 = vmatprep.subr.mxu0 0.0
    %2993 = vmatpush1.msra.mxu0 0.0
    %2994 = vmatprep.subr.mxu0 0.0
    %2995 = vmatpush1.msra.mxu0 0.0
    %2996 = vmatprep.subr.mxu0 0.0
    %2997 = vmatpush1.msra.mxu0 0.0
    %2998 = vmatprep.subr.mxu0 0.0
    %2999 = vmatpush1.msra.mxu0 0.0
    %3000 = vmatprep.subr.mxu0 0.0
    %3001 = vmatpush1.msra.mxu0 0.0
    %3002 = vmatprep.subr.mxu0 0.0
    %3003 = vmatpush1.msra.mxu0 0.0
    %3004 = vmatprep.subr.mxu0 0.0
    %3005 = vmatpush1.msra.mxu0 0.0
    %3006 = vmatprep.subr.mxu0 0.0
    %3007 = vmatpush1.msra.mxu0 0.0
    %3008 = vmatprep.subr.mxu0 0.0
    %3009 = vmatpush1.msra.mxu0 0.0
    %3010 = vmatprep.subr.mxu0 0.0
    %3011 = vmatpush1.msra.mxu0 0.0
    %3012 = vmatprep.subr.mxu0 0.0
    %3013 = vmatpush1.msra.mxu0 0.0
    %3014 = vmatprep.subr.mxu0 0.0
    %3015 = vmatpush1.msra.mxu0 0.0
    %3016 = vmatprep.subr.mxu0 0.0
    %3017 = vmatpush1.msra.mxu0 0.0
    %3018 = vmatprep.subr.mxu0 0.0
    %3019 = vmatpush1.msra.mxu0 0.0
    %3020 = vmatprep.subr.mxu0 0.0
    %3021 = vmatpush1.msra.mxu0 0.0
    %3022 = vmatprep.subr.mxu0 0.0
    %3023 = vmatpush1.msra.mxu0 0.0
    %3024 = vmatprep.subr.mxu0 0.0
    %3025 = vmatpush1.msra.mxu0 0.0
    %3026 = vmatprep.subr.mxu0 0.0
    %3027 = vmatpush1.msra.mxu0 0.0
    %3028 = vmatprep.subr.mxu0 0.0
    %3029 = vmatpush1.msra.mxu0 0.0
    %3030 = vmatprep.subr.mxu0 0.0
    %3031 = vmatpush1.msra.mxu0 0.0
    %3032 = vmatprep.subr.mxu0 0.0
    %3033 = vmatpush1.msra.mxu0 0.0
    %3034 = vmatprep.mubr.f32.mxu0 0.0
    %3035 = vmatmul.mubr.f32.gmra.mrb[0].mxu0 %v2658
    %v3036 = vpop.f32.mrb[0].mxu0
    %v3037 = vadd.f32 0.0, %v3036
    %v3038 = vpop.f32.mrb[0].mxu0
    %3039 = vdwg.mxu0
    %v3040 = vlaneseq
    %v3041 = vshrl.u32 %v3040, 7
    %v3042 = vsub.s32 0, %v3041
    %v3043 = vrot.slane %v2960, %v3042
    %v3044 = vadd.f32 %v3043, %v3037
    %3045 = vmatprep.subr.mxu0 0.0
    %3046 = vmatpush1.msra.mxu0 %v2631
    %3047 = vmatprep.subr.mxu0 0.0
    %3048 = vmatpush1.msra.mxu0 %v2632
    %3049 = vmatprep.subr.mxu0 0.0
    %3050 = vmatpush1.msra.mxu0 %v2633
    %3051 = vmatprep.subr.mxu0 0.0
    %3052 = vmatpush1.msra.mxu0 %v2634
    %3053 = vmatprep.subr.mxu0 0.0
    %3054 = vmatpush1.msra.mxu0 %v2635
    %3055 = vmatprep.subr.mxu0 0.0
    %3056 = vmatpush1.msra.mxu0 %v2636
    %3057 = vmatprep.subr.mxu0 0.0
    %3058 = vmatpush1.msra.mxu0 %v2637
    %3059 = vmatprep.subr.mxu0 0.0
    %3060 = vmatpush1.msra.mxu0 %v2638
    %3061 = vmatprep.subr.mxu0 0.0
    %3062 = vmatpush1.msra.mxu0 %v2639
    %3063 = vmatprep.subr.mxu0 0.0
    %3064 = vmatpush1.msra.mxu0 %v2640
    %3065 = vmatprep.subr.mxu0 0.0
    %3066 = vmatpush1.msra.mxu0 %v2641
    %3067 = vmatprep.subr.mxu0 0.0
    %3068 = vmatpush1.msra.mxu0 %v2642
    %3069 = vmatprep.subr.mxu0 0.0
    %3070 = vmatpush1.msra.mxu0 %v2643
    %3071 = vmatprep.subr.mxu0 0.0
    %3072 = vmatpush1.msra.mxu0 %v2644
    %3073 = vmatprep.subr.mxu0 0.0
    %3074 = vmatpush1.msra.mxu0 %v2645
    %3075 = vmatprep.subr.mxu0 0.0
    %3076 = vmatpush1.msra.mxu0 %v2646
    %3077 = vmatprep.subr.mxu0 0.0
    %3078 = vmatpush1.msra.mxu0 0.0
    %3079 = vmatprep.subr.mxu0 0.0
    %3080 = vmatpush1.msra.mxu0 0.0
    %3081 = vmatprep.subr.mxu0 0.0
    %3082 = vmatpush1.msra.mxu0 0.0
    %3083 = vmatprep.subr.mxu0 0.0
    %3084 = vmatpush1.msra.mxu0 0.0
    %3085 = vmatprep.subr.mxu0 0.0
    %3086 = vmatpush1.msra.mxu0 0.0
    %3087 = vmatprep.subr.mxu0 0.0
    %3088 = vmatpush1.msra.mxu0 0.0
    %3089 = vmatprep.subr.mxu0 0.0
    %3090 = vmatpush1.msra.mxu0 0.0
    %3091 = vmatprep.subr.mxu0 0.0
    %3092 = vmatpush1.msra.mxu0 0.0
    %3093 = vmatprep.subr.mxu0 0.0
    %3094 = vmatpush1.msra.mxu0 0.0
    %3095 = vmatprep.subr.mxu0 0.0
    %3096 = vmatpush1.msra.mxu0 0.0
    %3097 = vmatprep.subr.mxu0 0.0
    %3098 = vmatpush1.msra.mxu0 0.0
    %3099 = vmatprep.subr.mxu0 0.0
    %3100 = vmatpush1.msra.mxu0 0.0
    %3101 = vmatprep.subr.mxu0 0.0
    %3102 = vmatpush1.msra.mxu0 0.0
    %3103 = vmatprep.subr.mxu0 0.0
    %3104 = vmatpush1.msra.mxu0 0.0
    %3105 = vmatprep.subr.mxu0 0.0
    %3106 = vmatpush1.msra.mxu0 0.0
    %3107 = vmatprep.subr.mxu0 0.0
    %3108 = vmatpush1.msra.mxu0 0.0
    %3109 = vmatprep.mubr.f32.mxu0 0.0
    %3110 = vmatmul.mubr.f32.gmra.mrb[0].mxu0 %v3044
    %v3111 = vpop.f32.mrb[0].mxu0
    %v3112 = vadd.f32 0.0, %v3111
    %v3113 = vpop.f32.mrb[0].mxu0
    %3114 = vdwg.mxu0
    %3116 = vset.pattern.permute.xlu0 60
    %3117 = vperm.xlu0 %3116, %v2630
    %v3118 = vpop.permute.xlu0 %3117
    %v3120 = vadd.f32 %v3112, %v3118
    %v3121 = vadd.f32 %v3120, 0.0001
    %v3122 = vrcp.pop %v3121
    %v3123 = vmul.f32 1.0, %v3122
    %3124 = vset.pattern.permute.xlu0 58
    %3125 = vperm.xlu0 %3124, %v2622
    %v3126 = vpop.permute.xlu0 %3125
    %v3128 = vadd.f32 %v2802, %v3126
    %v3129 = vmul.f32 %v3128, %v3123
    %v3130 = vmul.f32 %v3129, 1000.0
    %v3131 = vadd.f32 %v3130, 8.0
    %3132 = vset.pattern.permute.xlu0 59
    %3133 = vperm.xlu0 %3132, %v2622
    %v3134 = vpop.permute.xlu0 %3133
    %v3136 = vadd.f32 %v2957, %v3134
    %v3137 = vmul.f32 %v3136, %v3123
    %v3138 = vmul.f32 %v3137, 1000.0
    %v3139 = vadd.f32 %v3138, 8.0
    %3141 = vset.pattern.permute.xlu0 0
    %3142 = vperm.xlu0 %3141, %v2802
    %v3143 = vpop.permute.xlu0 %3142
    %v3145 = vsub.f32 %v2802, %v3143
    %3147 = vset.pattern.permute.xlu0 0
    %3148 = vperm.xlu0 %3147, %v2957
    %v3149 = vpop.permute.xlu0 %3148
    %v3151 = vsub.f32 %v2957, %v3149
    %3153 = vset.pattern.permute.xlu0 0
    %3154 = vperm.xlu0 %3153, %v3112
    %v3155 = vpop.permute.xlu0 %3154
    %v3157 = vsub.f32 %v3112, %v3155
    %v3158 = vadd.f32 %v2734, %v3126
    %v3159 = vadd.f32 %v2889, %v3134
    %v3160 = vadd.f32 %v3044, %v3118
    %v3162 = vrot.slane %v3159, 5
    %v3165 = vrot.slane %v3160, 2
    %v3168 = vrot.slane %v3145, 7
    %v3171 = vrot.slane %v3151, 4
    %v3174 = vrot.slane %v3157, 1
    %v3177 = vrot.slane %v3131, 6
    %v3180 = vrot.slane %v3139, 3
    %v3182 = vsel %vm917, %v3158, %v3162
    %vm3183 = vcmask 1045504
    %v3184 = vsel %vm3183, %v3182, %v3165
    %vm3185 = vcmask 1040384
    %v3186 = vsel %vm3185, %v3165, %v3168
    %vm3187 = vcmask 1043456
    %v3188 = vsel %vm3187, %v3186, %v3171
    %vm3189 = vcmask 1046528
    %v3190 = vsel %vm3189, %v3188, %v3174
    %vm3191 = vcmask 1041408
    %v3192 = vsel %vm3191, %v3174, %v3177
    %vm3193 = vcmask 1044480
    %v3194 = vsel %vm3193, %v3192, %v3180
    %3195 = vst [vmem:[#allocation2] sm:$0xff] %v3184
    %3196 = vst [vmem:[#allocation2 + $0x8] sm:$0xff] %v3190
    %3197 = vst [vmem:[#allocation2 + $0x10] sm:$0xff] %v3194
    %v3199 = vrot.slane %v3158, 3
    %v3201 = vrot.slane %v3160, 5
    %v3203 = vrot.slane %v3145, 2
    %v3205 = vrot.slane %v3151, 7
    %v3207 = vrot.slane %v3157, 4
    %v3209 = vrot.slane %v3131, 1
    %v3211 = vrot.slane %v3139, 6
    %v3213 = vsel %vm917, %v3199, %v3159
    %v3214 = vsel %vm3183, %v3213, %v3201
    %v3215 = vsel %vm3185, %v3201, %v3203
    %v3216 = vsel %vm3187, %v3215, %v3205
    %v3217 = vsel %vm3189, %v3216, %v3207
    %v3218 = vsel %vm3191, %v3207, %v3209
    %v3219 = vsel %vm3193, %v3218, %v3211
    %s3220 = scalar_lea.vmem [#allocation2], 24
    %3221 = vst [vmem:[%s3220] sm:$0xff] %v3214
    %3222 = vst [vmem:[%s3220 + $0x8] sm:$0xff] %v3217
    %3223 = vst [vmem:[%s3220 + $0x10] sm:$0xff] %v3219
    // Predicated region
    $region58: #{tpu_custom_call.1} parent=1 // pred_check
      _
    $region59: #{tpu_custom_call.1} parent=1 // pred_check_branch
      %3225 = sbr.rel (0) target = $region61
    $region60: #{tpu_custom_call.1} parent=1 // pred_region
      %s3227 = ssub.s32 768, 768
      %3228 = vsyncadd [#allocation3], %s3227
      %s3229 = sshll.u32 [#allocation2], 4
      %s3230 = int_to_ptr.vmem [resolvable:$true] %s3229
      %3235 = dma.vmem_to_hbm [thread:$0]  %s3230, 768, %s14, [#allocation3], 128, 128, 8
    $region61: #{tpu_custom_call.1} parent=1 // pred_fallthru
      _
    // Predicated region
    $region62: #{tpu_custom_call.1} parent=1 // pred_check
      _
    $region63: #{tpu_custom_call.1} parent=1 // pred_check_branch
      %3237 = sbr.rel (0) target = $region65
    $region64: #{tpu_custom_call.1} parent=1 // pred_region
      %3238 = dma.done [#allocation3], 768
    $region65: #{tpu_custom_call.1} parent=1 // pred_fallthru
      _
    %3239 = vsyncpa [#allocation3], 1

</llo_original>
